<compile_context>
chip_gen: v5e
topology: v5e:2x2
jax: 0.10.0
libtpu: 0.0.40
codegen_flags: <defaults>
</compile_context>

<pallas_src>
import functools

import jax
import jax.numpy as jnp
from jax.experimental import pallas as pl
from jax.experimental.pallas import tpu as pltpu

EPS = 1e-5
LANE = 128


def _vmem_limit_bytes():
    """Raise the 32 MiB scoped-VMEM default toward physical VMEM (128 MiB on
    v5e/v6e, 64 MiB per TensorCore on v7x), keeping ~25% headroom."""
    try:
        phys = pltpu.get_tpu_info().vmem_capacity_bytes
        return int(max(32 * 1024 * 1024,
                       min(96 * 1024 * 1024, (phys * 3) // 4)))
    except Exception:
        return 32 * 1024 * 1024


# ----------------------------------------------------------------------------
# Stem kernel: conv3x3(same) -> BN2d (training stats) -> ReLU -> global avg
# pool.   grid = (n_views, 3 passes, H // tile_h)
#   pass 0: conv tile (single K=9C matmul), write VMEM cache, accumulate sum
#   pass 1: centered sum-of-squares from the cache (uses pass-0 mean)
#   pass 2: normalize (hoisted scale/shift) + ReLU + GAP accumulate
# ----------------------------------------------------------------------------
def _make_stem_kernel(B, H, W, C, F, TH):
    HW = H * W
    KTAP = 9 * C
    inv_rows = 1.0 / float(B * HW)

    def kernel(x_ref, w_ref, g_ref, bt_ref, out_ref,
               pad_ref, ycache_ref, sum_ref, sumsq_ref,
               scale_ref, shift_ref, pool_ref):
        pas = pl.program_id(1)
        t = pl.program_id(2)
        last_t = pl.num_programs(2) - 1
        h0 = pl.multiple_of(t * TH, TH)

        # ---------------- per-view setup / per-pass init --------------------
        @pl.when(jnp.logical_and(pas == 0, t == 0))
        def _():
            # Build the zero-padded input once per view.  The HBM input is
            # lane-packed (B, H, W*C); peel one W-column at a time into a
            # W-major (B, Wp, Hp, C) scratch so every store is a plain
            # (B, H, C) block store (no packed-dtype odd-offset stores).
            pad_ref[...] = jnp.zeros_like(pad_ref)
            xin = x_ref[...].astype(jnp.float32)               # (B, H, W*C)
            for jj in range(W):                                 # once per view
                pad_ref[:, 1 + jj, 1:H + 1, :] = xin[:, :, jj * C:(jj + 1) * C]
            sum_ref[...] = jnp.zeros_like(sum_ref)

        @pl.when(jnp.logical_and(pas == 1, t == 0))
        def _():
            sum_ref[...] = sum_ref[...] * inv_rows              # now the mean
            sumsq_ref[...] = jnp.zeros_like(sumsq_ref)

        @pl.when(jnp.logical_and(pas == 2, t == 0))
        def _():
            var = sumsq_ref[...] * inv_rows                     # biased var
            scale_ref[...] = g_ref[...] * jax.lax.rsqrt(var + EPS)
            shift_ref[...] = bt_ref[...] - sum_ref[...] * scale_ref[...]
            pool_ref[...] = jnp.zeros_like(pool_ref)

        # -------- pass 0: conv tile as ONE K=9C matmul, cache + sum ---------
        @pl.when(pas == 0)
        def _():
            # 9 shifted taps from the padded scratch; concat along the minor
            # dim builds the (M, 9C) im2col operand -> single MXU matmul.
            taps = [pad_ref[:, pl.ds(dj, W), pl.ds(h0 + di, TH), :]
                    for di in range(3) for dj in range(3)]      # 9x (B,W,TH,C)
            xs = jnp.concatenate(taps, axis=-1)                 # (B,W,TH,9C)
            xs = xs.reshape(B * W * TH, KTAP).astype(jnp.bfloat16)
            y = jnp.dot(xs, w_ref[...],
                        preferred_element_type=jnp.float32)     # (M, F) f32
            ycache_ref[:, :, pl.ds(h0, TH), :] = y.reshape(B, W, TH, F)
            sum_ref[...] += jnp.sum(y, axis=0, keepdims=True)

        # -------- pass 1: centered variance from the cached conv output -----
        @pl.when(pas == 1)
        def _():
            yc = ycache_ref[:, :, pl.ds(h0, TH), :].reshape(B * W * TH, F)
            d = yc - sum_ref[...]
            sumsq_ref[...] += jnp.sum(d * d, axis=0, keepdims=True)

        # -------- pass 2: normalize + ReLU + global-average-pool ------------
        @pl.when(pas == 2)
        def _():
            yc = ycache_ref[:, :, pl.ds(h0, TH), :]             # (B,W,TH,F)
            yn = jnp.maximum(yc * scale_ref[...] + shift_ref[...], 0.0)
            pool_ref[...] += jnp.sum(yn.reshape(B, W * TH, F), axis=1)

        @pl.when(jnp.logical_and(pas == 2, t == last_t))
        def _():
            out_ref[...] = pool_ref[...] * (1.0 / HW)

    return kernel


def backbone_stem(x_views_nchw, stem_params, *, tile_h=None):
    """conv3x3(same)->BN2d->ReLU->GAP for both views.  Returns [V, B, F] f32."""
    V, B, C, H, W = x_views_nchw.shape
    w, gamma, beta = stem_params["w"], stem_params["gamma"], stem_params["beta"]
    F = w.shape[1]
    assert w.shape[0] == 9 * C
    assert F % LANE == 0, "stem feature dim must be lane-dense (multiple of 128)"

    if tile_h is None:                        # biggest tile that stays sane
        tile_h = H
        while tile_h > 64 and tile_h % 2 == 0:
            tile_h //= 2
    assert H % tile_h == 0
    n_tiles = H // tile_h

    vmem_limit = _vmem_limit_bytes()
    cache_bytes = B * H * W * F * 4
    assert 2 * cache_bytes < vmem_limit, (
        "per-view conv-output cache does not fit the VMEM budget")
    # TODO(synk): when the cache does not fit (large images / batch), fall back
    # to recomputing the conv in the normalize pass instead of caching it.

    # Fold channels into the lane dim -> contiguous HBM->VMEM DMA; bf16 halves
    # the operand bytes.  No wrapper-side padding copy.
    xp = jnp.transpose(x_views_nchw, (0, 1, 3, 4, 2))            # (V,B,H,W,C)
    xp = xp.reshape(V, B, H, W * C).astype(jnp.bfloat16)

    kernel = _make_stem_kernel(B, H, W, C, F, tile_h)
    flops = 2 * V * B * H * W * (9 * C) * F                      # conv once
    bytes_acc = (xp.size * 2 + w.size * 2
                 + (gamma.size + beta.size) * 4 + V * B * F * 4)

    return pl.pallas_call(
        kernel,
        out_shape=jax.ShapeDtypeStruct((V, B, F), jnp.float32),
        grid=(V, 3, n_tiles),
        in_specs=[
            pl.BlockSpec((None, B, H, W * C), lambda v, p, t: (v, 0, 0, 0)),
            pl.BlockSpec((9 * C, F), lambda v, p, t: (0, 0)),
            pl.BlockSpec((1, F), lambda v, p, t: (0, 0)),
            pl.BlockSpec((1, F), lambda v, p, t: (0, 0)),
        ],
        out_specs=pl.BlockSpec((None, B, F), lambda v, p, t: (v, 0, 0)),
        scratch_shapes=[
            pltpu.VMEM((B, W + 2, H + 2, C), jnp.float32),   # padded input
            pltpu.VMEM((B, W, H, F), jnp.float32),           # conv-output cache
            pltpu.VMEM((1, F), jnp.float32),                 # sum -> mean
            pltpu.VMEM((1, F), jnp.float32),                 # centered sumsq
            pltpu.VMEM((1, F), jnp.float32),                 # BN scale
            pltpu.VMEM((1, F), jnp.float32),                 # BN shift
            pltpu.VMEM((B, F), jnp.float32),                 # GAP accumulator
        ],
        compiler_params=pltpu.CompilerParams(
            dimension_semantics=("parallel", "arbitrary", "arbitrary"),
            vmem_limit_bytes=vmem_limit),
        cost_estimate=pl.CostEstimate(
            flops=int(flops),
            transcendentals=int(V * F),
            bytes_accessed=int(bytes_acc)),
    )(xp, w, gamma, beta)


# ----------------------------------------------------------------------------
# Fused projector + predictor MLP chain, both views stacked into one M = V*B
# matmul chain (weights DMA'd exactly once); per-view BatchNorm1d statistics.
# Layers: proj0 (Lin+BN+ReLU), proj1 (Lin+BN+ReLU), proj2 (Lin+BN),
#         pred0 (Lin+BN+ReLU), pred1 (Lin+bias).   Outputs: z (after proj2), p.
# ----------------------------------------------------------------------------
_MLP_CFG = (
    (True, True),    # proj0
    (True, True),    # proj1
    (True, False),   # proj2  (z tap)
    (True, True),    # pred0
    (False, False),  # pred1  (bias, no BN)
)


def _make_mlp_kernel(n_views, batch):
    V, B = n_views, batch

    def kernel(x_ref, *refs):
        z_ref, p_ref = refs[-2], refs[-1]
        prm = refs[:-2]

        def batch_norm_per_view(y, g_ref, bt_ref):
            # Training-mode BatchNorm1d (biased variance), computed per view so
            # the fused M=V*B matmul matches per-view encoder/predictor calls.
            parts = []
            for v in range(V):
                yv = y[v * B:(v + 1) * B]
                mean = jnp.mean(yv, axis=0, keepdims=True)
                var = jnp.mean(jnp.square(yv - mean), axis=0, keepdims=True)
                parts.append((yv - mean) * jax.lax.rsqrt(var + EPS)
                             * g_ref[...] + bt_ref[...])
            return jnp.concatenate(parts, axis=0)

        h = x_ref[...]
        z = None
        idx = 0
        for li, (use_bn, use_relu) in enumerate(_MLP_CFG):
            w_ref = prm[idx]
            idx += 1
            y = jnp.dot(h.astype(jnp.bfloat16), w_ref[...],
                        preferred_element_type=jnp.float32)
            if use_bn:                 # bias omitted: cancels inside BN
                y = batch_norm_per_view(y, prm[idx], prm[idx + 1])
                idx += 2
            else:
                y = y + prm[idx][...]
                idx += 1
            if use_relu:
                y = jnp.maximum(y, 0.0)
            h = y
            if li == 2:
                z = h
        z_ref[...] = z
        p_ref[...] = h

    return kernel


def mlp_chain(feat2d, layer_params, *, n_views):
    """feat2d: (V*B, FEAT) f32 -> (z (V*B, proj_out), p (V*B, pred_out))."""
    M, _ = feat2d.shape
    assert M % n_views == 0
    batch = M // n_views
    proj_out = layer_params[2][0].shape[1]
    pred_out = layer_params[4][0].shape[1]

    inputs = [feat2d]
    for prm in layer_params:
        inputs.extend(prm)

    flops = sum(2 * M * p[0].shape[0] * p[0].shape[1] for p in layer_params)
    trans = n_views * sum(p[0].shape[1]
                          for p, (bn, _) in zip(layer_params, _MLP_CFG) if bn)
    bytes_acc = feat2d.size * 4 + M * (proj_out + pred_out) * 4
    for prm in layer_params:
        bytes_acc += prm[0].size * 2 + sum(a.size * 4 for a in prm[1:])

    # Single program: all operands whole-array resident in VMEM, each weight
    # DMA'd exactly once (no per-view double buffering of ~29 MB of weights at
    # real SimSiam dims).
    return pl.pallas_call(
        _make_mlp_kernel(n_views, batch),
        out_shape=(jax.ShapeDtypeStruct((M, proj_out), jnp.float32),
                   jax.ShapeDtypeStruct((M, pred_out), jnp.float32)),
        compiler_params=pltpu.CompilerParams(
            vmem_limit_bytes=_vmem_limit_bytes()),
        cost_estimate=pl.CostEstimate(
            flops=int(flops),
            transcendentals=int(trans),
            bytes_accessed=int(bytes_acc)),
    )(*inputs)


# ----------------------------------------------------------------------------
# Parameter construction (deterministic, synthetic).  Weights bf16 (MXU
# operands); BN affine params / final bias f32.  Biases that feed straight
# into a BatchNorm are not materialized (they cancel exactly).
# ----------------------------------------------------------------------------
def _linear_w(key, d_in, d_out, scale=0.05):
    return (scale * jax.random.normal(key, (d_in, d_out),
                                      jnp.float32)).astype(jnp.bfloat16)


def init_simsiam_params(key, *, c_in, feat_dim, proj_hsz, proj_out,
                        pred_hsz, pred_out):
    for d in (feat_dim, proj_hsz, proj_out, pred_hsz, pred_out):
        assert d % LANE == 0, "feature dims must be lane-dense (multiples of 128)"
    ks = jax.random.split(key, 7)

    def bn_layer(k, d_in, d_out):
        return (_linear_w(k, d_in, d_out),
                jnp.ones((1, d_out), jnp.float32),     # gamma (PyTorch default)
                jnp.zeros((1, d_out), jnp.float32))    # beta

    params = {
        # backbone stem conv3x3 in im2col layout [(di,dj,c) -> 9*c_in, feat]
        "stem": {"w": _linear_w(ks[0], 9 * c_in, feat_dim),
                 "gamma": jnp.ones((1, feat_dim), jnp.float32),
                 "beta": jnp.zeros((1, feat_dim), jnp.float32)},
        # Projection: Lin->BN->ReLU, Lin->BN->ReLU, Lin->BN
        # Prediction: Lin->BN->ReLU, Lin(+bias)
        "mlp": [
            bn_layer(ks[1], feat_dim, proj_hsz),
            bn_layer(ks[2], proj_hsz, proj_hsz),
            bn_layer(ks[3], proj_hsz, proj_out),
            bn_layer(ks[4], proj_out, pred_hsz),
            (_linear_w(ks[5], pred_hsz, pred_out),
             0.05 * jax.random.normal(ks[6], (1, pred_out), jnp.float32)),
        ],
    }
    return params


# ----------------------------------------------------------------------------
# SimSiam forward: one stem pallas_call (per-view BN2d stats via the view grid
# axis) + one fused MLP pallas_call (views stacked, per-view BN1d stats).
# ----------------------------------------------------------------------------
def simsiam_forward(params, x_1, x_2,
                    use_outputs=("z_i", "z_j", "p_i", "p_j")):
    x = jnp.stack([x_1, x_2], axis=0)                    # [2, B, C, H, W]
    feat = backbone_stem(x, params["stem"])              # [2, B, FEAT]
    V, B, FEAT = feat.shape
    z2, p2 = mlp_chain(feat.reshape(V * B, FEAT), params["mlp"], n_views=V)
    z = z2.reshape(V, B, -1)
    p = p2.reshape(V, B, -1)
    outs = {"z_i": z[0], "z_j": z[1], "p_i": p[0], "p_j": p[1]}
    return {k: outs[k] for k in use_outputs}


# ----------------------------------------------------------------------------
if __name__ == "__main__":
    key = jax.random.PRNGKey(0)
    k_x1, k_x2, k_params = jax.random.split(key, 3)

    # small shapes consistent with the module; feature dims lane-dense (x128)
    B, C, H, W = 2, 4, 16, 16
    FEAT = 128          # stand-in for resnet50.output_dim (=2048)
    PROJ_HSZ, PROJ_OUT = 128, 128   # stand-in for Projection hsz/out (=2048)
    PRED_HSZ, PRED_OUT = 128, 128   # stand-in for Prediction hsz (=512) / out

    x_1 = jax.random.normal(k_x1, (B, C, H, W), jnp.float32)
    x_2 = jax.random.normal(k_x2, (B, C, H, W), jnp.float32)

    params = init_simsiam_params(
        k_params, c_in=C, feat_dim=FEAT, proj_hsz=PROJ_HSZ,
        proj_out=PROJ_OUT, pred_hsz=PRED_HSZ, pred_out=PRED_OUT)

    fwd = jax.jit(functools.partial(simsiam_forward, params))
    out = fwd(x_1, x_2)
    jax.block_until_ready(out)

    assert out["z_i"].shape == (B, PROJ_OUT)
    assert out["z_j"].shape == (B, PROJ_OUT)
    assert out["p_i"].shape == (B, PRED_OUT)
    assert out["p_j"].shape == (B, PRED_OUT)
    assert all(bool(jnp.all(jnp.isfinite(v))) for v in out.values())
    print("KERNEL_OK")
</pallas_src>

<mosaic_0001>
module attributes {stable_mosaic.version = 11 : i64} {
  func.func @kernel(%arg0: memref<4x128xf32, #tpu.memory_space<vmem>>, %arg1: memref<128x128xbf16, #tpu.memory_space<vmem>>, %arg2: memref<1x128xf32, #tpu.memory_space<vmem>>, %arg3: memref<1x128xf32, #tpu.memory_space<vmem>>, %arg4: memref<128x128xbf16, #tpu.memory_space<vmem>>, %arg5: memref<1x128xf32, #tpu.memory_space<vmem>>, %arg6: memref<1x128xf32, #tpu.memory_space<vmem>>, %arg7: memref<128x128xbf16, #tpu.memory_space<vmem>>, %arg8: memref<1x128xf32, #tpu.memory_space<vmem>>, %arg9: memref<1x128xf32, #tpu.memory_space<vmem>>, %arg10: memref<128x128xbf16, #tpu.memory_space<vmem>>, %arg11: memref<1x128xf32, #tpu.memory_space<vmem>>, %arg12: memref<1x128xf32, #tpu.memory_space<vmem>>, %arg13: memref<128x128xbf16, #tpu.memory_space<vmem>>, %arg14: memref<1x128xf32, #tpu.memory_space<vmem>>, %arg15: memref<4x128xf32, #tpu.memory_space<vmem>>, %arg16: memref<4x128xf32, #tpu.memory_space<vmem>>) attributes {dimension_semantics = [], scalar_prefetch = 0 : i64, scratch_operands = 0 : i64, tpu.core_type = #tpu.core_type<tc>} {
    %c0 = arith.constant 0 : index
    %c0_0 = arith.constant 0 : index
    %0 = vector.load %arg0[%c0, %c0_0] : memref<4x128xf32, #tpu.memory_space<vmem>>, vector<4x128xf32>
    %1 = arith.truncf %0 : vector<4x128xf32> to vector<4x128xbf16>
    %c0_1 = arith.constant 0 : index
    %c0_2 = arith.constant 0 : index
    %2 = vector.load %arg1[%c0_1, %c0_2] : memref<128x128xbf16, #tpu.memory_space<vmem>>, vector<128x128xbf16>
    %cst = arith.constant dense<0.000000e+00> : vector<4x128xf32>
    %3 = tpu.matmul %1, %2, %cst {dimension_numbers = #tpu.dot_dimension_numbers<[1], [0], [0], [1], [0, 0, 1, 1], [], []>} : vector<4x128xbf16>, vector<128x128xbf16>, vector<4x128xf32> -> vector<4x128xf32>
    %4 = vector.extract_strided_slice %3 {offsets = [0, 0], sizes = [2, 128], strides = [1, 1]} : vector<4x128xf32> to vector<2x128xf32>
    %cst_3 = arith.constant dense<0.000000e+00> : vector<128xf32>
    %5 = vector.multi_reduction <add>, %4, %cst_3 [0] : vector<2x128xf32> to vector<128xf32>
    %6 = vector.shape_cast %5 : vector<128xf32> to vector<1x128xf32>
    %cst_4 = arith.constant 2.000000e+00 : f32
    %7 = vector.broadcast %cst_4 : f32 to vector<1x128xf32>
    %8 = arith.divf %6, %7 : vector<1x128xf32>
    %9 = vector.broadcast %8 : vector<1x128xf32> to vector<2x128xf32>
    %10 = arith.subf %4, %9 : vector<2x128xf32>
    %11 = arith.mulf %10, %10 : vector<2x128xf32>
    %cst_5 = arith.constant dense<0.000000e+00> : vector<128xf32>
    %12 = vector.multi_reduction <add>, %11, %cst_5 [0] : vector<2x128xf32> to vector<128xf32>
    %13 = vector.shape_cast %12 : vector<128xf32> to vector<1x128xf32>
    %cst_6 = arith.constant 2.000000e+00 : f32
    %14 = vector.broadcast %cst_6 : f32 to vector<1x128xf32>
    %15 = arith.divf %13, %14 : vector<1x128xf32>
    %16 = vector.broadcast %8 : vector<1x128xf32> to vector<2x128xf32>
    %17 = arith.subf %4, %16 : vector<2x128xf32>
    %cst_7 = arith.constant 9.99999974E-6 : f32
    %18 = vector.broadcast %cst_7 : f32 to vector<1x128xf32>
    %19 = arith.addf %15, %18 : vector<1x128xf32>
    %20 = math.rsqrt %19 : vector<1x128xf32>
    %21 = vector.broadcast %20 : vector<1x128xf32> to vector<2x128xf32>
    %22 = arith.mulf %17, %21 : vector<2x128xf32>
    %c0_8 = arith.constant 0 : index
    %c0_9 = arith.constant 0 : index
    %23 = vector.load %arg2[%c0_8, %c0_9] : memref<1x128xf32, #tpu.memory_space<vmem>>, vector<1x128xf32>
    %24 = vector.broadcast %23 : vector<1x128xf32> to vector<2x128xf32>
    %25 = arith.mulf %22, %24 : vector<2x128xf32>
    %c0_10 = arith.constant 0 : index
    %c0_11 = arith.constant 0 : index
    %26 = vector.load %arg3[%c0_10, %c0_11] : memref<1x128xf32, #tpu.memory_space<vmem>>, vector<1x128xf32>
    %27 = vector.broadcast %26 : vector<1x128xf32> to vector<2x128xf32>
    %28 = arith.addf %25, %27 : vector<2x128xf32>
    %29 = vector.extract_strided_slice %3 {offsets = [2, 0], sizes = [2, 128], strides = [1, 1]} : vector<4x128xf32> to vector<2x128xf32>
    %cst_12 = arith.constant dense<0.000000e+00> : vector<128xf32>
    %30 = vector.multi_reduction <add>, %29, %cst_12 [0] : vector<2x128xf32> to vector<128xf32>
    %31 = vector.shape_cast %30 : vector<128xf32> to vector<1x128xf32>
    %cst_13 = arith.constant 2.000000e+00 : f32
    %32 = vector.broadcast %cst_13 : f32 to vector<1x128xf32>
    %33 = arith.divf %31, %32 : vector<1x128xf32>
    %34 = vector.broadcast %33 : vector<1x128xf32> to vector<2x128xf32>
    %35 = arith.subf %29, %34 : vector<2x128xf32>
    %36 = arith.mulf %35, %35 : vector<2x128xf32>
    %cst_14 = arith.constant dense<0.000000e+00> : vector<128xf32>
    %37 = vector.multi_reduction <add>, %36, %cst_14 [0] : vector<2x128xf32> to vector<128xf32>
    %38 = vector.shape_cast %37 : vector<128xf32> to vector<1x128xf32>
    %cst_15 = arith.constant 2.000000e+00 : f32
    %39 = vector.broadcast %cst_15 : f32 to vector<1x128xf32>
    %40 = arith.divf %38, %39 : vector<1x128xf32>
    %41 = vector.broadcast %33 : vector<1x128xf32> to vector<2x128xf32>
    %42 = arith.subf %29, %41 : vector<2x128xf32>
    %cst_16 = arith.constant 9.99999974E-6 : f32
    %43 = vector.broadcast %cst_16 : f32 to vector<1x128xf32>
    %44 = arith.addf %40, %43 : vector<1x128xf32>
    %45 = math.rsqrt %44 : vector<1x128xf32>
    %46 = vector.broadcast %45 : vector<1x128xf32> to vector<2x128xf32>
    %47 = arith.mulf %42, %46 : vector<2x128xf32>
    %c0_17 = arith.constant 0 : index
    %c0_18 = arith.constant 0 : index
    %48 = vector.load %arg2[%c0_17, %c0_18] : memref<1x128xf32, #tpu.memory_space<vmem>>, vector<1x128xf32>
    %49 = vector.broadcast %48 : vector<1x128xf32> to vector<2x128xf32>
    %50 = arith.mulf %47, %49 : vector<2x128xf32>
    %c0_19 = arith.constant 0 : index
    %c0_20 = arith.constant 0 : index
    %51 = vector.load %arg3[%c0_19, %c0_20] : memref<1x128xf32, #tpu.memory_space<vmem>>, vector<1x128xf32>
    %52 = vector.broadcast %51 : vector<1x128xf32> to vector<2x128xf32>
    %53 = arith.addf %50, %52 : vector<2x128xf32>
    %54 = tpu.concatenate %28, %53 in 0 : vector<2x128xf32>, vector<2x128xf32> -> vector<4x128xf32>
    %cst_21 = arith.constant 0.000000e+00 : f32
    %55 = vector.broadcast %cst_21 : f32 to vector<4x128xf32>
    %56 = arith.maximumf %54, %55 : vector<4x128xf32>
    %57 = arith.truncf %56 : vector<4x128xf32> to vector<4x128xbf16>
    %c0_22 = arith.constant 0 : index
    %c0_23 = arith.constant 0 : index
    %58 = vector.load %arg4[%c0_22, %c0_23] : memref<128x128xbf16, #tpu.memory_space<vmem>>, vector<128x128xbf16>
    %cst_24 = arith.constant dense<0.000000e+00> : vector<4x128xf32>
    %59 = tpu.matmul %57, %58, %cst_24 {dimension_numbers = #tpu.dot_dimension_numbers<[1], [0], [0], [1], [0, 0, 1, 1], [], []>} : vector<4x128xbf16>, vector<128x128xbf16>, vector<4x128xf32> -> vector<4x128xf32>
    %60 = vector.extract_strided_slice %59 {offsets = [0, 0], sizes = [2, 128], strides = [1, 1]} : vector<4x128xf32> to vector<2x128xf32>
    %cst_25 = arith.constant dense<0.000000e+00> : vector<128xf32>
    %61 = vector.multi_reduction <add>, %60, %cst_25 [0] : vector<2x128xf32> to vector<128xf32>
    %62 = vector.shape_cast %61 : vector<128xf32> to vector<1x128xf32>
    %cst_26 = arith.constant 2.000000e+00 : f32
    %63 = vector.broadcast %cst_26 : f32 to vector<1x128xf32>
    %64 = arith.divf %62, %63 : vector<1x128xf32>
    %65 = vector.broadcast %64 : vector<1x128xf32> to vector<2x128xf32>
    %66 = arith.subf %60, %65 : vector<2x128xf32>
    %67 = arith.mulf %66, %66 : vector<2x128xf32>
    %cst_27 = arith.constant dense<0.000000e+00> : vector<128xf32>
    %68 = vector.multi_reduction <add>, %67, %cst_27 [0] : vector<2x128xf32> to vector<128xf32>
    %69 = vector.shape_cast %68 : vector<128xf32> to vector<1x128xf32>
    %cst_28 = arith.constant 2.000000e+00 : f32
    %70 = vector.broadcast %cst_28 : f32 to vector<1x128xf32>
    %71 = arith.divf %69, %70 : vector<1x128xf32>
    %72 = vector.broadcast %64 : vector<1x128xf32> to vector<2x128xf32>
    %73 = arith.subf %60, %72 : vector<2x128xf32>
    %cst_29 = arith.constant 9.99999974E-6 : f32
    %74 = vector.broadcast %cst_29 : f32 to vector<1x128xf32>
    %75 = arith.addf %71, %74 : vector<1x128xf32>
    %76 = math.rsqrt %75 : vector<1x128xf32>
    %77 = vector.broadcast %76 : vector<1x128xf32> to vector<2x128xf32>
    %78 = arith.mulf %73, %77 : vector<2x128xf32>
    %c0_30 = arith.constant 0 : index
    %c0_31 = arith.constant 0 : index
    %79 = vector.load %arg5[%c0_30, %c0_31] : memref<1x128xf32, #tpu.memory_space<vmem>>, vector<1x128xf32>
    %80 = vector.broadcast %79 : vector<1x128xf32> to vector<2x128xf32>
    %81 = arith.mulf %78, %80 : vector<2x128xf32>
    %c0_32 = arith.constant 0 : index
    %c0_33 = arith.constant 0 : index
    %82 = vector.load %arg6[%c0_32, %c0_33] : memref<1x128xf32, #tpu.memory_space<vmem>>, vector<1x128xf32>
    %83 = vector.broadcast %82 : vector<1x128xf32> to vector<2x128xf32>
    %84 = arith.addf %81, %83 : vector<2x128xf32>
    %85 = vector.extract_strided_slice %59 {offsets = [2, 0], sizes = [2, 128], strides = [1, 1]} : vector<4x128xf32> to vector<2x128xf32>
    %cst_34 = arith.constant dense<0.000000e+00> : vector<128xf32>
    %86 = vector.multi_reduction <add>, %85, %cst_34 [0] : vector<2x128xf32> to vector<128xf32>
    %87 = vector.shape_cast %86 : vector<128xf32> to vector<1x128xf32>
    %cst_35 = arith.constant 2.000000e+00 : f32
    %88 = vector.broadcast %cst_35 : f32 to vector<1x128xf32>
    %89 = arith.divf %87, %88 : vector<1x128xf32>
    %90 = vector.broadcast %89 : vector<1x128xf32> to vector<2x128xf32>
    %91 = arith.subf %85, %90 : vector<2x128xf32>
    %92 = arith.mulf %91, %91 : vector<2x128xf32>
    %cst_36 = arith.constant dense<0.000000e+00> : vector<128xf32>
    %93 = vector.multi_reduction <add>, %92, %cst_36 [0] : vector<2x128xf32> to vector<128xf32>
    %94 = vector.shape_cast %93 : vector<128xf32> to vector<1x128xf32>
    %cst_37 = arith.constant 2.000000e+00 : f32
    %95 = vector.broadcast %cst_37 : f32 to vector<1x128xf32>
    %96 = arith.divf %94, %95 : vector<1x128xf32>
    %97 = vector.broadcast %89 : vector<1x128xf32> to vector<2x128xf32>
    %98 = arith.subf %85, %97 : vector<2x128xf32>
    %cst_38 = arith.constant 9.99999974E-6 : f32
    %99 = vector.broadcast %cst_38 : f32 to vector<1x128xf32>
    %100 = arith.addf %96, %99 : vector<1x128xf32>
    %101 = math.rsqrt %100 : vector<1x128xf32>
    %102 = vector.broadcast %101 : vector<1x128xf32> to vector<2x128xf32>
    %103 = arith.mulf %98, %102 : vector<2x128xf32>
    %c0_39 = arith.constant 0 : index
    %c0_40 = arith.constant 0 : index
    %104 = vector.load %arg5[%c0_39, %c0_40] : memref<1x128xf32, #tpu.memory_space<vmem>>, vector<1x128xf32>
    %105 = vector.broadcast %104 : vector<1x128xf32> to vector<2x128xf32>
    %106 = arith.mulf %103, %105 : vector<2x128xf32>
    %c0_41 = arith.constant 0 : index
    %c0_42 = arith.constant 0 : index
    %107 = vector.load %arg6[%c0_41, %c0_42] : memref<1x128xf32, #tpu.memory_space<vmem>>, vector<1x128xf32>
    %108 = vector.broadcast %107 : vector<1x128xf32> to vector<2x128xf32>
    %109 = arith.addf %106, %108 : vector<2x128xf32>
    %110 = tpu.concatenate %84, %109 in 0 : vector<2x128xf32>, vector<2x128xf32> -> vector<4x128xf32>
    %cst_43 = arith.constant 0.000000e+00 : f32
    %111 = vector.broadcast %cst_43 : f32 to vector<4x128xf32>
    %112 = arith.maximumf %110, %111 : vector<4x128xf32>
    %113 = arith.truncf %112 : vector<4x128xf32> to vector<4x128xbf16>
    %c0_44 = arith.constant 0 : index
    %c0_45 = arith.constant 0 : index
    %114 = vector.load %arg7[%c0_44, %c0_45] : memref<128x128xbf16, #tpu.memory_space<vmem>>, vector<128x128xbf16>
    %cst_46 = arith.constant dense<0.000000e+00> : vector<4x128xf32>
    %115 = tpu.matmul %113, %114, %cst_46 {dimension_numbers = #tpu.dot_dimension_numbers<[1], [0], [0], [1], [0, 0, 1, 1], [], []>} : vector<4x128xbf16>, vector<128x128xbf16>, vector<4x128xf32> -> vector<4x128xf32>
    %116 = vector.extract_strided_slice %115 {offsets = [0, 0], sizes = [2, 128], strides = [1, 1]} : vector<4x128xf32> to vector<2x128xf32>
    %cst_47 = arith.constant dense<0.000000e+00> : vector<128xf32>
    %117 = vector.multi_reduction <add>, %116, %cst_47 [0] : vector<2x128xf32> to vector<128xf32>
    %118 = vector.shape_cast %117 : vector<128xf32> to vector<1x128xf32>
    %cst_48 = arith.constant 2.000000e+00 : f32
    %119 = vector.broadcast %cst_48 : f32 to vector<1x128xf32>
    %120 = arith.divf %118, %119 : vector<1x128xf32>
    %121 = vector.broadcast %120 : vector<1x128xf32> to vector<2x128xf32>
    %122 = arith.subf %116, %121 : vector<2x128xf32>
    %123 = arith.mulf %122, %122 : vector<2x128xf32>
    %cst_49 = arith.constant dense<0.000000e+00> : vector<128xf32>
    %124 = vector.multi_reduction <add>, %123, %cst_49 [0] : vector<2x128xf32> to vector<128xf32>
    %125 = vector.shape_cast %124 : vector<128xf32> to vector<1x128xf32>
    %cst_50 = arith.constant 2.000000e+00 : f32
    %126 = vector.broadcast %cst_50 : f32 to vector<1x128xf32>
    %127 = arith.divf %125, %126 : vector<1x128xf32>
    %128 = vector.broadcast %120 : vector<1x128xf32> to vector<2x128xf32>
    %129 = arith.subf %116, %128 : vector<2x128xf32>
    %cst_51 = arith.constant 9.99999974E-6 : f32
    %130 = vector.broadcast %cst_51 : f32 to vector<1x128xf32>
    %131 = arith.addf %127, %130 : vector<1x128xf32>
    %132 = math.rsqrt %131 : vector<1x128xf32>
    %133 = vector.broadcast %132 : vector<1x128xf32> to vector<2x128xf32>
    %134 = arith.mulf %129, %133 : vector<2x128xf32>
    %c0_52 = arith.constant 0 : index
    %c0_53 = arith.constant 0 : index
    %135 = vector.load %arg8[%c0_52, %c0_53] : memref<1x128xf32, #tpu.memory_space<vmem>>, vector<1x128xf32>
    %136 = vector.broadcast %135 : vector<1x128xf32> to vector<2x128xf32>
    %137 = arith.mulf %134, %136 : vector<2x128xf32>
    %c0_54 = arith.constant 0 : index
    %c0_55 = arith.constant 0 : index
    %138 = vector.load %arg9[%c0_54, %c0_55] : memref<1x128xf32, #tpu.memory_space<vmem>>, vector<1x128xf32>
    %139 = vector.broadcast %138 : vector<1x128xf32> to vector<2x128xf32>
    %140 = arith.addf %137, %139 : vector<2x128xf32>
    %141 = vector.extract_strided_slice %115 {offsets = [2, 0], sizes = [2, 128], strides = [1, 1]} : vector<4x128xf32> to vector<2x128xf32>
    %cst_56 = arith.constant dense<0.000000e+00> : vector<128xf32>
    %142 = vector.multi_reduction <add>, %141, %cst_56 [0] : vector<2x128xf32> to vector<128xf32>
    %143 = vector.shape_cast %142 : vector<128xf32> to vector<1x128xf32>
    %cst_57 = arith.constant 2.000000e+00 : f32
    %144 = vector.broadcast %cst_57 : f32 to vector<1x128xf32>
    %145 = arith.divf %143, %144 : vector<1x128xf32>
    %146 = vector.broadcast %145 : vector<1x128xf32> to vector<2x128xf32>
    %147 = arith.subf %141, %146 : vector<2x128xf32>
    %148 = arith.mulf %147, %147 : vector<2x128xf32>
    %cst_58 = arith.constant dense<0.000000e+00> : vector<128xf32>
    %149 = vector.multi_reduction <add>, %148, %cst_58 [0] : vector<2x128xf32> to vector<128xf32>
    %150 = vector.shape_cast %149 : vector<128xf32> to vector<1x128xf32>
    %cst_59 = arith.constant 2.000000e+00 : f32
    %151 = vector.broadcast %cst_59 : f32 to vector<1x128xf32>
    %152 = arith.divf %150, %151 : vector<1x128xf32>
    %153 = vector.broadcast %145 : vector<1x128xf32> to vector<2x128xf32>
    %154 = arith.subf %141, %153 : vector<2x128xf32>
    %cst_60 = arith.constant 9.99999974E-6 : f32
    %155 = vector.broadcast %cst_60 : f32 to vector<1x128xf32>
    %156 = arith.addf %152, %155 : vector<1x128xf32>
    %157 = math.rsqrt %156 : vector<1x128xf32>
    %158 = vector.broadcast %157 : vector<1x128xf32> to vector<2x128xf32>
    %159 = arith.mulf %154, %158 : vector<2x128xf32>
    %c0_61 = arith.constant 0 : index
    %c0_62 = arith.constant 0 : index
    %160 = vector.load %arg8[%c0_61, %c0_62] : memref<1x128xf32, #tpu.memory_space<vmem>>, vector<1x128xf32>
    %161 = vector.broadcast %160 : vector<1x128xf32> to vector<2x128xf32>
    %162 = arith.mulf %159, %161 : vector<2x128xf32>
    %c0_63 = arith.constant 0 : index
    %c0_64 = arith.constant 0 : index
    %163 = vector.load %arg9[%c0_63, %c0_64] : memref<1x128xf32, #tpu.memory_space<vmem>>, vector<1x128xf32>
    %164 = vector.broadcast %163 : vector<1x128xf32> to vector<2x128xf32>
    %165 = arith.addf %162, %164 : vector<2x128xf32>
    %166 = tpu.concatenate %140, %165 in 0 : vector<2x128xf32>, vector<2x128xf32> -> vector<4x128xf32>
    %167 = arith.truncf %166 : vector<4x128xf32> to vector<4x128xbf16>
    %c0_65 = arith.constant 0 : index
    %c0_66 = arith.constant 0 : index
    %168 = vector.load %arg10[%c0_65, %c0_66] : memref<128x128xbf16, #tpu.memory_space<vmem>>, vector<128x128xbf16>
    %cst_67 = arith.constant dense<0.000000e+00> : vector<4x128xf32>
    %169 = tpu.matmul %167, %168, %cst_67 {dimension_numbers = #tpu.dot_dimension_numbers<[1], [0], [0], [1], [0, 0, 1, 1], [], []>} : vector<4x128xbf16>, vector<128x128xbf16>, vector<4x128xf32> -> vector<4x128xf32>
    %170 = vector.extract_strided_slice %169 {offsets = [0, 0], sizes = [2, 128], strides = [1, 1]} : vector<4x128xf32> to vector<2x128xf32>
    %cst_68 = arith.constant dense<0.000000e+00> : vector<128xf32>
    %171 = vector.multi_reduction <add>, %170, %cst_68 [0] : vector<2x128xf32> to vector<128xf32>
    %172 = vector.shape_cast %171 : vector<128xf32> to vector<1x128xf32>
    %cst_69 = arith.constant 2.000000e+00 : f32
    %173 = vector.broadcast %cst_69 : f32 to vector<1x128xf32>
    %174 = arith.divf %172, %173 : vector<1x128xf32>
    %175 = vector.broadcast %174 : vector<1x128xf32> to vector<2x128xf32>
    %176 = arith.subf %170, %175 : vector<2x128xf32>
    %177 = arith.mulf %176, %176 : vector<2x128xf32>
    %cst_70 = arith.constant dense<0.000000e+00> : vector<128xf32>
    %178 = vector.multi_reduction <add>, %177, %cst_70 [0] : vector<2x128xf32> to vector<128xf32>
    %179 = vector.shape_cast %178 : vector<128xf32> to vector<1x128xf32>
    %cst_71 = arith.constant 2.000000e+00 : f32
    %180 = vector.broadcast %cst_71 : f32 to vector<1x128xf32>
    %181 = arith.divf %179, %180 : vector<1x128xf32>
    %182 = vector.broadcast %174 : vector<1x128xf32> to vector<2x128xf32>
    %183 = arith.subf %170, %182 : vector<2x128xf32>
    %cst_72 = arith.constant 9.99999974E-6 : f32
    %184 = vector.broadcast %cst_72 : f32 to vector<1x128xf32>
    %185 = arith.addf %181, %184 : vector<1x128xf32>
    %186 = math.rsqrt %185 : vector<1x128xf32>
    %187 = vector.broadcast %186 : vector<1x128xf32> to vector<2x128xf32>
    %188 = arith.mulf %183, %187 : vector<2x128xf32>
    %c0_73 = arith.constant 0 : index
    %c0_74 = arith.constant 0 : index
    %189 = vector.load %arg11[%c0_73, %c0_74] : memref<1x128xf32, #tpu.memory_space<vmem>>, vector<1x128xf32>
    %190 = vector.broadcast %189 : vector<1x128xf32> to vector<2x128xf32>
    %191 = arith.mulf %188, %190 : vector<2x128xf32>
    %c0_75 = arith.constant 0 : index
    %c0_76 = arith.constant 0 : index
    %192 = vector.load %arg12[%c0_75, %c0_76] : memref<1x128xf32, #tpu.memory_space<vmem>>, vector<1x128xf32>
    %193 = vector.broadcast %192 : vector<1x128xf32> to vector<2x128xf32>
    %194 = arith.addf %191, %193 : vector<2x128xf32>
    %195 = vector.extract_strided_slice %169 {offsets = [2, 0], sizes = [2, 128], strides = [1, 1]} : vector<4x128xf32> to vector<2x128xf32>
    %cst_77 = arith.constant dense<0.000000e+00> : vector<128xf32>
    %196 = vector.multi_reduction <add>, %195, %cst_77 [0] : vector<2x128xf32> to vector<128xf32>
    %197 = vector.shape_cast %196 : vector<128xf32> to vector<1x128xf32>
    %cst_78 = arith.constant 2.000000e+00 : f32
    %198 = vector.broadcast %cst_78 : f32 to vector<1x128xf32>
    %199 = arith.divf %197, %198 : vector<1x128xf32>
    %200 = vector.broadcast %199 : vector<1x128xf32> to vector<2x128xf32>
    %201 = arith.subf %195, %200 : vector<2x128xf32>
    %202 = arith.mulf %201, %201 : vector<2x128xf32>
    %cst_79 = arith.constant dense<0.000000e+00> : vector<128xf32>
    %203 = vector.multi_reduction <add>, %202, %cst_79 [0] : vector<2x128xf32> to vector<128xf32>
    %204 = vector.shape_cast %203 : vector<128xf32> to vector<1x128xf32>
    %cst_80 = arith.constant 2.000000e+00 : f32
    %205 = vector.broadcast %cst_80 : f32 to vector<1x128xf32>
    %206 = arith.divf %204, %205 : vector<1x128xf32>
    %207 = vector.broadcast %199 : vector<1x128xf32> to vector<2x128xf32>
    %208 = arith.subf %195, %207 : vector<2x128xf32>
    %cst_81 = arith.constant 9.99999974E-6 : f32
    %209 = vector.broadcast %cst_81 : f32 to vector<1x128xf32>
    %210 = arith.addf %206, %209 : vector<1x128xf32>
    %211 = math.rsqrt %210 : vector<1x128xf32>
    %212 = vector.broadcast %211 : vector<1x128xf32> to vector<2x128xf32>
    %213 = arith.mulf %208, %212 : vector<2x128xf32>
    %c0_82 = arith.constant 0 : index
    %c0_83 = arith.constant 0 : index
    %214 = vector.load %arg11[%c0_82, %c0_83] : memref<1x128xf32, #tpu.memory_space<vmem>>, vector<1x128xf32>
    %215 = vector.broadcast %214 : vector<1x128xf32> to vector<2x128xf32>
    %216 = arith.mulf %213, %215 : vector<2x128xf32>
    %c0_84 = arith.constant 0 : index
    %c0_85 = arith.constant 0 : index
    %217 = vector.load %arg12[%c0_84, %c0_85] : memref<1x128xf32, #tpu.memory_space<vmem>>, vector<1x128xf32>
    %218 = vector.broadcast %217 : vector<1x128xf32> to vector<2x128xf32>
    %219 = arith.addf %216, %218 : vector<2x128xf32>
    %220 = tpu.concatenate %194, %219 in 0 : vector<2x128xf32>, vector<2x128xf32> -> vector<4x128xf32>
    %cst_86 = arith.constant 0.000000e+00 : f32
    %221 = vector.broadcast %cst_86 : f32 to vector<4x128xf32>
    %222 = arith.maximumf %220, %221 : vector<4x128xf32>
    %223 = arith.truncf %222 : vector<4x128xf32> to vector<4x128xbf16>
    %c0_87 = arith.constant 0 : index
    %c0_88 = arith.constant 0 : index
    %224 = vector.load %arg13[%c0_87, %c0_88] : memref<128x128xbf16, #tpu.memory_space<vmem>>, vector<128x128xbf16>
    %cst_89 = arith.constant dense<0.000000e+00> : vector<4x128xf32>
    %225 = tpu.matmul %223, %224, %cst_89 {dimension_numbers = #tpu.dot_dimension_numbers<[1], [0], [0], [1], [0, 0, 1, 1], [], []>} : vector<4x128xbf16>, vector<128x128xbf16>, vector<4x128xf32> -> vector<4x128xf32>
    %c0_90 = arith.constant 0 : index
    %c0_91 = arith.constant 0 : index
    %226 = vector.load %arg14[%c0_90, %c0_91] : memref<1x128xf32, #tpu.memory_space<vmem>>, vector<1x128xf32>
    %227 = vector.broadcast %226 : vector<1x128xf32> to vector<4x128xf32>
    %228 = arith.addf %225, %227 : vector<4x128xf32>
    %c0_92 = arith.constant 0 : index
    %c0_93 = arith.constant 0 : index
    %229 = vector.load %arg15[%c0_92, %c0_93] : memref<4x128xf32, #tpu.memory_space<vmem>>, vector<4x128xf32>
    tpu.vector_store %arg15[%c0_92, %c0_93], %166 {strides = array<i32>} : memref<4x128xf32, #tpu.memory_space<vmem>>, vector<4x128xf32>,
    %c0_94 = arith.constant 0 : index
    %c0_95 = arith.constant 0 : index
    %230 = vector.load %arg16[%c0_94, %c0_95] : memref<4x128xf32, #tpu.memory_space<vmem>>, vector<4x128xf32>
    tpu.vector_store %arg16[%c0_94, %c0_95], %228 {strides = array<i32>} : memref<4x128xf32, #tpu.memory_space<vmem>>, vector<4x128xf32>,
    return
  }
}

module attributes {stable_mosaic.version = 11 : i64} {
  func.func @kernel(%arg0: i32, %arg1: i32, %arg2: i32, %arg3: memref<1x2x16x64xbf16, #tpu.memory_space<vmem>>, %arg4: memref<36x128xbf16, #tpu.memory_space<vmem>>, %arg5: memref<1x128xf32, #tpu.memory_space<vmem>>, %arg6: memref<1x128xf32, #tpu.memory_space<vmem>>, %arg7: memref<1x2x128xf32, #tpu.memory_space<vmem>>, %arg8: memref<2x18x18x4xf32, #tpu.memory_space<vmem>>, %arg9: memref<2x16x16x128xf32, #tpu.memory_space<vmem>>, %arg10: memref<1x128xf32, #tpu.memory_space<vmem>>, %arg11: memref<1x128xf32, #tpu.memory_space<vmem>>, %arg12: memref<1x128xf32, #tpu.memory_space<vmem>>, %arg13: memref<1x128xf32, #tpu.memory_space<vmem>>, %arg14: memref<2x128xf32, #tpu.memory_space<vmem>>) attributes {dimension_semantics = [#tpu.dimension_semantics<parallel>, #tpu.dimension_semantics<arbitrary>, #tpu.dimension_semantics<arbitrary>], iteration_bounds = array<i64: 2, 3, 1>, scalar_prefetch = 0 : i64, scratch_operands = 7 : i64, tpu.core_type = #tpu.core_type<tc>, window_params = [{transform_indices = @transform_0, window_bounds = array<i64: 1, 2, 16, 64>}, {pipeline_mode = #tpu.pipeline_mode<synchronous>, transform_indices = @transform_1, window_bounds = array<i64: 36, 128>}, {pipeline_mode = #tpu.pipeline_mode<synchronous>, transform_indices = @transform_2, window_bounds = array<i64: 1, 128>}, {pipeline_mode = #tpu.pipeline_mode<synchronous>, transform_indices = @transform_3, window_bounds = array<i64: 1, 128>}, {transform_indices = @transform_4, window_bounds = array<i64: 1, 2, 128>}]} {
    %c16_i32 = arith.constant 16 : i32
    %0 = arith.muli %arg2, %c16_i32 : i32
    %1 = tpu.assume_multiple %0, 16 : i32
    %c0_i32 = arith.constant 0 : i32
    %2 = arith.cmpi eq, %arg1, %c0_i32 : i32
    %c0_i32_0 = arith.constant 0 : i32
    %3 = arith.cmpi eq, %arg2, %c0_i32_0 : i32
    %4 = arith.andi %2, %3 : i1
    %5 = arith.extui %4 : i1 to i32
    %c0_i32_1 = arith.constant 0 : i32
    %6 = arith.cmpi ne, %5, %c0_i32_1 : i32
    scf.if %6 {
      %cst = arith.constant 0.000000e+00 : f32
      %31 = vector.broadcast %cst : f32 to vector<2x18x18x4xf32>
      %c0 = arith.constant 0 : index
      %c0_15 = arith.constant 0 : index
      %c0_16 = arith.constant 0 : index
      %c0_17 = arith.constant 0 : index
      %32 = vector.load %arg8[%c0, %c0_15, %c0_16, %c0_17] : memref<2x18x18x4xf32, #tpu.memory_space<vmem>>, vector<2x18x18x4xf32>
      tpu.vector_store %arg8[%c0, %c0_15, %c0_16, %c0_17], %31 {strides = array<i32>} : memref<2x18x18x4xf32, #tpu.memory_space<vmem>>, vector<2x18x18x4xf32>,
      %c0_18 = arith.constant 0 : index
      %c0_19 = arith.constant 0 : index
      %c0_20 = arith.constant 0 : index
      %c0_21 = arith.constant 0 : index
      %33 = vector.load %arg3[%c0_18, %c0_19, %c0_20, %c0_21] : memref<1x2x16x64xbf16, #tpu.memory_space<vmem>>, vector<1x2x16x64xbf16>
      %34 = vector.shape_cast %33 : vector<1x2x16x64xbf16> to vector<2x16x64xbf16>
      %35 = arith.extf %34 : vector<2x16x64xbf16> to vector<2x16x64xf32>
      %36 = vector.extract_strided_slice %35 {offsets = [0, 0, 0], sizes = [2, 16, 4], strides = [1, 1, 1]} : vector<2x16x64xf32> to vector<2x16x4xf32>
      %c0_22 = arith.constant 0 : index
      %c1 = arith.constant 1 : index
      %c1_23 = arith.constant 1 : index
      %c0_24 = arith.constant 0 : index
      %37 = vector.load %arg8[%c0_22, %c1, %c1_23, %c0_24] : memref<2x18x18x4xf32, #tpu.memory_space<vmem>>, vector<2x1x16x4xf32>
      %38 = vector.shape_cast %37 : vector<2x1x16x4xf32> to vector<2x16x4xf32>
      %39 = vector.shape_cast %36 : vector<2x16x4xf32> to vector<2x1x16x4xf32>
      tpu.vector_store %arg8[%c0_22, %c1, %c1_23, %c0_24], %39 {strides = array<i32>} : memref<2x18x18x4xf32, #tpu.memory_space<vmem>>, vector<2x1x16x4xf32>,
      %40 = vector.extract_strided_slice %35 {offsets = [0, 0, 4], sizes = [2, 16, 4], strides = [1, 1, 1]} : vector<2x16x64xf32> to vector<2x16x4xf32>
      %c0_25 = arith.constant 0 : index
      %c2 = arith.constant 2 : index
      %c1_26 = arith.constant 1 : index
      %c0_27 = arith.constant 0 : index
      %41 = vector.load %arg8[%c0_25, %c2, %c1_26, %c0_27] : memref<2x18x18x4xf32, #tpu.memory_space<vmem>>, vector<2x1x16x4xf32>
      %42 = vector.shape_cast %41 : vector<2x1x16x4xf32> to vector<2x16x4xf32>
      %43 = vector.shape_cast %40 : vector<2x16x4xf32> to vector<2x1x16x4xf32>
      tpu.vector_store %arg8[%c0_25, %c2, %c1_26, %c0_27], %43 {strides = array<i32>} : memref<2x18x18x4xf32, #tpu.memory_space<vmem>>, vector<2x1x16x4xf32>,
      %44 = vector.extract_strided_slice %35 {offsets = [0, 0, 8], sizes = [2, 16, 4], strides = [1, 1, 1]} : vector<2x16x64xf32> to vector<2x16x4xf32>
      %c0_28 = arith.constant 0 : index
      %c3 = arith.constant 3 : index
      %c1_29 = arith.constant 1 : index
      %c0_30 = arith.constant 0 : index
      %45 = vector.load %arg8[%c0_28, %c3, %c1_29, %c0_30] : memref<2x18x18x4xf32, #tpu.memory_space<vmem>>, vector<2x1x16x4xf32>
      %46 = vector.shape_cast %45 : vector<2x1x16x4xf32> to vector<2x16x4xf32>
      %47 = vector.shape_cast %44 : vector<2x16x4xf32> to vector<2x1x16x4xf32>
      tpu.vector_store %arg8[%c0_28, %c3, %c1_29, %c0_30], %47 {strides = array<i32>} : memref<2x18x18x4xf32, #tpu.memory_space<vmem>>, vector<2x1x16x4xf32>,
      %48 = vector.extract_strided_slice %35 {offsets = [0, 0, 12], sizes = [2, 16, 4], strides = [1, 1, 1]} : vector<2x16x64xf32> to vector<2x16x4xf32>
      %c0_31 = arith.constant 0 : index
      %c4 = arith.constant 4 : index
      %c1_32 = arith.constant 1 : index
      %c0_33 = arith.constant 0 : index
      %49 = vector.load %arg8[%c0_31, %c4, %c1_32, %c0_33] : memref<2x18x18x4xf32, #tpu.memory_space<vmem>>, vector<2x1x16x4xf32>
      %50 = vector.shape_cast %49 : vector<2x1x16x4xf32> to vector<2x16x4xf32>
      %51 = vector.shape_cast %48 : vector<2x16x4xf32> to vector<2x1x16x4xf32>
      tpu.vector_store %arg8[%c0_31, %c4, %c1_32, %c0_33], %51 {strides = array<i32>} : memref<2x18x18x4xf32, #tpu.memory_space<vmem>>, vector<2x1x16x4xf32>,
      %52 = vector.extract_strided_slice %35 {offsets = [0, 0, 16], sizes = [2, 16, 4], strides = [1, 1, 1]} : vector<2x16x64xf32> to vector<2x16x4xf32>
      %c0_34 = arith.constant 0 : index
      %c5 = arith.constant 5 : index
      %c1_35 = arith.constant 1 : index
      %c0_36 = arith.constant 0 : index
      %53 = vector.load %arg8[%c0_34, %c5, %c1_35, %c0_36] : memref<2x18x18x4xf32, #tpu.memory_space<vmem>>, vector<2x1x16x4xf32>
      %54 = vector.shape_cast %53 : vector<2x1x16x4xf32> to vector<2x16x4xf32>
      %55 = vector.shape_cast %52 : vector<2x16x4xf32> to vector<2x1x16x4xf32>
      tpu.vector_store %arg8[%c0_34, %c5, %c1_35, %c0_36], %55 {strides = array<i32>} : memref<2x18x18x4xf32, #tpu.memory_space<vmem>>, vector<2x1x16x4xf32>,
      %56 = vector.extract_strided_slice %35 {offsets = [0, 0, 20], sizes = [2, 16, 4], strides = [1, 1, 1]} : vector<2x16x64xf32> to vector<2x16x4xf32>
      %c0_37 = arith.constant 0 : index
      %c6 = arith.constant 6 : index
      %c1_38 = arith.constant 1 : index
      %c0_39 = arith.constant 0 : index
      %57 = vector.load %arg8[%c0_37, %c6, %c1_38, %c0_39] : memref<2x18x18x4xf32, #tpu.memory_space<vmem>>, vector<2x1x16x4xf32>
      %58 = vector.shape_cast %57 : vector<2x1x16x4xf32> to vector<2x16x4xf32>
      %59 = vector.shape_cast %56 : vector<2x16x4xf32> to vector<2x1x16x4xf32>
      tpu.vector_store %arg8[%c0_37, %c6, %c1_38, %c0_39], %59 {strides = array<i32>} : memref<2x18x18x4xf32, #tpu.memory_space<vmem>>, vector<2x1x16x4xf32>,
      %60 = vector.extract_strided_slice %35 {offsets = [0, 0, 24], sizes = [2, 16, 4], strides = [1, 1, 1]} : vector<2x16x64xf32> to vector<2x16x4xf32>
      %c0_40 = arith.constant 0 : index
      %c7 = arith.constant 7 : index
      %c1_41 = arith.constant 1 : index
      %c0_42 = arith.constant 0 : index
      %61 = vector.load %arg8[%c0_40, %c7, %c1_41, %c0_42] : memref<2x18x18x4xf32, #tpu.memory_space<vmem>>, vector<2x1x16x4xf32>
      %62 = vector.shape_cast %61 : vector<2x1x16x4xf32> to vector<2x16x4xf32>
      %63 = vector.shape_cast %60 : vector<2x16x4xf32> to vector<2x1x16x4xf32>
      tpu.vector_store %arg8[%c0_40, %c7, %c1_41, %c0_42], %63 {strides = array<i32>} : memref<2x18x18x4xf32, #tpu.memory_space<vmem>>, vector<2x1x16x4xf32>,
      %64 = vector.extract_strided_slice %35 {offsets = [0, 0, 28], sizes = [2, 16, 4], strides = [1, 1, 1]} : vector<2x16x64xf32> to vector<2x16x4xf32>
      %c0_43 = arith.constant 0 : index
      %c8 = arith.constant 8 : index
      %c1_44 = arith.constant 1 : index
      %c0_45 = arith.constant 0 : index
      %65 = vector.load %arg8[%c0_43, %c8, %c1_44, %c0_45] : memref<2x18x18x4xf32, #tpu.memory_space<vmem>>, vector<2x1x16x4xf32>
      %66 = vector.shape_cast %65 : vector<2x1x16x4xf32> to vector<2x16x4xf32>
      %67 = vector.shape_cast %64 : vector<2x16x4xf32> to vector<2x1x16x4xf32>
      tpu.vector_store %arg8[%c0_43, %c8, %c1_44, %c0_45], %67 {strides = array<i32>} : memref<2x18x18x4xf32, #tpu.memory_space<vmem>>, vector<2x1x16x4xf32>,
      %68 = vector.extract_strided_slice %35 {offsets = [0, 0, 32], sizes = [2, 16, 4], strides = [1, 1, 1]} : vector<2x16x64xf32> to vector<2x16x4xf32>
      %c0_46 = arith.constant 0 : index
      %c9 = arith.constant 9 : index
      %c1_47 = arith.constant 1 : index
      %c0_48 = arith.constant 0 : index
      %69 = vector.load %arg8[%c0_46, %c9, %c1_47, %c0_48] : memref<2x18x18x4xf32, #tpu.memory_space<vmem>>, vector<2x1x16x4xf32>
      %70 = vector.shape_cast %69 : vector<2x1x16x4xf32> to vector<2x16x4xf32>
      %71 = vector.shape_cast %68 : vector<2x16x4xf32> to vector<2x1x16x4xf32>
      tpu.vector_store %arg8[%c0_46, %c9, %c1_47, %c0_48], %71 {strides = array<i32>} : memref<2x18x18x4xf32, #tpu.memory_space<vmem>>, vector<2x1x16x4xf32>,
      %72 = vector.extract_strided_slice %35 {offsets = [0, 0, 36], sizes = [2, 16, 4], strides = [1, 1, 1]} : vector<2x16x64xf32> to vector<2x16x4xf32>
      %c0_49 = arith.constant 0 : index
      %c10 = arith.constant 10 : index
      %c1_50 = arith.constant 1 : index
      %c0_51 = arith.constant 0 : index
      %73 = vector.load %arg8[%c0_49, %c10, %c1_50, %c0_51] : memref<2x18x18x4xf32, #tpu.memory_space<vmem>>, vector<2x1x16x4xf32>
      %74 = vector.shape_cast %73 : vector<2x1x16x4xf32> to vector<2x16x4xf32>
      %75 = vector.shape_cast %72 : vector<2x16x4xf32> to vector<2x1x16x4xf32>
      tpu.vector_store %arg8[%c0_49, %c10, %c1_50, %c0_51], %75 {strides = array<i32>} : memref<2x18x18x4xf32, #tpu.memory_space<vmem>>, vector<2x1x16x4xf32>,
      %76 = vector.extract_strided_slice %35 {offsets = [0, 0, 40], sizes = [2, 16, 4], strides = [1, 1, 1]} : vector<2x16x64xf32> to vector<2x16x4xf32>
      %c0_52 = arith.constant 0 : index
      %c11 = arith.constant 11 : index
      %c1_53 = arith.constant 1 : index
      %c0_54 = arith.constant 0 : index
      %77 = vector.load %arg8[%c0_52, %c11, %c1_53, %c0_54] : memref<2x18x18x4xf32, #tpu.memory_space<vmem>>, vector<2x1x16x4xf32>
      %78 = vector.shape_cast %77 : vector<2x1x16x4xf32> to vector<2x16x4xf32>
      %79 = vector.shape_cast %76 : vector<2x16x4xf32> to vector<2x1x16x4xf32>
      tpu.vector_store %arg8[%c0_52, %c11, %c1_53, %c0_54], %79 {strides = array<i32>} : memref<2x18x18x4xf32, #tpu.memory_space<vmem>>, vector<2x1x16x4xf32>,
      %80 = vector.extract_strided_slice %35 {offsets = [0, 0, 44], sizes = [2, 16, 4], strides = [1, 1, 1]} : vector<2x16x64xf32> to vector<2x16x4xf32>
      %c0_55 = arith.constant 0 : index
      %c12 = arith.constant 12 : index
      %c1_56 = arith.constant 1 : index
      %c0_57 = arith.constant 0 : index
      %81 = vector.load %arg8[%c0_55, %c12, %c1_56, %c0_57] : memref<2x18x18x4xf32, #tpu.memory_space<vmem>>, vector<2x1x16x4xf32>
      %82 = vector.shape_cast %81 : vector<2x1x16x4xf32> to vector<2x16x4xf32>
      %83 = vector.shape_cast %80 : vector<2x16x4xf32> to vector<2x1x16x4xf32>
      tpu.vector_store %arg8[%c0_55, %c12, %c1_56, %c0_57], %83 {strides = array<i32>} : memref<2x18x18x4xf32, #tpu.memory_space<vmem>>, vector<2x1x16x4xf32>,
      %84 = vector.extract_strided_slice %35 {offsets = [0, 0, 48], sizes = [2, 16, 4], strides = [1, 1, 1]} : vector<2x16x64xf32> to vector<2x16x4xf32>
      %c0_58 = arith.constant 0 : index
      %c13 = arith.constant 13 : index
      %c1_59 = arith.constant 1 : index
      %c0_60 = arith.constant 0 : index
      %85 = vector.load %arg8[%c0_58, %c13, %c1_59, %c0_60] : memref<2x18x18x4xf32, #tpu.memory_space<vmem>>, vector<2x1x16x4xf32>
      %86 = vector.shape_cast %85 : vector<2x1x16x4xf32> to vector<2x16x4xf32>
      %87 = vector.shape_cast %84 : vector<2x16x4xf32> to vector<2x1x16x4xf32>
      tpu.vector_store %arg8[%c0_58, %c13, %c1_59, %c0_60], %87 {strides = array<i32>} : memref<2x18x18x4xf32, #tpu.memory_space<vmem>>, vector<2x1x16x4xf32>,
      %88 = vector.extract_strided_slice %35 {offsets = [0, 0, 52], sizes = [2, 16, 4], strides = [1, 1, 1]} : vector<2x16x64xf32> to vector<2x16x4xf32>
      %c0_61 = arith.constant 0 : index
      %c14 = arith.constant 14 : index
      %c1_62 = arith.constant 1 : index
      %c0_63 = arith.constant 0 : index
      %89 = vector.load %arg8[%c0_61, %c14, %c1_62, %c0_63] : memref<2x18x18x4xf32, #tpu.memory_space<vmem>>, vector<2x1x16x4xf32>
      %90 = vector.shape_cast %89 : vector<2x1x16x4xf32> to vector<2x16x4xf32>
      %91 = vector.shape_cast %88 : vector<2x16x4xf32> to vector<2x1x16x4xf32>
      tpu.vector_store %arg8[%c0_61, %c14, %c1_62, %c0_63], %91 {strides = array<i32>} : memref<2x18x18x4xf32, #tpu.memory_space<vmem>>, vector<2x1x16x4xf32>,
      %92 = vector.extract_strided_slice %35 {offsets = [0, 0, 56], sizes = [2, 16, 4], strides = [1, 1, 1]} : vector<2x16x64xf32> to vector<2x16x4xf32>
      %c0_64 = arith.constant 0 : index
      %c15 = arith.constant 15 : index
      %c1_65 = arith.constant 1 : index
      %c0_66 = arith.constant 0 : index
      %93 = vector.load %arg8[%c0_64, %c15, %c1_65, %c0_66] : memref<2x18x18x4xf32, #tpu.memory_space<vmem>>, vector<2x1x16x4xf32>
      %94 = vector.shape_cast %93 : vector<2x1x16x4xf32> to vector<2x16x4xf32>
      %95 = vector.shape_cast %92 : vector<2x16x4xf32> to vector<2x1x16x4xf32>
      tpu.vector_store %arg8[%c0_64, %c15, %c1_65, %c0_66], %95 {strides = array<i32>} : memref<2x18x18x4xf32, #tpu.memory_space<vmem>>, vector<2x1x16x4xf32>,
      %96 = vector.extract_strided_slice %35 {offsets = [0, 0, 60], sizes = [2, 16, 4], strides = [1, 1, 1]} : vector<2x16x64xf32> to vector<2x16x4xf32>
      %c0_67 = arith.constant 0 : index
      %c16 = arith.constant 16 : index
      %c1_68 = arith.constant 1 : index
      %c0_69 = arith.constant 0 : index
      %97 = vector.load %arg8[%c0_67, %c16, %c1_68, %c0_69] : memref<2x18x18x4xf32, #tpu.memory_space<vmem>>, vector<2x1x16x4xf32>
      %98 = vector.shape_cast %97 : vector<2x1x16x4xf32> to vector<2x16x4xf32>
      %99 = vector.shape_cast %96 : vector<2x16x4xf32> to vector<2x1x16x4xf32>
      tpu.vector_store %arg8[%c0_67, %c16, %c1_68, %c0_69], %99 {strides = array<i32>} : memref<2x18x18x4xf32, #tpu.memory_space<vmem>>, vector<2x1x16x4xf32>,
      %cst_70 = arith.constant 0.000000e+00 : f32
      %100 = vector.broadcast %cst_70 : f32 to vector<1x128xf32>
      %c0_71 = arith.constant 0 : index
      %c0_72 = arith.constant 0 : index
      %101 = vector.load %arg10[%c0_71, %c0_72] : memref<1x128xf32, #tpu.memory_space<vmem>>, vector<1x128xf32>
      tpu.vector_store %arg10[%c0_71, %c0_72], %100 {strides = array<i32>} : memref<1x128xf32, #tpu.memory_space<vmem>>, vector<1x128xf32>,
    } else {
    }
    %c1_i32 = arith.constant 1 : i32
    %7 = arith.cmpi eq, %arg1, %c1_i32 : i32
    %c0_i32_2 = arith.constant 0 : i32
    %8 = arith.cmpi eq, %arg2, %c0_i32_2 : i32
    %9 = arith.andi %7, %8 : i1
    %10 = arith.extui %9 : i1 to i32
    %c0_i32_3 = arith.constant 0 : i32
    %11 = arith.cmpi ne, %10, %c0_i32_3 : i32
    scf.if %11 {
      %c0 = arith.constant 0 : index
      %c0_15 = arith.constant 0 : index
      %31 = vector.load %arg10[%c0, %c0_15] : memref<1x128xf32, #tpu.memory_space<vmem>>, vector<1x128xf32>
      %cst = arith.constant 0.001953125 : f32
      %32 = vector.broadcast %cst : f32 to vector<1x128xf32>
      %33 = arith.mulf %31, %32 : vector<1x128xf32>
      %c0_16 = arith.constant 0 : index
      %c0_17 = arith.constant 0 : index
      %34 = vector.load %arg10[%c0_16, %c0_17] : memref<1x128xf32, #tpu.memory_space<vmem>>, vector<1x128xf32>
      tpu.vector_store %arg10[%c0_16, %c0_17], %33 {strides = array<i32>} : memref<1x128xf32, #tpu.memory_space<vmem>>, vector<1x128xf32>,
      %cst_18 = arith.constant 0.000000e+00 : f32
      %35 = vector.broadcast %cst_18 : f32 to vector<1x128xf32>
      %c0_19 = arith.constant 0 : index
      %c0_20 = arith.constant 0 : index
      %36 = vector.load %arg11[%c0_19, %c0_20] : memref<1x128xf32, #tpu.memory_space<vmem>>, vector<1x128xf32>
      tpu.vector_store %arg11[%c0_19, %c0_20], %35 {strides = array<i32>} : memref<1x128xf32, #tpu.memory_space<vmem>>, vector<1x128xf32>,
    } else {
    }
    %c2_i32 = arith.constant 2 : i32
    %12 = arith.cmpi eq, %arg1, %c2_i32 : i32
    %c0_i32_4 = arith.constant 0 : i32
    %13 = arith.cmpi eq, %arg2, %c0_i32_4 : i32
    %14 = arith.andi %12, %13 : i1
    %15 = arith.extui %14 : i1 to i32
    %c0_i32_5 = arith.constant 0 : i32
    %16 = arith.cmpi ne, %15, %c0_i32_5 : i32
    scf.if %16 {
      %c0 = arith.constant 0 : index
      %c0_15 = arith.constant 0 : index
      %31 = vector.load %arg11[%c0, %c0_15] : memref<1x128xf32, #tpu.memory_space<vmem>>, vector<1x128xf32>
      %cst = arith.constant 0.001953125 : f32
      %32 = vector.broadcast %cst : f32 to vector<1x128xf32>
      %33 = arith.mulf %31, %32 : vector<1x128xf32>
      %c0_16 = arith.constant 0 : index
      %c0_17 = arith.constant 0 : index
      %34 = vector.load %arg5[%c0_16, %c0_17] : memref<1x128xf32, #tpu.memory_space<vmem>>, vector<1x128xf32>
      %cst_18 = arith.constant 9.99999974E-6 : f32
      %35 = vector.broadcast %cst_18 : f32 to vector<1x128xf32>
      %36 = arith.addf %33, %35 : vector<1x128xf32>
      %37 = math.rsqrt %36 : vector<1x128xf32>
      %38 = arith.mulf %34, %37 : vector<1x128xf32>
      %c0_19 = arith.constant 0 : index
      %c0_20 = arith.constant 0 : index
      %39 = vector.load %arg12[%c0_19, %c0_20] : memref<1x128xf32, #tpu.memory_space<vmem>>, vector<1x128xf32>
      tpu.vector_store %arg12[%c0_19, %c0_20], %38 {strides = array<i32>} : memref<1x128xf32, #tpu.memory_space<vmem>>, vector<1x128xf32>,
      %c0_21 = arith.constant 0 : index
      %c0_22 = arith.constant 0 : index
      %40 = vector.load %arg6[%c0_21, %c0_22] : memref<1x128xf32, #tpu.memory_space<vmem>>, vector<1x128xf32>
      %c0_23 = arith.constant 0 : index
      %c0_24 = arith.constant 0 : index
      %41 = vector.load %arg10[%c0_23, %c0_24] : memref<1x128xf32, #tpu.memory_space<vmem>>, vector<1x128xf32>
      %c0_25 = arith.constant 0 : index
      %c0_26 = arith.constant 0 : index
      %42 = vector.load %arg12[%c0_25, %c0_26] : memref<1x128xf32, #tpu.memory_space<vmem>>, vector<1x128xf32>
      %43 = arith.mulf %41, %42 : vector<1x128xf32>
      %44 = arith.subf %40, %43 : vector<1x128xf32>
      %c0_27 = arith.constant 0 : index
      %c0_28 = arith.constant 0 : index
      %45 = vector.load %arg13[%c0_27, %c0_28] : memref<1x128xf32, #tpu.memory_space<vmem>>, vector<1x128xf32>
      tpu.vector_store %arg13[%c0_27, %c0_28], %44 {strides = array<i32>} : memref<1x128xf32, #tpu.memory_space<vmem>>, vector<1x128xf32>,
      %cst_29 = arith.constant 0.000000e+00 : f32
      %46 = vector.broadcast %cst_29 : f32 to vector<2x128xf32>
      %c0_30 = arith.constant 0 : index
      %c0_31 = arith.constant 0 : index
      %47 = vector.load %arg14[%c0_30, %c0_31] : memref<2x128xf32, #tpu.memory_space<vmem>>, vector<2x128xf32>
      tpu.vector_store %arg14[%c0_30, %c0_31], %46 {strides = array<i32>} : memref<2x128xf32, #tpu.memory_space<vmem>>, vector<2x128xf32>,
    } else {
    }
    %c0_i32_6 = arith.constant 0 : i32
    %17 = arith.cmpi eq, %arg1, %c0_i32_6 : i32
    %18 = arith.extui %17 : i1 to i32
    %c0_i32_7 = arith.constant 0 : i32
    %19 = arith.cmpi ne, %18, %c0_i32_7 : i32
    scf.if %19 {
      %c0_i32_15 = arith.constant 0 : i32
      %31 = arith.addi %1, %c0_i32_15 : i32
      %c0 = arith.constant 0 : index
      %c0_16 = arith.constant 0 : index
      %32 = arith.index_cast %31 : i32 to index
      %c0_17 = arith.constant 0 : index
      %33 = vector.load %arg8[%c0, %c0_16, %32, %c0_17] : memref<2x18x18x4xf32, #tpu.memory_space<vmem>>, vector<2x16x16x4xf32>
      %c0_i32_18 = arith.constant 0 : i32
      %34 = arith.addi %1, %c0_i32_18 : i32
      %c0_19 = arith.constant 0 : index
      %c1 = arith.constant 1 : index
      %35 = arith.index_cast %34 : i32 to index
      %c0_20 = arith.constant 0 : index
      %36 = vector.load %arg8[%c0_19, %c1, %35, %c0_20] : memref<2x18x18x4xf32, #tpu.memory_space<vmem>>, vector<2x16x16x4xf32>
      %c0_i32_21 = arith.constant 0 : i32
      %37 = arith.addi %1, %c0_i32_21 : i32
      %c0_22 = arith.constant 0 : index
      %c2 = arith.constant 2 : index
      %38 = arith.index_cast %37 : i32 to index
      %c0_23 = arith.constant 0 : index
      %39 = vector.load %arg8[%c0_22, %c2, %38, %c0_23] : memref<2x18x18x4xf32, #tpu.memory_space<vmem>>, vector<2x16x16x4xf32>
      %c1_i32_24 = arith.constant 1 : i32
      %40 = arith.addi %1, %c1_i32_24 : i32
      %c0_25 = arith.constant 0 : index
      %c0_26 = arith.constant 0 : index
      %41 = arith.index_cast %40 : i32 to index
      %c0_27 = arith.constant 0 : index
      %42 = vector.load %arg8[%c0_25, %c0_26, %41, %c0_27] : memref<2x18x18x4xf32, #tpu.memory_space<vmem>>, vector<2x16x16x4xf32>
      %c1_i32_28 = arith.constant 1 : i32
      %43 = arith.addi %1, %c1_i32_28 : i32
      %c0_29 = arith.constant 0 : index
      %c1_30 = arith.constant 1 : index
      %44 = arith.index_cast %43 : i32 to index
      %c0_31 = arith.constant 0 : index
      %45 = vector.load %arg8[%c0_29, %c1_30, %44, %c0_31] : memref<2x18x18x4xf32, #tpu.memory_space<vmem>>, vector<2x16x16x4xf32>
      %c1_i32_32 = arith.constant 1 : i32
      %46 = arith.addi %1, %c1_i32_32 : i32
      %c0_33 = arith.constant 0 : index
      %c2_34 = arith.constant 2 : index
      %47 = arith.index_cast %46 : i32 to index
      %c0_35 = arith.constant 0 : index
      %48 = vector.load %arg8[%c0_33, %c2_34, %47, %c0_35] : memref<2x18x18x4xf32, #tpu.memory_space<vmem>>, vector<2x16x16x4xf32>
      %c2_i32_36 = arith.constant 2 : i32
      %49 = arith.addi %1, %c2_i32_36 : i32
      %c0_37 = arith.constant 0 : index
      %c0_38 = arith.constant 0 : index
      %50 = arith.index_cast %49 : i32 to index
      %c0_39 = arith.constant 0 : index
      %51 = vector.load %arg8[%c0_37, %c0_38, %50, %c0_39] : memref<2x18x18x4xf32, #tpu.memory_space<vmem>>, vector<2x16x16x4xf32>
      %c2_i32_40 = arith.constant 2 : i32
      %52 = arith.addi %1, %c2_i32_40 : i32
      %c0_41 = arith.constant 0 : index
      %c1_42 = arith.constant 1 : index
      %53 = arith.index_cast %52 : i32 to index
      %c0_43 = arith.constant 0 : index
      %54 = vector.load %arg8[%c0_41, %c1_42, %53, %c0_43] : memref<2x18x18x4xf32, #tpu.memory_space<vmem>>, vector<2x16x16x4xf32>
      %c2_i32_44 = arith.constant 2 : i32
      %55 = arith.addi %1, %c2_i32_44 : i32
      %c0_45 = arith.constant 0 : index
      %c2_46 = arith.constant 2 : index
      %56 = arith.index_cast %55 : i32 to index
      %c0_47 = arith.constant 0 : index
      %57 = vector.load %arg8[%c0_45, %c2_46, %56, %c0_47] : memref<2x18x18x4xf32, #tpu.memory_space<vmem>>, vector<2x16x16x4xf32>
      %58 = tpu.concatenate %33, %36, %39, %42, %45, %48, %51, %54, %57 in 3 : vector<2x16x16x4xf32>, vector<2x16x16x4xf32>, vector<2x16x16x4xf32>, vector<2x16x16x4xf32>, vector<2x16x16x4xf32>, vector<2x16x16x4xf32>, vector<2x16x16x4xf32>, vector<2x16x16x4xf32>, vector<2x16x16x4xf32> -> vector<2x16x16x36xf32>
      %59 = vector.shape_cast %58 : vector<2x16x16x36xf32> to vector<512x36xf32>
      %60 = arith.truncf %59 : vector<512x36xf32> to vector<512x36xbf16>
      %c0_48 = arith.constant 0 : index
      %c0_49 = arith.constant 0 : index
      %61 = vector.load %arg4[%c0_48, %c0_49] : memref<36x128xbf16, #tpu.memory_space<vmem>>, vector<36x128xbf16>
      %cst = arith.constant dense<0.000000e+00> : vector<512x128xf32>
      %62 = tpu.matmul %60, %61, %cst {dimension_numbers = #tpu.dot_dimension_numbers<[1], [0], [0], [1], [0, 0, 1, 1], [], []>} : vector<512x36xbf16>, vector<36x128xbf16>, vector<512x128xf32> -> vector<512x128xf32>
      %63 = vector.shape_cast %62 : vector<512x128xf32> to vector<2x16x16x128xf32>
      %c0_50 = arith.constant 0 : index
      %c0_51 = arith.constant 0 : index
      %64 = arith.index_cast %1 : i32 to index
      %c0_52 = arith.constant 0 : index
      %65 = vector.load %arg9[%c0_50, %c0_51, %64, %c0_52] : memref<2x16x16x128xf32, #tpu.memory_space<vmem>>, vector<2x16x16x128xf32>
      tpu.vector_store %arg9[%c0_50, %c0_51, %64, %c0_52], %63 {strides = array<i32>} : memref<2x16x16x128xf32, #tpu.memory_space<vmem>>, vector<2x16x16x128xf32>,
      %c0_53 = arith.constant 0 : index
      %c0_54 = arith.constant 0 : index
      %66 = vector.load %arg10[%c0_53, %c0_54] : memref<1x128xf32, #tpu.memory_space<vmem>>, vector<1x128xf32>
      %cst_55 = arith.constant dense<0.000000e+00> : vector<128xf32>
      %67 = vector.multi_reduction <add>, %62, %cst_55 [0] : vector<512x128xf32> to vector<128xf32>
      %68 = vector.shape_cast %67 : vector<128xf32> to vector<1x128xf32>
      %69 = arith.addf %66, %68 : vector<1x128xf32>
      %c0_56 = arith.constant 0 : index
      %c0_57 = arith.constant 0 : index
      %70 = vector.load %arg10[%c0_56, %c0_57] : memref<1x128xf32, #tpu.memory_space<vmem>>, vector<1x128xf32>
      tpu.vector_store %arg10[%c0_56, %c0_57], %69 {strides = array<i32>} : memref<1x128xf32, #tpu.memory_space<vmem>>, vector<1x128xf32>,
    } else {
    }
    %c1_i32_8 = arith.constant 1 : i32
    %20 = arith.cmpi eq, %arg1, %c1_i32_8 : i32
    %21 = arith.extui %20 : i1 to i32
    %c0_i32_9 = arith.constant 0 : i32
    %22 = arith.cmpi ne, %21, %c0_i32_9 : i32
    scf.if %22 {
      %c0 = arith.constant 0 : index
      %c0_15 = arith.constant 0 : index
      %31 = arith.index_cast %1 : i32 to index
      %c0_16 = arith.constant 0 : index
      %32 = vector.load %arg9[%c0, %c0_15, %31, %c0_16] : memref<2x16x16x128xf32, #tpu.memory_space<vmem>>, vector<2x16x16x128xf32>
      %33 = vector.shape_cast %32 : vector<2x16x16x128xf32> to vector<512x128xf32>
      %c0_17 = arith.constant 0 : index
      %c0_18 = arith.constant 0 : index
      %34 = vector.load %arg10[%c0_17, %c0_18] : memref<1x128xf32, #tpu.memory_space<vmem>>, vector<1x128xf32>
      %35 = vector.broadcast %34 : vector<1x128xf32> to vector<512x128xf32>
      %36 = arith.subf %33, %35 : vector<512x128xf32>
      %c0_19 = arith.constant 0 : index
      %c0_20 = arith.constant 0 : index
      %37 = vector.load %arg11[%c0_19, %c0_20] : memref<1x128xf32, #tpu.memory_space<vmem>>, vector<1x128xf32>
      %38 = arith.mulf %36, %36 : vector<512x128xf32>
      %cst = arith.constant dense<0.000000e+00> : vector<128xf32>
      %39 = vector.multi_reduction <add>, %38, %cst [0] : vector<512x128xf32> to vector<128xf32>
      %40 = vector.shape_cast %39 : vector<128xf32> to vector<1x128xf32>
      %41 = arith.addf %37, %40 : vector<1x128xf32>
      %c0_21 = arith.constant 0 : index
      %c0_22 = arith.constant 0 : index
      %42 = vector.load %arg11[%c0_21, %c0_22] : memref<1x128xf32, #tpu.memory_space<vmem>>, vector<1x128xf32>
      tpu.vector_store %arg11[%c0_21, %c0_22], %41 {strides = array<i32>} : memref<1x128xf32, #tpu.memory_space<vmem>>, vector<1x128xf32>,
    } else {
    }
    %c2_i32_10 = arith.constant 2 : i32
    %23 = arith.cmpi eq, %arg1, %c2_i32_10 : i32
    %24 = arith.extui %23 : i1 to i32
    %c0_i32_11 = arith.constant 0 : i32
    %25 = arith.cmpi ne, %24, %c0_i32_11 : i32
    scf.if %25 {
      %c0 = arith.constant 0 : index
      %c0_15 = arith.constant 0 : index
      %31 = arith.index_cast %1 : i32 to index
      %c0_16 = arith.constant 0 : index
      %32 = vector.load %arg9[%c0, %c0_15, %31, %c0_16] : memref<2x16x16x128xf32, #tpu.memory_space<vmem>>, vector<2x16x16x128xf32>
      %c0_17 = arith.constant 0 : index
      %c0_18 = arith.constant 0 : index
      %33 = vector.load %arg12[%c0_17, %c0_18] : memref<1x128xf32, #tpu.memory_space<vmem>>, vector<1x128xf32>
      %34 = vector.shape_cast %33 : vector<1x128xf32> to vector<1x1x1x128xf32>
      %35 = vector.broadcast %34 : vector<1x1x1x128xf32> to vector<2x16x16x128xf32>
      %36 = arith.mulf %32, %35 : vector<2x16x16x128xf32>
      %c0_19 = arith.constant 0 : index
      %c0_20 = arith.constant 0 : index
      %37 = vector.load %arg13[%c0_19, %c0_20] : memref<1x128xf32, #tpu.memory_space<vmem>>, vector<1x128xf32>
      %38 = vector.shape_cast %37 : vector<1x128xf32> to vector<1x1x1x128xf32>
      %39 = vector.broadcast %38 : vector<1x1x1x128xf32> to vector<2x16x16x128xf32>
      %40 = arith.addf %36, %39 : vector<2x16x16x128xf32>
      %cst = arith.constant 0.000000e+00 : f32
      %41 = vector.broadcast %cst : f32 to vector<2x16x16x128xf32>
      %42 = arith.maximumf %40, %41 : vector<2x16x16x128xf32>
      %c0_21 = arith.constant 0 : index
      %c0_22 = arith.constant 0 : index
      %43 = vector.load %arg14[%c0_21, %c0_22] : memref<2x128xf32, #tpu.memory_space<vmem>>, vector<2x128xf32>
      %44 = vector.shape_cast %42 : vector<2x16x16x128xf32> to vector<2x256x128xf32>
      %cst_23 = arith.constant dense<0.000000e+00> : vector<2x128xf32>
      %45 = vector.multi_reduction <add>, %44, %cst_23 [1] : vector<2x256x128xf32> to vector<2x128xf32>
      %46 = arith.addf %43, %45 : vector<2x128xf32>
      %c0_24 = arith.constant 0 : index
      %c0_25 = arith.constant 0 : index
      %47 = vector.load %arg14[%c0_24, %c0_25] : memref<2x128xf32, #tpu.memory_space<vmem>>, vector<2x128xf32>
      tpu.vector_store %arg14[%c0_24, %c0_25], %46 {strides = array<i32>} : memref<2x128xf32, #tpu.memory_space<vmem>>, vector<2x128xf32>,
    } else {
    }
    %c2_i32_12 = arith.constant 2 : i32
    %26 = arith.cmpi eq, %arg1, %c2_i32_12 : i32
    %c0_i32_13 = arith.constant 0 : i32
    %27 = arith.cmpi eq, %arg2, %c0_i32_13 : i32
    %28 = arith.andi %26, %27 : i1
    %29 = arith.extui %28 : i1 to i32
    %c0_i32_14 = arith.constant 0 : i32
    %30 = arith.cmpi ne, %29, %c0_i32_14 : i32
    scf.if %30 {
      %c0 = arith.constant 0 : index
      %c0_15 = arith.constant 0 : index
      %31 = vector.load %arg14[%c0, %c0_15] : memref<2x128xf32, #tpu.memory_space<vmem>>, vector<2x128xf32>
      %cst = arith.constant 3.906250e-03 : f32
      %32 = vector.broadcast %cst : f32 to vector<2x128xf32>
      %33 = arith.mulf %31, %32 : vector<2x128xf32>
      %c0_16 = arith.constant 0 : index
      %c0_17 = arith.constant 0 : index
      %c0_18 = arith.constant 0 : index
      %34 = vector.load %arg7[%c0_16, %c0_17, %c0_18] : memref<1x2x128xf32, #tpu.memory_space<vmem>>, vector<1x2x128xf32>
      %35 = vector.shape_cast %34 : vector<1x2x128xf32> to vector<2x128xf32>
      %36 = vector.shape_cast %33 : vector<2x128xf32> to vector<1x2x128xf32>
      tpu.vector_store %arg7[%c0_16, %c0_17, %c0_18], %36 {strides = array<i32>} : memref<1x2x128xf32, #tpu.memory_space<vmem>>, vector<1x2x128xf32>,
    } else {
    }
    return
  }
  func.func @transform_0(%arg0: i32, %arg1: i32, %arg2: i32) -> (i32, i32, i32, i32) {
    %c0_i32 = arith.constant 0 : i32
    %c0_i32_0 = arith.constant 0 : i32
    %c0_i32_1 = arith.constant 0 : i32
    %c0_i32_2 = arith.constant 0 : i32
    return %arg0, %c0_i32, %c0_i32_0, %c0_i32_1 : i32, i32, i32, i32
  }
  func.func @transform_1(%arg0: i32, %arg1: i32, %arg2: i32) -> (i32, i32) {
    %c0_i32 = arith.constant 0 : i32
    %c0_i32_0 = arith.constant 0 : i32
    %c0_i32_1 = arith.constant 0 : i32
    return %c0_i32, %c0_i32_0 : i32, i32
  }
  func.func @transform_2(%arg0: i32, %arg1: i32, %arg2: i32) -> (i32, i32) {
    %c0_i32 = arith.constant 0 : i32
    %c0_i32_0 = arith.constant 0 : i32
    %c0_i32_1 = arith.constant 0 : i32
    return %c0_i32, %c0_i32_0 : i32, i32
  }
  func.func @transform_3(%arg0: i32, %arg1: i32, %arg2: i32) -> (i32, i32) {
    %c0_i32 = arith.constant 0 : i32
    %c0_i32_0 = arith.constant 0 : i32
    %c0_i32_1 = arith.constant 0 : i32
    return %c0_i32, %c0_i32_0 : i32, i32
  }
  func.func @transform_4(%arg0: i32, %arg1: i32, %arg2: i32) -> (i32, i32, i32) {
    %c0_i32 = arith.constant 0 : i32
    %c0_i32_0 = arith.constant 0 : i32
    %c0_i32_1 = arith.constant 0 : i32
    return %arg0, %c0_i32, %c0_i32_0 : i32, i32, i32
  }
}

</mosaic_0001>

<llo_original>
// kernel: simsiam_forward.3
$region0: #{simsiam_forward.3}
  #allocation0 [shape = 'u32[]', space=smem, size = 0x4, offset = 0x4, fixed_abs, tag = 'smem constant byte address 0x4 - core index']
  #allocation1 [shape = 'u32[72,128]{1,0:T(1,128)}', space=vmem, size = 0x9000, scoped, tag = 'internal scratch']
  %s0 = inlined_call_operand.vmem [shape: f32[4,128], index: 0, kind: input, shape index: {}]
  %s1 = inlined_call_operand.vmem [shape: bf16[128,128], index: 1, kind: input, shape index: {}]
  %s2 = inlined_call_operand.vmem [shape: f32[1,128], index: 2, kind: input, shape index: {}, may-alias: {2,5,8,11}]
  %s3 = inlined_call_operand.vmem [shape: f32[1,128], index: 3, kind: input, shape index: {}, may-alias: {3,6,9,12}]
  %s4 = inlined_call_operand.vmem [shape: bf16[128,128], index: 4, kind: input, shape index: {}]
  %s5 = inlined_call_operand.vmem [shape: f32[1,128], index: 5, kind: input, shape index: {}, may-alias: {2,5,8,11}]
  %s6 = inlined_call_operand.vmem [shape: f32[1,128], index: 6, kind: input, shape index: {}, may-alias: {3,6,9,12}]
  %s7 = inlined_call_operand.vmem [shape: bf16[128,128], index: 7, kind: input, shape index: {}]
  %s8 = inlined_call_operand.vmem [shape: f32[1,128], index: 8, kind: input, shape index: {}, may-alias: {2,5,8,11}]
  %s9 = inlined_call_operand.vmem [shape: f32[1,128], index: 9, kind: input, shape index: {}, may-alias: {3,6,9,12}]
  %s10 = inlined_call_operand.vmem [shape: bf16[128,128], index: 10, kind: input, shape index: {}]
  %s11 = inlined_call_operand.vmem [shape: f32[1,128], index: 11, kind: input, shape index: {}, may-alias: {2,5,8,11}]
  %s12 = inlined_call_operand.vmem [shape: f32[1,128], index: 12, kind: input, shape index: {}, may-alias: {3,6,9,12}]
  %s13 = inlined_call_operand.vmem [shape: bf16[128,128], index: 13, kind: input, shape index: {}]
  %s14 = inlined_call_operand.vmem [shape: f32[1,128], index: 14, kind: input, shape index: {}]
  %s15 = inlined_call_operand.vmem [shape: f32[4,128], index: 15, kind: output, shape index: {0}]
  %s16 = inlined_call_operand.vmem [shape: f32[4,128], index: 16, kind: output, shape index: {1}]
  %17 = xla_tuple %s15, %s16
  %s18 = sld [smem:[#allocation0]]
  $region78: #{simsiam_forward.3} parent=0
    _
  %s20 = ssub.s32 1, %s18
  %s21 = scalar_select 0, %s20, %s18
  // Predicated region
  $region2: #{simsiam_forward.3} parent=0 // pred_check
    _
  $region3: #{simsiam_forward.3} parent=0 // pred_check_branch
    %23 = sbr.rel (0) target = $region5
  $region4: #{simsiam_forward.3} parent=0 // pred_region
    _
  $region5: #{simsiam_forward.3} parent=0 // pred_fallthru
    _
  // Predicated region
  $region6: #{simsiam_forward.3} parent=0 // pred_check
    _
  $region7: #{simsiam_forward.3} parent=0 // pred_check_branch
    %25 = sbr.rel (0) target = $region9
  $region8: #{simsiam_forward.3} parent=0 // pred_region
    _
  $region9: #{simsiam_forward.3} parent=0 // pred_fallthru
    _
  // Predicated region
  $region10: #{simsiam_forward.3} parent=0 // pred_check
    _
  $region11: #{simsiam_forward.3} parent=0 // pred_check_branch
    %27 = sbr.rel (0) target = $region13
  $region12: #{simsiam_forward.3} parent=0 // pred_region
    _
  $region13: #{simsiam_forward.3} parent=0 // pred_fallthru
    _
  // Predicated region
  $region14: #{simsiam_forward.3} parent=0 // pred_check
    _
  $region15: #{simsiam_forward.3} parent=0 // pred_check_branch
    %29 = sbr.rel (0) target = $region17
  $region16: #{simsiam_forward.3} parent=0 // pred_region
    _
  $region17: #{simsiam_forward.3} parent=0 // pred_fallthru
    _
  // Predicated region
  $region18: #{simsiam_forward.3} parent=0 // pred_check
    _
  $region19: #{simsiam_forward.3} parent=0 // pred_check_branch
    %31 = sbr.rel (0) target = $region21
  $region20: #{simsiam_forward.3} parent=0 // pred_region
    _
  $region21: #{simsiam_forward.3} parent=0 // pred_fallthru
    _
  // Predicated region
  $region22: #{simsiam_forward.3} parent=0 // pred_check
    _
  $region23: #{simsiam_forward.3} parent=0 // pred_check_branch
    %33 = sbr.rel (0) target = $region25
  $region24: #{simsiam_forward.3} parent=0 // pred_region
    _
  $region25: #{simsiam_forward.3} parent=0 // pred_fallthru
    _
  // Predicated region
  $region26: #{simsiam_forward.3} parent=0 // pred_check
    _
  $region27: #{simsiam_forward.3} parent=0 // pred_check_branch
    %35 = sbr.rel (0) target = $region29
  $region28: #{simsiam_forward.3} parent=0 // pred_region
    _
  $region29: #{simsiam_forward.3} parent=0 // pred_fallthru
    _
  // Predicated region
  $region30: #{simsiam_forward.3} parent=0 // pred_check
    _
  $region31: #{simsiam_forward.3} parent=0 // pred_check_branch
    %37 = sbr.rel (0) target = $region33
  $region32: #{simsiam_forward.3} parent=0 // pred_region
    _
  $region33: #{simsiam_forward.3} parent=0 // pred_fallthru
    _
  // Predicated region
  $region34: #{simsiam_forward.3} parent=0 // pred_check
    _
  $region35: #{simsiam_forward.3} parent=0 // pred_check_branch
    %39 = sbr.rel (0) target = $region37
  $region36: #{simsiam_forward.3} parent=0 // pred_region
    _
  $region37: #{simsiam_forward.3} parent=0 // pred_fallthru
    _
  // Predicated region
  $region38: #{simsiam_forward.3} parent=0 // pred_check
    _
  $region39: #{simsiam_forward.3} parent=0 // pred_check_branch
    %41 = sbr.rel (0) target = $region41
  $region40: #{simsiam_forward.3} parent=0 // pred_region
    _
  $region41: #{simsiam_forward.3} parent=0 // pred_fallthru
    _
  // Predicated region
  $region42: #{simsiam_forward.3} parent=0 // pred_check
    _
  $region43: #{simsiam_forward.3} parent=0 // pred_check_branch
    %43 = sbr.rel (0) target = $region45
  $region44: #{simsiam_forward.3} parent=0 // pred_region
    _
  $region45: #{simsiam_forward.3} parent=0 // pred_fallthru
    _
  // Predicated region
  $region46: #{simsiam_forward.3} parent=0 // pred_check
    _
  $region47: #{simsiam_forward.3} parent=0 // pred_check_branch
    %45 = sbr.rel (0) target = $region49
  $region48: #{simsiam_forward.3} parent=0 // pred_region
    _
  $region49: #{simsiam_forward.3} parent=0 // pred_fallthru
    _
  // Predicated region
  $region50: #{simsiam_forward.3} parent=0 // pred_check
    _
  $region51: #{simsiam_forward.3} parent=0 // pred_check_branch
    %47 = sbr.rel (0) target = $region53
  $region52: #{simsiam_forward.3} parent=0 // pred_region
    _
  $region53: #{simsiam_forward.3} parent=0 // pred_fallthru
    _
  // Predicated region
  $region54: #{simsiam_forward.3} parent=0 // pred_check
    _
  $region55: #{simsiam_forward.3} parent=0 // pred_check_branch
    %49 = sbr.rel (0) target = $region57
  $region56: #{simsiam_forward.3} parent=0 // pred_region
    _
  $region57: #{simsiam_forward.3} parent=0 // pred_fallthru
    _
  // Predicated region
  $region58: #{simsiam_forward.3} parent=0 // pred_check
    _
  $region59: #{simsiam_forward.3} parent=0 // pred_check_branch
    %51 = sbr.rel (0) target = $region61
  $region60: #{simsiam_forward.3} parent=0 // pred_region
    _
  $region61: #{simsiam_forward.3} parent=0 // pred_fallthru
    _
  %v52 = vld [vmem:[%s0] sm:$0xf]
  %v53 = vpack.c.bf16 %v52, %v52
  %v54 = vld [vmem:[%s1] sm:$0xf]
  %v55 = vld [vmem:[%s1 + $0x4] sm:$0xf]
  %v56 = vld [vmem:[%s1 + $0x8] sm:$0xf]
  %v57 = vld [vmem:[%s1 + $0xc] sm:$0xf]
  %v58 = vld [vmem:[%s1 + $0x10] sm:$0xf]
  %v59 = vld [vmem:[%s1 + $0x14] sm:$0xf]
  %v60 = vld [vmem:[%s1 + $0x18] sm:$0xf]
  %v61 = vld [vmem:[%s1 + $0x1c] sm:$0xf]
  %v62 = vld [vmem:[%s1 + $0x20] sm:$0xf]
  %v63 = vld [vmem:[%s1 + $0x24] sm:$0xf]
  %v64 = vld [vmem:[%s1 + $0x28] sm:$0xf]
  %v65 = vld [vmem:[%s1 + $0x2c] sm:$0xf]
  %v66 = vld [vmem:[%s1 + $0x30] sm:$0xf]
  %v67 = vld [vmem:[%s1 + $0x34] sm:$0xf]
  %v68 = vld [vmem:[%s1 + $0x38] sm:$0xf]
  %v69 = vld [vmem:[%s1 + $0x3c] sm:$0xf]
  %v86 = vunpack.c.l.b16 %v54
  %v87 = vunpack.c.l.b16 %v55
  %v88 = vunpack.c.l.b16 %v56
  %v89 = vunpack.c.l.b16 %v57
  %v90 = vunpack.c.l.b16 %v58
  %v91 = vunpack.c.l.b16 %v59
  %v92 = vunpack.c.l.b16 %v60
  %v93 = vunpack.c.l.b16 %v61
  %v94 = vunpack.c.l.b16 %v62
  %v95 = vunpack.c.l.b16 %v63
  %v96 = vunpack.c.l.b16 %v64
  %v97 = vunpack.c.l.b16 %v65
  %v98 = vunpack.c.l.b16 %v66
  %v99 = vunpack.c.l.b16 %v67
  %v100 = vunpack.c.l.b16 %v68
  %v101 = vunpack.c.l.b16 %v69
  %v102 = vpack.c.b16 %v87, %v86
  %v103 = vpack.c.b16 %v89, %v88
  %v104 = vpack.c.b16 %v91, %v90
  %v105 = vpack.c.b16 %v93, %v92
  %v106 = vpack.c.b16 %v95, %v94
  %v107 = vpack.c.b16 %v97, %v96
  %v108 = vpack.c.b16 %v99, %v98
  %v109 = vpack.c.b16 %v101, %v100
  %118 = vmatpush.bf16.msra.mxu0 %v109
  %119 = vmatpush.bf16.msra.mxu0 %v108
  %120 = vmatpush.bf16.msra.mxu0 %v107
  %121 = vmatpush.bf16.msra.mxu0 %v106
  %122 = vmatpush.bf16.msra.mxu0 %v105
  %123 = vmatpush.bf16.msra.mxu0 %v104
  %124 = vmatpush.bf16.msra.mxu0 %v103
  %125 = vmatpush.bf16.msra.mxu0 %v102
  %126 = vmatmul.bf16.gmra.mxu0 %v53
  %v127 = vpop.f32.mrf.mxu0
  %v128 = vadd.f32 0.0, %v127
  %v129 = vpop.f32.mrf.mxu0
  %130 = vdwg.mxu0
  %vm131 = vcmask 1041408
  %v132 = vsel %vm131, %v128, 0.0
  %v133 = vrot.slane %v132, 4
  %v134 = vadd.f32 %v132, %v133
  %v135 = vrot.slane %v134, 2
  %v136 = vadd.f32 %v134, %v135
  %v137 = vrot.slane %v136, 1
  %v138 = vadd.f32 %v136, %v137
  %v139 = vrcp.pop 2.0
  %v140 = vmul.f32 2.0, %v139
  %v141 = vsub.f32 1.0, %v140
  %v142 = vmul.f32 %v139, %v141
  %v143 = vadd.f32 %v139, %v142
  %vm144 = vweird.f32 %v139
  %v145 = vsel %vm144, %v139, %v143
  %v146 = vmul.f32 %v138, %v145
  %v147 = vsub.f32 %v128, %v146
  %v148 = vmul.f32 %v147, %v147
  %v149 = vsel %vm131, %v148, 0.0
  %v150 = vrot.slane %v149, 4
  %v151 = vadd.f32 %v149, %v150
  %v152 = vrot.slane %v151, 2
  %v153 = vadd.f32 %v151, %v152
  %v154 = vrot.slane %v153, 1
  %v155 = vadd.f32 %v153, %v154
  %v156 = vmul.f32 %v155, %v145
  %v157 = vadd.f32 %v156, 1e-05
  %v158 = vrsqrt.pop %v157
  %v159 = vmul.f32 %v158, %v157
  %v160 = vmul.f32 %v159, %v158
  %v161 = vmul.f32 0.5, %v160
  %v162 = vsub.f32 1.5, %v161
  %v163 = vmul.f32 %v158, %v162
  %vm164 = vweird.f32 %v157
  %vm165 = vweird.f32 %v158
  %vm166 = vmor %vm164, %vm165
  %v167 = vsel %vm166, %v158, %v163
  %v168 = vmul.f32 %v147, %v167
  %v169 = vld [vmem:[%s2] sm:$0x1]
  %v171 = vperm.slane %v169, 0
  %v173 = vmul.f32 %v168, %v171
  %v174 = vld [vmem:[%s3] sm:$0x1]
  %v176 = vperm.slane %v174, 0
  %v178 = vadd.f32 %v173, %v176
  %v180 = vrot.slane %v128, 2
  %v182 = vsel %vm131, %v180, 0.0
  %v183 = vrot.slane %v182, 4
  %v184 = vadd.f32 %v182, %v183
  %v185 = vrot.slane %v184, 2
  %v186 = vadd.f32 %v184, %v185
  %v187 = vrot.slane %v186, 1
  %v188 = vadd.f32 %v186, %v187
  %v189 = vmul.f32 %v188, %v145
  %v190 = vsub.f32 %v128, %v189
  %v191 = vmul.f32 %v190, %v190
  %v193 = vrot.slane %v191, 2
  %v195 = vsel %vm131, %v193, 0.0
  %v196 = vrot.slane %v195, 4
  %v197 = vadd.f32 %v195, %v196
  %v198 = vrot.slane %v197, 2
  %v199 = vadd.f32 %v197, %v198
  %v200 = vrot.slane %v199, 1
  %v201 = vadd.f32 %v199, %v200
  %v202 = vmul.f32 %v201, %v145
  %v203 = vadd.f32 %v202, 1e-05
  %v204 = vrsqrt.pop %v203
  %v205 = vmul.f32 %v204, %v203
  %v206 = vmul.f32 %v205, %v204
  %v207 = vmul.f32 0.5, %v206
  %v208 = vsub.f32 1.5, %v207
  %v209 = vmul.f32 %v204, %v208
  %vm210 = vweird.f32 %v203
  %vm211 = vweird.f32 %v204
  %vm212 = vmor %vm210, %vm211
  %v213 = vsel %vm212, %v204, %v209
  %v214 = vmul.f32 %v190, %v213
  %v215 = vmul.f32 %v214, %v171
  %v216 = vadd.f32 %v215, %v176
  %v217 = vsel %vm131, %v178, %v216
  %v218 = vmax.f32 %v217, 0.0
  %v219 = vpack.c.bf16 %v218, %v218
  %v220 = vld [vmem:[%s4] sm:$0xf]
  %v221 = vld [vmem:[%s4 + $0x4] sm:$0xf]
  %v222 = vld [vmem:[%s4 + $0x8] sm:$0xf]
  %v223 = vld [vmem:[%s4 + $0xc] sm:$0xf]
  %v224 = vld [vmem:[%s4 + $0x10] sm:$0xf]
  %v225 = vld [vmem:[%s4 + $0x14] sm:$0xf]
  %v226 = vld [vmem:[%s4 + $0x18] sm:$0xf]
  %v227 = vld [vmem:[%s4 + $0x1c] sm:$0xf]
  %v228 = vld [vmem:[%s4 + $0x20] sm:$0xf]
  %v229 = vld [vmem:[%s4 + $0x24] sm:$0xf]
  %v230 = vld [vmem:[%s4 + $0x28] sm:$0xf]
  %v231 = vld [vmem:[%s4 + $0x2c] sm:$0xf]
  %v232 = vld [vmem:[%s4 + $0x30] sm:$0xf]
  %v233 = vld [vmem:[%s4 + $0x34] sm:$0xf]
  %v234 = vld [vmem:[%s4 + $0x38] sm:$0xf]
  %v235 = vld [vmem:[%s4 + $0x3c] sm:$0xf]
  %v252 = vunpack.c.l.b16 %v220
  %v253 = vunpack.c.l.b16 %v221
  %v254 = vunpack.c.l.b16 %v222
  %v255 = vunpack.c.l.b16 %v223
  %v256 = vunpack.c.l.b16 %v224
  %v257 = vunpack.c.l.b16 %v225
  %v258 = vunpack.c.l.b16 %v226
  %v259 = vunpack.c.l.b16 %v227
  %v260 = vunpack.c.l.b16 %v228
  %v261 = vunpack.c.l.b16 %v229
  %v262 = vunpack.c.l.b16 %v230
  %v263 = vunpack.c.l.b16 %v231
  %v264 = vunpack.c.l.b16 %v232
  %v265 = vunpack.c.l.b16 %v233
  %v266 = vunpack.c.l.b16 %v234
  %v267 = vunpack.c.l.b16 %v235
  %v268 = vpack.c.b16 %v253, %v252
  %v269 = vpack.c.b16 %v255, %v254
  %v270 = vpack.c.b16 %v257, %v256
  %v271 = vpack.c.b16 %v259, %v258
  %v272 = vpack.c.b16 %v261, %v260
  %v273 = vpack.c.b16 %v263, %v262
  %v274 = vpack.c.b16 %v265, %v264
  %v275 = vpack.c.b16 %v267, %v266
  %284 = vmatpush.bf16.msra.mxu0 %v275
  %285 = vmatpush.bf16.msra.mxu0 %v274
  %286 = vmatpush.bf16.msra.mxu0 %v273
  %287 = vmatpush.bf16.msra.mxu0 %v272
  %288 = vmatpush.bf16.msra.mxu0 %v271
  %289 = vmatpush.bf16.msra.mxu0 %v270
  %290 = vmatpush.bf16.msra.mxu0 %v269
  %291 = vmatpush.bf16.msra.mxu0 %v268
  %292 = vmatmul.bf16.gmra.mxu0 %v219
  %v293 = vpop.f32.mrf.mxu0
  %v294 = vadd.f32 0.0, %v293
  %v295 = vpop.f32.mrf.mxu0
  %296 = vdwg.mxu0
  %v297 = vsel %vm131, %v294, 0.0
  %v298 = vrot.slane %v297, 4
  %v299 = vadd.f32 %v297, %v298
  %v300 = vrot.slane %v299, 2
  %v301 = vadd.f32 %v299, %v300
  %v302 = vrot.slane %v301, 1
  %v303 = vadd.f32 %v301, %v302
  %v304 = vmul.f32 %v303, %v145
  %v305 = vsub.f32 %v294, %v304
  %v306 = vmul.f32 %v305, %v305
  %v307 = vsel %vm131, %v306, 0.0
  %v308 = vrot.slane %v307, 4
  %v309 = vadd.f32 %v307, %v308
  %v310 = vrot.slane %v309, 2
  %v311 = vadd.f32 %v309, %v310
  %v312 = vrot.slane %v311, 1
  %v313 = vadd.f32 %v311, %v312
  %v314 = vmul.f32 %v313, %v145
  %v315 = vadd.f32 %v314, 1e-05
  %v316 = vrsqrt.pop %v315
  %v317 = vmul.f32 %v316, %v315
  %v318 = vmul.f32 %v317, %v316
  %v319 = vmul.f32 0.5, %v318
  %v320 = vsub.f32 1.5, %v319
  %v321 = vmul.f32 %v316, %v320
  %vm322 = vweird.f32 %v315
  %vm323 = vweird.f32 %v316
  %vm324 = vmor %vm322, %vm323
  %v325 = vsel %vm324, %v316, %v321
  %v326 = vmul.f32 %v305, %v325
  %v327 = vld [vmem:[%s5] sm:$0x1]
  %v329 = vperm.slane %v327, 0
  %v331 = vmul.f32 %v326, %v329
  %v332 = vld [vmem:[%s6] sm:$0x1]
  %v334 = vperm.slane %v332, 0
  %v336 = vadd.f32 %v331, %v334
  %v338 = vrot.slane %v294, 2
  %v340 = vsel %vm131, %v338, 0.0
  %v341 = vrot.slane %v340, 4
  %v342 = vadd.f32 %v340, %v341
  %v343 = vrot.slane %v342, 2
  %v344 = vadd.f32 %v342, %v343
  %v345 = vrot.slane %v344, 1
  %v346 = vadd.f32 %v344, %v345
  %v347 = vmul.f32 %v346, %v145
  %v348 = vsub.f32 %v294, %v347
  %v349 = vmul.f32 %v348, %v348
  %v351 = vrot.slane %v349, 2
  %v353 = vsel %vm131, %v351, 0.0
  %v354 = vrot.slane %v353, 4
  %v355 = vadd.f32 %v353, %v354
  %v356 = vrot.slane %v355, 2
  %v357 = vadd.f32 %v355, %v356
  %v358 = vrot.slane %v357, 1
  %v359 = vadd.f32 %v357, %v358
  %v360 = vmul.f32 %v359, %v145
  %v361 = vadd.f32 %v360, 1e-05
  %v362 = vrsqrt.pop %v361
  %v363 = vmul.f32 %v362, %v361
  %v364 = vmul.f32 %v363, %v362
  %v365 = vmul.f32 0.5, %v364
  %v366 = vsub.f32 1.5, %v365
  %v367 = vmul.f32 %v362, %v366
  %vm368 = vweird.f32 %v361
  %vm369 = vweird.f32 %v362
  %vm370 = vmor %vm368, %vm369
  %v371 = vsel %vm370, %v362, %v367
  %v372 = vmul.f32 %v348, %v371
  %v373 = vmul.f32 %v372, %v329
  %v374 = vadd.f32 %v373, %v334
  %v375 = vsel %vm131, %v336, %v374
  %v376 = vmax.f32 %v375, 0.0
  %v377 = vpack.c.bf16 %v376, %v376
  %v378 = vld [vmem:[%s7] sm:$0xf]
  %v379 = vld [vmem:[%s7 + $0x4] sm:$0xf]
  %v380 = vld [vmem:[%s7 + $0x8] sm:$0xf]
  %v381 = vld [vmem:[%s7 + $0xc] sm:$0xf]
  %v382 = vld [vmem:[%s7 + $0x10] sm:$0xf]
  %v383 = vld [vmem:[%s7 + $0x14] sm:$0xf]
  %v384 = vld [vmem:[%s7 + $0x18] sm:$0xf]
  %v385 = vld [vmem:[%s7 + $0x1c] sm:$0xf]
  %v386 = vld [vmem:[%s7 + $0x20] sm:$0xf]
  %v387 = vld [vmem:[%s7 + $0x24] sm:$0xf]
  %v388 = vld [vmem:[%s7 + $0x28] sm:$0xf]
  %v389 = vld [vmem:[%s7 + $0x2c] sm:$0xf]
  %v390 = vld [vmem:[%s7 + $0x30] sm:$0xf]
  %v391 = vld [vmem:[%s7 + $0x34] sm:$0xf]
  %v392 = vld [vmem:[%s7 + $0x38] sm:$0xf]
  %v393 = vld [vmem:[%s7 + $0x3c] sm:$0xf]
  %v410 = vunpack.c.l.b16 %v378
  %v411 = vunpack.c.l.b16 %v379
  %v412 = vunpack.c.l.b16 %v380
  %v413 = vunpack.c.l.b16 %v381
  %v414 = vunpack.c.l.b16 %v382
  %v415 = vunpack.c.l.b16 %v383
  %v416 = vunpack.c.l.b16 %v384
  %v417 = vunpack.c.l.b16 %v385
  %v418 = vunpack.c.l.b16 %v386
  %v419 = vunpack.c.l.b16 %v387
  %v420 = vunpack.c.l.b16 %v388
  %v421 = vunpack.c.l.b16 %v389
  %v422 = vunpack.c.l.b16 %v390
  %v423 = vunpack.c.l.b16 %v391
  %v424 = vunpack.c.l.b16 %v392
  %v425 = vunpack.c.l.b16 %v393
  %v426 = vpack.c.b16 %v411, %v410
  %v427 = vpack.c.b16 %v413, %v412
  %v428 = vpack.c.b16 %v415, %v414
  %v429 = vpack.c.b16 %v417, %v416
  %v430 = vpack.c.b16 %v419, %v418
  %v431 = vpack.c.b16 %v421, %v420
  %v432 = vpack.c.b16 %v423, %v422
  %v433 = vpack.c.b16 %v425, %v424
  %442 = vmatpush.bf16.msra.mxu0 %v433
  %443 = vmatpush.bf16.msra.mxu0 %v432
  %444 = vmatpush.bf16.msra.mxu0 %v431
  %445 = vmatpush.bf16.msra.mxu0 %v430
  %446 = vmatpush.bf16.msra.mxu0 %v429
  %447 = vmatpush.bf16.msra.mxu0 %v428
  %448 = vmatpush.bf16.msra.mxu0 %v427
  %449 = vmatpush.bf16.msra.mxu0 %v426
  %450 = vmatmul.bf16.gmra.mxu0 %v377
  %v451 = vpop.f32.mrf.mxu0
  %v452 = vadd.f32 0.0, %v451
  %v453 = vpop.f32.mrf.mxu0
  %454 = vdwg.mxu0
  %v455 = vsel %vm131, %v452, 0.0
  %v456 = vrot.slane %v455, 4
  %v457 = vadd.f32 %v455, %v456
  %v458 = vrot.slane %v457, 2
  %v459 = vadd.f32 %v457, %v458
  %v460 = vrot.slane %v459, 1
  %v461 = vadd.f32 %v459, %v460
  %v462 = vmul.f32 %v461, %v145
  %v463 = vsub.f32 %v452, %v462
  %v464 = vmul.f32 %v463, %v463
  %v465 = vsel %vm131, %v464, 0.0
  %v466 = vrot.slane %v465, 4
  %v467 = vadd.f32 %v465, %v466
  %v468 = vrot.slane %v467, 2
  %v469 = vadd.f32 %v467, %v468
  %v470 = vrot.slane %v469, 1
  %v471 = vadd.f32 %v469, %v470
  %v472 = vmul.f32 %v471, %v145
  %v473 = vadd.f32 %v472, 1e-05
  %v474 = vrsqrt.pop %v473
  %v475 = vmul.f32 %v474, %v473
  %v476 = vmul.f32 %v475, %v474
  %v477 = vmul.f32 0.5, %v476
  %v478 = vsub.f32 1.5, %v477
  %v479 = vmul.f32 %v474, %v478
  %vm480 = vweird.f32 %v473
  %vm481 = vweird.f32 %v474
  %vm482 = vmor %vm480, %vm481
  %v483 = vsel %vm482, %v474, %v479
  %v484 = vmul.f32 %v463, %v483
  %v485 = vld [vmem:[%s8] sm:$0x1]
  %v487 = vperm.slane %v485, 0
  %v489 = vmul.f32 %v484, %v487
  %v490 = vld [vmem:[%s9] sm:$0x1]
  %v492 = vperm.slane %v490, 0
  %v494 = vadd.f32 %v489, %v492
  %v496 = vrot.slane %v452, 2
  %v498 = vsel %vm131, %v496, 0.0
  %v499 = vrot.slane %v498, 4
  %v500 = vadd.f32 %v498, %v499
  %v501 = vrot.slane %v500, 2
  %v502 = vadd.f32 %v500, %v501
  %v503 = vrot.slane %v502, 1
  %v504 = vadd.f32 %v502, %v503
  %v505 = vmul.f32 %v504, %v145
  %v506 = vsub.f32 %v452, %v505
  %v507 = vmul.f32 %v506, %v506
  %v509 = vrot.slane %v507, 2
  %v511 = vsel %vm131, %v509, 0.0
  %v512 = vrot.slane %v511, 4
  %v513 = vadd.f32 %v511, %v512
  %v514 = vrot.slane %v513, 2
  %v515 = vadd.f32 %v513, %v514
  %v516 = vrot.slane %v515, 1
  %v517 = vadd.f32 %v515, %v516
  %v518 = vmul.f32 %v517, %v145
  %v519 = vadd.f32 %v518, 1e-05
  %v520 = vrsqrt.pop %v519
  %v521 = vmul.f32 %v520, %v519
  %v522 = vmul.f32 %v521, %v520
  %v523 = vmul.f32 0.5, %v522
  %v524 = vsub.f32 1.5, %v523
  %v525 = vmul.f32 %v520, %v524
  %vm526 = vweird.f32 %v519
  %vm527 = vweird.f32 %v520
  %vm528 = vmor %vm526, %vm527
  %v529 = vsel %vm528, %v520, %v525
  %v530 = vmul.f32 %v506, %v529
  %v531 = vmul.f32 %v530, %v487
  %v532 = vadd.f32 %v531, %v492
  %v533 = vsel %vm131, %v494, %v532
  %v534 = vpack.c.bf16 %v533, %v533
  %v535 = vld [vmem:[%s10] sm:$0xf]
  %v536 = vld [vmem:[%s10 + $0x4] sm:$0xf]
  %v537 = vld [vmem:[%s10 + $0x8] sm:$0xf]
  %v538 = vld [vmem:[%s10 + $0xc] sm:$0xf]
  %v539 = vld [vmem:[%s10 + $0x10] sm:$0xf]
  %v540 = vld [vmem:[%s10 + $0x14] sm:$0xf]
  %v541 = vld [vmem:[%s10 + $0x18] sm:$0xf]
  %v542 = vld [vmem:[%s10 + $0x1c] sm:$0xf]
  %v543 = vld [vmem:[%s10 + $0x20] sm:$0xf]
  %v544 = vld [vmem:[%s10 + $0x24] sm:$0xf]
  %v545 = vld [vmem:[%s10 + $0x28] sm:$0xf]
  %v546 = vld [vmem:[%s10 + $0x2c] sm:$0xf]
  %v547 = vld [vmem:[%s10 + $0x30] sm:$0xf]
  %v548 = vld [vmem:[%s10 + $0x34] sm:$0xf]
  %v549 = vld [vmem:[%s10 + $0x38] sm:$0xf]
  %v550 = vld [vmem:[%s10 + $0x3c] sm:$0xf]
  %v567 = vunpack.c.l.b16 %v535
  %v568 = vunpack.c.l.b16 %v536
  %v569 = vunpack.c.l.b16 %v537
  %v570 = vunpack.c.l.b16 %v538
  %v571 = vunpack.c.l.b16 %v539
  %v572 = vunpack.c.l.b16 %v540
  %v573 = vunpack.c.l.b16 %v541
  %v574 = vunpack.c.l.b16 %v542
  %v575 = vunpack.c.l.b16 %v543
  %v576 = vunpack.c.l.b16 %v544
  %v577 = vunpack.c.l.b16 %v545
  %v578 = vunpack.c.l.b16 %v546
  %v579 = vunpack.c.l.b16 %v547
  %v580 = vunpack.c.l.b16 %v548
  %v581 = vunpack.c.l.b16 %v549
  %v582 = vunpack.c.l.b16 %v550
  %v583 = vpack.c.b16 %v568, %v567
  %v584 = vpack.c.b16 %v570, %v569
  %v585 = vpack.c.b16 %v572, %v571
  %v586 = vpack.c.b16 %v574, %v573
  %v587 = vpack.c.b16 %v576, %v575
  %v588 = vpack.c.b16 %v578, %v577
  %v589 = vpack.c.b16 %v580, %v579
  %v590 = vpack.c.b16 %v582, %v581
  %599 = vmatpush.bf16.msra.mxu0 %v590
  %600 = vmatpush.bf16.msra.mxu0 %v589
  %601 = vmatpush.bf16.msra.mxu0 %v588
  %602 = vmatpush.bf16.msra.mxu0 %v587
  %603 = vmatpush.bf16.msra.mxu0 %v586
  %604 = vmatpush.bf16.msra.mxu0 %v585
  %605 = vmatpush.bf16.msra.mxu0 %v584
  %606 = vmatpush.bf16.msra.mxu0 %v583
  %607 = vmatmul.bf16.gmra.mxu0 %v534
  %v608 = vpop.f32.mrf.mxu0
  %v609 = vadd.f32 0.0, %v608
  %v610 = vpop.f32.mrf.mxu0
  %611 = vdwg.mxu0
  %v612 = vsel %vm131, %v609, 0.0
  %v613 = vrot.slane %v612, 4
  %v614 = vadd.f32 %v612, %v613
  %v615 = vrot.slane %v614, 2
  %v616 = vadd.f32 %v614, %v615
  %v617 = vrot.slane %v616, 1
  %v618 = vadd.f32 %v616, %v617
  %v619 = vmul.f32 %v618, %v145
  %v620 = vsub.f32 %v609, %v619
  %v621 = vmul.f32 %v620, %v620
  %v622 = vsel %vm131, %v621, 0.0
  %v623 = vrot.slane %v622, 4
  %v624 = vadd.f32 %v622, %v623
  %v625 = vrot.slane %v624, 2
  %v626 = vadd.f32 %v624, %v625
  %v627 = vrot.slane %v626, 1
  %v628 = vadd.f32 %v626, %v627
  %v629 = vmul.f32 %v628, %v145
  %v630 = vadd.f32 %v629, 1e-05
  %v631 = vrsqrt.pop %v630
  %v632 = vmul.f32 %v631, %v630
  %v633 = vmul.f32 %v632, %v631
  %v634 = vmul.f32 0.5, %v633
  %v635 = vsub.f32 1.5, %v634
  %v636 = vmul.f32 %v631, %v635
  %vm637 = vweird.f32 %v630
  %vm638 = vweird.f32 %v631
  %vm639 = vmor %vm637, %vm638
  %v640 = vsel %vm639, %v631, %v636
  %v641 = vmul.f32 %v620, %v640
  %v642 = vld [vmem:[%s11] sm:$0x1]
  %v644 = vperm.slane %v642, 0
  %v646 = vmul.f32 %v641, %v644
  %v647 = vld [vmem:[%s12] sm:$0x1]
  %v649 = vperm.slane %v647, 0
  %v651 = vadd.f32 %v646, %v649
  %v653 = vrot.slane %v609, 2
  %v655 = vsel %vm131, %v653, 0.0
  %v656 = vrot.slane %v655, 4
  %v657 = vadd.f32 %v655, %v656
  %v658 = vrot.slane %v657, 2
  %v659 = vadd.f32 %v657, %v658
  %v660 = vrot.slane %v659, 1
  %v661 = vadd.f32 %v659, %v660
  %v662 = vmul.f32 %v661, %v145
  %v663 = vsub.f32 %v609, %v662
  %v664 = vmul.f32 %v663, %v663
  %v666 = vrot.slane %v664, 2
  %v668 = vsel %vm131, %v666, 0.0
  %v669 = vrot.slane %v668, 4
  %v670 = vadd.f32 %v668, %v669
  %v671 = vrot.slane %v670, 2
  %v672 = vadd.f32 %v670, %v671
  %v673 = vrot.slane %v672, 1
  %v674 = vadd.f32 %v672, %v673
  %v675 = vmul.f32 %v674, %v145
  %v676 = vadd.f32 %v675, 1e-05
  %v677 = vrsqrt.pop %v676
  %v678 = vmul.f32 %v677, %v676
  %v679 = vmul.f32 %v678, %v677
  %v680 = vmul.f32 0.5, %v679
  %v681 = vsub.f32 1.5, %v680
  %v682 = vmul.f32 %v677, %v681
  %vm683 = vweird.f32 %v676
  %vm684 = vweird.f32 %v677
  %vm685 = vmor %vm683, %vm684
  %v686 = vsel %vm685, %v677, %v682
  %v687 = vmul.f32 %v663, %v686
  %v688 = vmul.f32 %v687, %v644
  %v689 = vadd.f32 %v688, %v649
  %v690 = vsel %vm131, %v651, %v689
  %v691 = vmax.f32 %v690, 0.0
  %v692 = vpack.c.bf16 %v691, %v691
  %v693 = vld [vmem:[%s13] sm:$0xf]
  %v694 = vld [vmem:[%s13 + $0x4] sm:$0xf]
  %v695 = vld [vmem:[%s13 + $0x8] sm:$0xf]
  %v696 = vld [vmem:[%s13 + $0xc] sm:$0xf]
  %v697 = vld [vmem:[%s13 + $0x10] sm:$0xf]
  %v698 = vld [vmem:[%s13 + $0x14] sm:$0xf]
  %v699 = vld [vmem:[%s13 + $0x18] sm:$0xf]
  %v700 = vld [vmem:[%s13 + $0x1c] sm:$0xf]
  %v701 = vld [vmem:[%s13 + $0x20] sm:$0xf]
  %v702 = vld [vmem:[%s13 + $0x24] sm:$0xf]
  %v703 = vld [vmem:[%s13 + $0x28] sm:$0xf]
  %v704 = vld [vmem:[%s13 + $0x2c] sm:$0xf]
  %v705 = vld [vmem:[%s13 + $0x30] sm:$0xf]
  %v706 = vld [vmem:[%s13 + $0x34] sm:$0xf]
  %v707 = vld [vmem:[%s13 + $0x38] sm:$0xf]
  %v708 = vld [vmem:[%s13 + $0x3c] sm:$0xf]
  %v709 = vld [vmem:[%s14] sm:$0x1]
  %v711 = vperm.slane %v709, 0
  %v729 = vunpack.c.l.b16 %v693
  %v730 = vunpack.c.l.b16 %v694
  %v731 = vunpack.c.l.b16 %v695
  %v732 = vunpack.c.l.b16 %v696
  %v733 = vunpack.c.l.b16 %v697
  %v734 = vunpack.c.l.b16 %v698
  %v735 = vunpack.c.l.b16 %v699
  %v736 = vunpack.c.l.b16 %v700
  %v737 = vunpack.c.l.b16 %v701
  %v738 = vunpack.c.l.b16 %v702
  %v739 = vunpack.c.l.b16 %v703
  %v740 = vunpack.c.l.b16 %v704
  %v741 = vunpack.c.l.b16 %v705
  %v742 = vunpack.c.l.b16 %v706
  %v743 = vunpack.c.l.b16 %v707
  %v744 = vunpack.c.l.b16 %v708
  %v745 = vpack.c.b16 %v730, %v729
  %v746 = vpack.c.b16 %v732, %v731
  %v747 = vpack.c.b16 %v734, %v733
  %v748 = vpack.c.b16 %v736, %v735
  %v749 = vpack.c.b16 %v738, %v737
  %v750 = vpack.c.b16 %v740, %v739
  %v751 = vpack.c.b16 %v742, %v741
  %v752 = vpack.c.b16 %v744, %v743
  %761 = vmatpush.bf16.msra.mxu0 %v752
  %762 = vmatpush.bf16.msra.mxu0 %v751
  %763 = vmatpush.bf16.msra.mxu0 %v750
  %764 = vmatpush.bf16.msra.mxu0 %v749
  %765 = vmatpush.bf16.msra.mxu0 %v748
  %766 = vmatpush.bf16.msra.mxu0 %v747
  %767 = vmatpush.bf16.msra.mxu0 %v746
  %768 = vmatpush.bf16.msra.mxu0 %v745
  %769 = vmatmul.bf16.gmra.mxu0 %v692
  %v770 = vpop.f32.mrf.mxu0
  %v771 = vadd.f32 %v711, %v770
  %v772 = vpop.f32.mrf.mxu0
  %773 = vdwg.mxu0
  %774 = vst [vmem:[%s15] sm:$0xf] %v533
  %775 = vst [vmem:[%s16] sm:$0xf] %v771
  // Predicated region
  $region62: #{simsiam_forward.3} parent=0 // pred_check
    _
  $region63: #{simsiam_forward.3} parent=0 // pred_check_branch
    %777 = sbr.rel (0) target = $region65
  $region64: #{simsiam_forward.3} parent=0 // pred_region
    _
  $region65: #{simsiam_forward.3} parent=0 // pred_fallthru
    _
  // Predicated region
  $region66: #{simsiam_forward.3} parent=0 // pred_check
    _
  $region67: #{simsiam_forward.3} parent=0 // pred_check_branch
    %779 = sbr.rel (0) target = $region69
  $region68: #{simsiam_forward.3} parent=0 // pred_region
    _
  $region69: #{simsiam_forward.3} parent=0 // pred_fallthru
    _
  // Predicated region
  $region70: #{simsiam_forward.3} parent=0 // pred_check
    _
  $region71: #{simsiam_forward.3} parent=0 // pred_check_branch
    %781 = sbr.rel (0) target = $region73
  $region72: #{simsiam_forward.3} parent=0 // pred_region
    _
  $region73: #{simsiam_forward.3} parent=0 // pred_fallthru
    _
  // Predicated region
  $region74: #{simsiam_forward.3} parent=0 // pred_check
    _
  $region75: #{simsiam_forward.3} parent=0 // pred_check_branch
    %783 = sbr.rel (0) target = $region77
  $region76: #{simsiam_forward.3} parent=0 // pred_region
    _
  $region77: #{simsiam_forward.3} parent=0 // pred_fallthru
    _

// kernel: simsiam_forward.2
$region0: #{simsiam_forward.2}
  #allocation0 [shape = 'u32[]', space=smem, size = 0x4, offset = 0x4, fixed_abs, tag = 'smem constant byte address 0x4 - core index']
  #allocation1 [shape = 'u32[72,128]{1,0:T(1,128)}', space=vmem, size = 0x9000, scoped, tag = 'internal scratch']
  #allocation2 [shape = 'f32[2,18,18,4]{3,2,1,0:T(8,128)}', space=vmem, size = 0x6c000, scoped, tag = 'scratch operand']
  #allocation3 [shape = 'f32[2,16,16,128]{3,2,1,0:T(8,128)}', space=vmem, size = 0x40000, scoped, tag = 'scratch operand']
  #allocation4 [shape = 'f32[1,128]{1,0:T(1,128)}', space=vmem, size = 0x200, scoped, tag = 'scratch operand']
  #allocation5 [shape = 'f32[1,128]{1,0:T(1,128)}', space=vmem, size = 0x200, scoped, tag = 'scratch operand']
  #allocation6 [shape = 'f32[1,128]{1,0:T(1,128)}', space=vmem, size = 0x200, scoped, tag = 'scratch operand']
  #allocation7 [shape = 'f32[1,128]{1,0:T(1,128)}', space=vmem, size = 0x200, scoped, tag = 'scratch operand']
  #allocation8 [shape = 'f32[2,128]{1,0:T(2,128)}', space=vmem, size = 0x400, scoped, tag = 'scratch operand']
  %s0 = inlined_call_operand.vmem [shape: bf16[2,2,16,64], index: 0, kind: input, shape index: {}]
  %s1 = inlined_call_operand.vmem [shape: bf16[36,128], index: 1, kind: input, shape index: {}]
  %s2 = inlined_call_operand.vmem [shape: f32[1,128], index: 2, kind: input, shape index: {}]
  %s3 = inlined_call_operand.vmem [shape: f32[1,128], index: 3, kind: input, shape index: {}]
  %s4 = inlined_call_operand.vmem [shape: f32[2,2,128], index: 4, kind: output, shape index: {}]
  %s5 = sld [smem:[#allocation0]]
  $region77: #{simsiam_forward.2} parent=0
    _
  %s7 = ssub.s32 1, %s5
  %s8 = scalar_select 0, %s7, %s5
  loop: start=0, step=1, limit=8
  $region2: #{simsiam_forward.2} parent=0 // loop_pre_header
    _
  $region3: #{simsiam_forward.2} parent=0 // loop_header
    %s10 = sphi 0, %s14
    %p11 = scmp.ge.s32.totalorder %s10, 8
    %s17 = sphi 0, %s36
    %s18 = sphi 0, %s32
    %s19 = sphi 0, %s28
    %s20 = sphi 0, %s17
    %s21 = sphi 0, %s18
    %s22 = sphi 0, %s19
    %s23 = sphi 0, %s20
    %s24 = sphi 0, %s21
    %s25 = sphi 0, %s22
    %s39 = sphi 0, %s41
    %s42 = sphi 0, %s39
    %s43 = sphi 0, %s42
    %s59 = sphi 0, %s43
    %s63 = sphi 0, %s63
    %s65 = sphi 0, %s63
    %s66 = sphi 0, %s65
    %s80 = sphi 0, %s66
    %s84 = sphi 0, %s84
    %s86 = sphi 0, %s84
    %s87 = sphi 0, %s86
    %s101 = sphi 0, %s87
    %s105 = sphi 0, %s105
    %s107 = sphi 0, %s105
    %s108 = sphi 0, %s107
    %s122 = sphi 0, %s108
    %s128 = sphi 0, %s130
    %s131 = sphi 0, %s128
    %s132 = sphi 0, %s131
    %s148 = sphi 0, %s132
  $region4: #{simsiam_forward.2} parent=0 // loop_header_branch
    %13 = sbr.rel (%p11) target = $region8
  $region5: #{simsiam_forward.2} parent=0 // loop_body
    %s15 = ssub.s32 %s10, 1
    %s16 = ssub.s32 %s10, 2
    %s26 = sadd.s32 1, %s19
    %p27 = scmp.ge.s32.totalorder %s26, 1
    %s28 = scalar_select %p27, 0, %s26
    %s29 = sadd.s32 1, %s18
    %s30 = scalar_select %p27, %s29, %s18
    %p31 = scmp.ge.s32.totalorder %s30, 3
    %s32 = scalar_select %p31, 0, %s30
    %s33 = sadd.s32 1, %s17
    %s34 = scalar_select %p31, %s33, %s17
    %p35 = scmp.ge.s32.totalorder %s34, 2
    %s36 = scalar_select %p35, 0, %s34
    %s37 = ssub.s32 %s17, %s36
    %p38 = scmp.eq.s32.totalorder %s37, 0
    %s40 = sadd.s32 %s39, 1
    %s41 = scalar_select %p38, %s39, %s40
    %p44 = pneg %p38
    %p45 = scmp.eq.s32.totalorder %s10, 5
    %p46 = por %p44, %p45
    %p47 = scmp.ne.s32.totalorder %s39, %s42
    %p48 = scmp.eq.s32.totalorder %s10, 0
    %p49 = por %p47, %p48
    %p50 = scmp.ne.s32.totalorder %s39, %s42
    %p51 = scmp.eq.s32.totalorder %s15, 5
    %p52 = por %p50, %p51
    %p53 = scmp.ne.s32.totalorder %s42, %s43
    %p54 = scmp.eq.s32.totalorder %s15, 0
    %p55 = por %p53, %p54
    %p56 = scmp.ne.s32.totalorder %s42, %s43
    %p57 = scmp.eq.s32.totalorder %s16, 5
    %p58 = por %p56, %p57
    %p60 = scmp.ne.s32.totalorder %s43, %s59
    %p61 = scmp.eq.s32.totalorder %s16, 0
    %p62 = por %p60, %p61
    %s64 = sadd.s32 %s63, 1
    %p67 = scmp.eq.s32.totalorder %s10, 5
    %p68 = scmp.ne.s32.totalorder %s63, %s65
    %p69 = scmp.eq.s32.totalorder %s10, 0
    %p70 = por %p68, %p69
    %p71 = scmp.ne.s32.totalorder %s63, %s65
    %p72 = scmp.eq.s32.totalorder %s15, 5
    %p73 = por %p71, %p72
    %p74 = scmp.ne.s32.totalorder %s65, %s66
    %p75 = scmp.eq.s32.totalorder %s15, 0
    %p76 = por %p74, %p75
    %p77 = scmp.ne.s32.totalorder %s65, %s66
    %p78 = scmp.eq.s32.totalorder %s16, 5
    %p79 = por %p77, %p78
    %p81 = scmp.ne.s32.totalorder %s66, %s80
    %p82 = scmp.eq.s32.totalorder %s16, 0
    %p83 = por %p81, %p82
    %s85 = sadd.s32 %s84, 1
    %p88 = scmp.eq.s32.totalorder %s10, 5
    %p89 = scmp.ne.s32.totalorder %s84, %s86
    %p90 = scmp.eq.s32.totalorder %s10, 0
    %p91 = por %p89, %p90
    %p92 = scmp.ne.s32.totalorder %s84, %s86
    %p93 = scmp.eq.s32.totalorder %s15, 5
    %p94 = por %p92, %p93
    %p95 = scmp.ne.s32.totalorder %s86, %s87
    %p96 = scmp.eq.s32.totalorder %s15, 0
    %p97 = por %p95, %p96
    %p98 = scmp.ne.s32.totalorder %s86, %s87
    %p99 = scmp.eq.s32.totalorder %s16, 5
    %p100 = por %p98, %p99
    %p102 = scmp.ne.s32.totalorder %s87, %s101
    %p103 = scmp.eq.s32.totalorder %s16, 0
    %p104 = por %p102, %p103
    %s106 = sadd.s32 %s105, 1
    %p109 = scmp.eq.s32.totalorder %s10, 5
    %p110 = scmp.ne.s32.totalorder %s105, %s107
    %p111 = scmp.eq.s32.totalorder %s10, 0
    %p112 = por %p110, %p111
    %p113 = scmp.ne.s32.totalorder %s105, %s107
    %p114 = scmp.eq.s32.totalorder %s15, 5
    %p115 = por %p113, %p114
    %p116 = scmp.ne.s32.totalorder %s107, %s108
    %p117 = scmp.eq.s32.totalorder %s15, 0
    %p118 = por %p116, %p117
    %p119 = scmp.ne.s32.totalorder %s107, %s108
    %p120 = scmp.eq.s32.totalorder %s16, 5
    %p121 = por %p119, %p120
    %p123 = scmp.ne.s32.totalorder %s108, %s122
    %p124 = scmp.eq.s32.totalorder %s16, 0
    %p125 = por %p123, %p124
    %s126 = ssub.s32 %s17, %s36
    %p127 = scmp.eq.s32.totalorder %s126, 0
    %s129 = sadd.s32 %s128, 1
    %s130 = scalar_select %p127, %s128, %s129
    %p133 = pneg %p127
    %p134 = scmp.eq.s32.totalorder %s10, 5
    %p135 = por %p133, %p134
    %p136 = scmp.ne.s32.totalorder %s128, %s131
    %p137 = scmp.eq.s32.totalorder %s10, 0
    %p138 = por %p136, %p137
    %p139 = scmp.ne.s32.totalorder %s128, %s131
    %p140 = scmp.eq.s32.totalorder %s15, 5
    %p141 = por %p139, %p140
    %p142 = scmp.ne.s32.totalorder %s131, %s132
    %p143 = scmp.eq.s32.totalorder %s15, 0
    %p144 = por %p142, %p143
    %p145 = scmp.ne.s32.totalorder %s131, %s132
    %p146 = scmp.eq.s32.totalorder %s16, 5
    %p147 = por %p145, %p146
    %p149 = scmp.ne.s32.totalorder %s132, %s148
    %p150 = scmp.eq.s32.totalorder %s16, 0
    %p151 = por %p149, %p150
    %p152 = scmp.le.s32.totalorder 1, %s10
    %p153 = scmp.lt.s32.totalorder %s10, 7
    %p154 = pnand %p152, %p153
    %p155 = pneg %p154
    // Predicated region
    $region9: #{simsiam_forward.2} parent=5 // pred_check
      _
    $region10: #{simsiam_forward.2} parent=5 // pred_check_branch
      %157 = sbr.rel (%p154) target = $region12
    $region11: #{simsiam_forward.2} parent=5 // pred_region
      %s158 = ssub.s32 %s10, 1
      // Predicated region
      $region13: #{simsiam_forward.2} parent=11 // pred_check
        %p159 = pneg %p76
      $region14: #{simsiam_forward.2} parent=11 // pred_check_branch
        %161 = sbr.rel (%p159) target = $region16
      $region15: #{simsiam_forward.2} parent=11 // pred_region
        _
      $region16: #{simsiam_forward.2} parent=11 // pred_fallthru
        _
      // Predicated region
      $region17: #{simsiam_forward.2} parent=11 // pred_check
        %p162 = pneg %p97
      $region18: #{simsiam_forward.2} parent=11 // pred_check_branch
        %164 = sbr.rel (%p162) target = $region20
      $region19: #{simsiam_forward.2} parent=11 // pred_region
        _
      $region20: #{simsiam_forward.2} parent=11 // pred_fallthru
        _
      // Predicated region
      $region21: #{simsiam_forward.2} parent=11 // pred_check
        %p165 = pneg %p118
      $region22: #{simsiam_forward.2} parent=11 // pred_check_branch
        %167 = sbr.rel (%p165) target = $region24
      $region23: #{simsiam_forward.2} parent=11 // pred_region
        _
      $region24: #{simsiam_forward.2} parent=11 // pred_fallthru
        _
    $region12: #{simsiam_forward.2} parent=5 // pred_fallthru
      _
    %p168 = scmp.lt.s32.totalorder %s10, 6
    // Predicated region
    $region25: #{simsiam_forward.2} parent=5 // pred_check
      %p169 = pneg %p168
    $region26: #{simsiam_forward.2} parent=5 // pred_check_branch
      %171 = sbr.rel (%p169) target = $region28
    $region27: #{simsiam_forward.2} parent=5 // pred_region
      // Predicated region
      $region29: #{simsiam_forward.2} parent=27 // pred_check
        %p172 = pneg %p49
      $region30: #{simsiam_forward.2} parent=27 // pred_check_branch
        %174 = sbr.rel (%p172) target = $region32
      $region31: #{simsiam_forward.2} parent=27 // pred_region
        %p175 = scmp.lt.s32.totalorder %s17, 1
        %s176 = scalar_select %p175, %s17, 1
        %s177 = smul.addr %s176, 4
        %s178 = smul.addr %s177, 4
        %s179 = scalar_lea.vmem %s0, %s178
      $region32: #{simsiam_forward.2} parent=27 // pred_fallthru
        _
    $region28: #{simsiam_forward.2} parent=5 // pred_fallthru
      _
    %p180 = scmp.le.s32.totalorder 1, %s10
    %p181 = scmp.lt.s32.totalorder %s10, 7
    %p182 = pnand %p180, %p181
    %p183 = pneg %p182
    // Predicated region
    $region33: #{simsiam_forward.2} parent=5 // pred_check
      _
    $region34: #{simsiam_forward.2} parent=5 // pred_check_branch
      %185 = sbr.rel (%p182) target = $region36
    $region35: #{simsiam_forward.2} parent=5 // pred_region
      %s186 = ssub.s32 %s10, 1
      %p187 = scmp.lt.s32.totalorder %s20, 1
      %s188 = scalar_select %p187, %s20, 1
      %s189 = smul.addr %s188, 4
      %s190 = smul.addr %s189, 4
      %s191 = scalar_lea.vmem %s0, %s190
      %p192 = pneg %p55
      %p193 = pneg %p52
      %p194 = pneg %p76
      %p195 = pneg %p73
      %p196 = pneg %p97
      %p197 = pneg %p94
      %p198 = pneg %p118
      %p199 = pneg %p115
      %p200 = pneg %p144
      %p201 = pneg %p141
      %p202 = scmp.lt.s32.totalorder %s20, 1
      %s203 = scalar_select %p202, %s20, 1
      %s204 = smul.addr %s203, 2
      %s205 = scalar_lea.vmem %s4, %s204
      %p206 = scmp.lt.s32.totalorder %s20, 1
      %s207 = scalar_select %p206, %s20, 1
      %s208 = smul.addr %s207, 4
      %s209 = smul.addr %s208, 4
      %s210 = scalar_lea.vmem %s0, %s209
      %p211 = scmp.lt.s32.totalorder %s20, 1
      %s212 = scalar_select %p211, %s20, 1
      %s213 = smul.addr %s212, 2
      %s214 = scalar_lea.vmem %s4, %s213
      %s216 = smul.u32 %s22, 16
      %p217 = scmp.eq.s32.totalorder %s21, 0
      %p218 = scmp.eq.s32.totalorder %s22, 0
      %p219 = pnand %p217, %p218
      %p220 = pneg %p219
      // Predicated region
      $region37: #{simsiam_forward.2} parent=35 // pred_check
        _
      $region38: #{simsiam_forward.2} parent=35 // pred_check_branch
        %222 = sbr.rel (%p219) target = $region40
      $region39: #{simsiam_forward.2} parent=35 // pred_region
        %vm223 = vcmask 31744
        %224 = vst.msk [vmem:[#allocation2] sm:$0xff] %vm223, 0.0
        %225 = vst.msk [vmem:[#allocation2 + $0x8] sm:$0xff] %vm223, 0.0
        %vm226 = vcmask 25600
        %227 = vst.msk [vmem:[#allocation2 + $0x10] sm:$0x3] %vm226, 0.0
        %228 = vst.msk [vmem:[#allocation2 + $0x18] sm:$0xff] %vm223, 0.0
        %229 = vst.msk [vmem:[#allocation2 + $0x20] sm:$0xff] %vm223, 0.0
        %230 = vst.msk [vmem:[#allocation2 + $0x28] sm:$0x3] %vm226, 0.0
        %231 = vst.msk [vmem:[#allocation2 + $0x30] sm:$0xff] %vm223, 0.0
        %232 = vst.msk [vmem:[#allocation2 + $0x38] sm:$0xff] %vm223, 0.0
        %233 = vst.msk [vmem:[#allocation2 + $0x40] sm:$0x3] %vm226, 0.0
        %234 = vst.msk [vmem:[#allocation2 + $0x48] sm:$0xff] %vm223, 0.0
        %235 = vst.msk [vmem:[#allocation2 + $0x50] sm:$0xff] %vm223, 0.0
        %236 = vst.msk [vmem:[#allocation2 + $0x58] sm:$0x3] %vm226, 0.0
        %237 = vst.msk [vmem:[#allocation2 + $0x60] sm:$0xff] %vm223, 0.0
        %238 = vst.msk [vmem:[#allocation2 + $0x68] sm:$0xff] %vm223, 0.0
        %239 = vst.msk [vmem:[#allocation2 + $0x70] sm:$0x3] %vm226, 0.0
        %240 = vst.msk [vmem:[#allocation2 + $0x78] sm:$0xff] %vm223, 0.0
        %241 = vst.msk [vmem:[#allocation2 + $0x80] sm:$0xff] %vm223, 0.0
        %242 = vst.msk [vmem:[#allocation2 + $0x88] sm:$0x3] %vm226, 0.0
        %243 = vst.msk [vmem:[#allocation2 + $0x90] sm:$0xff] %vm223, 0.0
        %244 = vst.msk [vmem:[#allocation2 + $0x98] sm:$0xff] %vm223, 0.0
        %245 = vst.msk [vmem:[#allocation2 + $0xa0] sm:$0x3] %vm226, 0.0
        %246 = vst.msk [vmem:[#allocation2 + $0xa8] sm:$0xff] %vm223, 0.0
        %247 = vst.msk [vmem:[#allocation2 + $0xb0] sm:$0xff] %vm223, 0.0
        %248 = vst.msk [vmem:[#allocation2 + $0xb8] sm:$0x3] %vm226, 0.0
        %249 = vst.msk [vmem:[#allocation2 + $0xc0] sm:$0xff] %vm223, 0.0
        %250 = vst.msk [vmem:[#allocation2 + $0xc8] sm:$0xff] %vm223, 0.0
        %251 = vst.msk [vmem:[#allocation2 + $0xd0] sm:$0x3] %vm226, 0.0
        %252 = vst.msk [vmem:[#allocation2 + $0xd8] sm:$0xff] %vm223, 0.0
        %253 = vst.msk [vmem:[#allocation2 + $0xe0] sm:$0xff] %vm223, 0.0
        %254 = vst.msk [vmem:[#allocation2 + $0xe8] sm:$0x3] %vm226, 0.0
        %255 = vst.msk [vmem:[#allocation2 + $0xf0] sm:$0xff] %vm223, 0.0
        %256 = vst.msk [vmem:[#allocation2 + $0xf8] sm:$0xff] %vm223, 0.0
        %257 = vst.msk [vmem:[#allocation2 + $0x100] sm:$0x3] %vm226, 0.0
        %258 = vst.msk [vmem:[#allocation2 + $0x108] sm:$0xff] %vm223, 0.0
        %259 = vst.msk [vmem:[#allocation2 + $0x110] sm:$0xff] %vm223, 0.0
        %260 = vst.msk [vmem:[#allocation2 + $0x118] sm:$0x3] %vm226, 0.0
        %261 = vst.msk [vmem:[#allocation2 + $0x120] sm:$0xff] %vm223, 0.0
        %262 = vst.msk [vmem:[#allocation2 + $0x128] sm:$0xff] %vm223, 0.0
        %263 = vst.msk [vmem:[#allocation2 + $0x130] sm:$0x3] %vm226, 0.0
        %264 = vst.msk [vmem:[#allocation2 + $0x138] sm:$0xff] %vm223, 0.0
        %265 = vst.msk [vmem:[#allocation2 + $0x140] sm:$0xff] %vm223, 0.0
        %266 = vst.msk [vmem:[#allocation2 + $0x148] sm:$0x3] %vm226, 0.0
        %267 = vst.msk [vmem:[#allocation2 + $0x150] sm:$0xff] %vm223, 0.0
        %268 = vst.msk [vmem:[#allocation2 + $0x158] sm:$0xff] %vm223, 0.0
        %269 = vst.msk [vmem:[#allocation2 + $0x160] sm:$0x3] %vm226, 0.0
        %270 = vst.msk [vmem:[#allocation2 + $0x168] sm:$0xff] %vm223, 0.0
        %271 = vst.msk [vmem:[#allocation2 + $0x170] sm:$0xff] %vm223, 0.0
        %272 = vst.msk [vmem:[#allocation2 + $0x178] sm:$0x3] %vm226, 0.0
        %273 = vst.msk [vmem:[#allocation2 + $0x180] sm:$0xff] %vm223, 0.0
        %274 = vst.msk [vmem:[#allocation2 + $0x188] sm:$0xff] %vm223, 0.0
        %275 = vst.msk [vmem:[#allocation2 + $0x190] sm:$0x3] %vm226, 0.0
        %276 = vst.msk [vmem:[#allocation2 + $0x198] sm:$0xff] %vm223, 0.0
        %277 = vst.msk [vmem:[#allocation2 + $0x1a0] sm:$0xff] %vm223, 0.0
        %278 = vst.msk [vmem:[#allocation2 + $0x1a8] sm:$0x3] %vm226, 0.0
        %279 = vst.msk [vmem:[#allocation2 + $0x1b0] sm:$0xff] %vm223, 0.0
        %280 = vst.msk [vmem:[#allocation2 + $0x1b8] sm:$0xff] %vm223, 0.0
        %281 = vst.msk [vmem:[#allocation2 + $0x1c0] sm:$0x3] %vm226, 0.0
        %282 = vst.msk [vmem:[#allocation2 + $0x1c8] sm:$0xff] %vm223, 0.0
        %283 = vst.msk [vmem:[#allocation2 + $0x1d0] sm:$0xff] %vm223, 0.0
        %284 = vst.msk [vmem:[#allocation2 + $0x1d8] sm:$0x3] %vm226, 0.0
        %285 = vst.msk [vmem:[#allocation2 + $0x1e0] sm:$0xff] %vm223, 0.0
        %286 = vst.msk [vmem:[#allocation2 + $0x1e8] sm:$0xff] %vm223, 0.0
        %287 = vst.msk [vmem:[#allocation2 + $0x1f0] sm:$0x3] %vm226, 0.0
        %288 = vst.msk [vmem:[#allocation2 + $0x1f8] sm:$0xff] %vm223, 0.0
        %289 = vst.msk [vmem:[#allocation2 + $0x200] sm:$0xff] %vm223, 0.0
        %290 = vst.msk [vmem:[#allocation2 + $0x208] sm:$0x3] %vm226, 0.0
        %291 = vst.msk [vmem:[#allocation2 + $0x210] sm:$0xff] %vm223, 0.0
        %292 = vst.msk [vmem:[#allocation2 + $0x218] sm:$0xff] %vm223, 0.0
        %293 = vst.msk [vmem:[#allocation2 + $0x220] sm:$0x3] %vm226, 0.0
        %294 = vst.msk [vmem:[#allocation2 + $0x228] sm:$0xff] %vm223, 0.0
        %295 = vst.msk [vmem:[#allocation2 + $0x230] sm:$0xff] %vm223, 0.0
        %296 = vst.msk [vmem:[#allocation2 + $0x238] sm:$0x3] %vm226, 0.0
        %297 = vst.msk [vmem:[#allocation2 + $0x240] sm:$0xff] %vm223, 0.0
        %298 = vst.msk [vmem:[#allocation2 + $0x248] sm:$0xff] %vm223, 0.0
        %299 = vst.msk [vmem:[#allocation2 + $0x250] sm:$0x3] %vm226, 0.0
        %300 = vst.msk [vmem:[#allocation2 + $0x258] sm:$0xff] %vm223, 0.0
        %301 = vst.msk [vmem:[#allocation2 + $0x260] sm:$0xff] %vm223, 0.0
        %302 = vst.msk [vmem:[#allocation2 + $0x268] sm:$0x3] %vm226, 0.0
        %303 = vst.msk [vmem:[#allocation2 + $0x270] sm:$0xff] %vm223, 0.0
        %304 = vst.msk [vmem:[#allocation2 + $0x278] sm:$0xff] %vm223, 0.0
        %305 = vst.msk [vmem:[#allocation2 + $0x280] sm:$0x3] %vm226, 0.0
        %306 = vst.msk [vmem:[#allocation2 + $0x288] sm:$0xff] %vm223, 0.0
        %307 = vst.msk [vmem:[#allocation2 + $0x290] sm:$0xff] %vm223, 0.0
        %308 = vst.msk [vmem:[#allocation2 + $0x298] sm:$0x3] %vm226, 0.0
        %309 = vst.msk [vmem:[#allocation2 + $0x2a0] sm:$0xff] %vm223, 0.0
        %310 = vst.msk [vmem:[#allocation2 + $0x2a8] sm:$0xff] %vm223, 0.0
        %311 = vst.msk [vmem:[#allocation2 + $0x2b0] sm:$0x3] %vm226, 0.0
        %312 = vst.msk [vmem:[#allocation2 + $0x2b8] sm:$0xff] %vm223, 0.0
        %313 = vst.msk [vmem:[#allocation2 + $0x2c0] sm:$0xff] %vm223, 0.0
        %314 = vst.msk [vmem:[#allocation2 + $0x2c8] sm:$0x3] %vm226, 0.0
        %315 = vst.msk [vmem:[#allocation2 + $0x2d0] sm:$0xff] %vm223, 0.0
        %316 = vst.msk [vmem:[#allocation2 + $0x2d8] sm:$0xff] %vm223, 0.0
        %317 = vst.msk [vmem:[#allocation2 + $0x2e0] sm:$0x3] %vm226, 0.0
        %318 = vst.msk [vmem:[#allocation2 + $0x2e8] sm:$0xff] %vm223, 0.0
        %319 = vst.msk [vmem:[#allocation2 + $0x2f0] sm:$0xff] %vm223, 0.0
        %320 = vst.msk [vmem:[#allocation2 + $0x2f8] sm:$0x3] %vm226, 0.0
        %321 = vst.msk [vmem:[#allocation2 + $0x300] sm:$0xff] %vm223, 0.0
        %322 = vst.msk [vmem:[#allocation2 + $0x308] sm:$0xff] %vm223, 0.0
        %323 = vst.msk [vmem:[#allocation2 + $0x310] sm:$0x3] %vm226, 0.0
        %324 = vst.msk [vmem:[#allocation2 + $0x318] sm:$0xff] %vm223, 0.0
        %325 = vst.msk [vmem:[#allocation2 + $0x320] sm:$0xff] %vm223, 0.0
        %326 = vst.msk [vmem:[#allocation2 + $0x328] sm:$0x3] %vm226, 0.0
        %327 = vst.msk [vmem:[#allocation2 + $0x330] sm:$0xff] %vm223, 0.0
        %328 = vst.msk [vmem:[#allocation2 + $0x338] sm:$0xff] %vm223, 0.0
        %329 = vst.msk [vmem:[#allocation2 + $0x340] sm:$0x3] %vm226, 0.0
        %330 = vst.msk [vmem:[#allocation2 + $0x348] sm:$0xff] %vm223, 0.0
        %331 = vst.msk [vmem:[#allocation2 + $0x350] sm:$0xff] %vm223, 0.0
        %332 = vst.msk [vmem:[#allocation2 + $0x358] sm:$0x3] %vm226, 0.0
        %v333 = vld [vmem:[%s210] sm:$0xf]
        %v334 = vld [vmem:[%s210 + $0x4] sm:$0xf]
        %v335 = vld [vmem:[%s210 + $0x8] sm:$0xf]
        %v336 = vld [vmem:[%s210 + $0xc] sm:$0xf]
        %v337 = vunpack.c.l.bf16 %v333
        %v338 = vunpack.c.l.bf16 %v334
        %v339 = vunpack.c.l.bf16 %v335
        %v340 = vunpack.c.l.bf16 %v336
        %s341 = scalar_lea.vmem [#allocation2], 24
        %342 = vst.msk [vmem:[%s341 + $0x1] sm:$0xff] %vm223, %v337
        %343 = vst.msk [vmem:[%s341 + $0x9] sm:$0xff] %vm223, %v338
        %344 = vst.msk [vmem:[%s341 + $0x1b1] sm:$0xff] %vm223, %v339
        %345 = vst.msk [vmem:[%s341 + $0x1b9] sm:$0xff] %vm223, %v340
        %350 = vrot.lane.b32.xlu0 %v337, 124
        %v351 = vpop.permute.xlu0 %350
        %352 = vrot.lane.b32.xlu0 %v338, 124
        %v353 = vpop.permute.xlu0 %352
        %354 = vrot.lane.b32.xlu0 %v339, 124
        %v355 = vpop.permute.xlu0 %354
        %356 = vrot.lane.b32.xlu0 %v340, 124
        %v357 = vpop.permute.xlu0 %356
        %s362 = scalar_lea.vmem [#allocation2], 48
        %363 = vst.msk [vmem:[%s362 + $0x1] sm:$0xff] %vm223, %v351
        %364 = vst.msk [vmem:[%s362 + $0x9] sm:$0xff] %vm223, %v353
        %365 = vst.msk [vmem:[%s362 + $0x1b1] sm:$0xff] %vm223, %v355
        %366 = vst.msk [vmem:[%s362 + $0x1b9] sm:$0xff] %vm223, %v357
        %367 = vrot.lane.b32.xlu0 %v337, 120
        %v368 = vpop.permute.xlu0 %367
        %369 = vrot.lane.b32.xlu0 %v338, 120
        %v370 = vpop.permute.xlu0 %369
        %371 = vrot.lane.b32.xlu0 %v339, 120
        %v372 = vpop.permute.xlu0 %371
        %373 = vrot.lane.b32.xlu0 %v340, 120
        %v374 = vpop.permute.xlu0 %373
        %s379 = scalar_lea.vmem [#allocation2], 72
        %380 = vst.msk [vmem:[%s379 + $0x1] sm:$0xff] %vm223, %v368
        %381 = vst.msk [vmem:[%s379 + $0x9] sm:$0xff] %vm223, %v370
        %382 = vst.msk [vmem:[%s379 + $0x1b1] sm:$0xff] %vm223, %v372
        %383 = vst.msk [vmem:[%s379 + $0x1b9] sm:$0xff] %vm223, %v374
        %384 = vrot.lane.b32.xlu0 %v337, 116
        %v385 = vpop.permute.xlu0 %384
        %386 = vrot.lane.b32.xlu0 %v338, 116
        %v387 = vpop.permute.xlu0 %386
        %388 = vrot.lane.b32.xlu0 %v339, 116
        %v389 = vpop.permute.xlu0 %388
        %390 = vrot.lane.b32.xlu0 %v340, 116
        %v391 = vpop.permute.xlu0 %390
        %s396 = scalar_lea.vmem [#allocation2], 96
        %397 = vst.msk [vmem:[%s396 + $0x1] sm:$0xff] %vm223, %v385
        %398 = vst.msk [vmem:[%s396 + $0x9] sm:$0xff] %vm223, %v387
        %399 = vst.msk [vmem:[%s396 + $0x1b1] sm:$0xff] %vm223, %v389
        %400 = vst.msk [vmem:[%s396 + $0x1b9] sm:$0xff] %vm223, %v391
        %401 = vrot.lane.b32.xlu0 %v337, 112
        %v402 = vpop.permute.xlu0 %401
        %403 = vrot.lane.b32.xlu0 %v338, 112
        %v404 = vpop.permute.xlu0 %403
        %405 = vrot.lane.b32.xlu0 %v339, 112
        %v406 = vpop.permute.xlu0 %405
        %407 = vrot.lane.b32.xlu0 %v340, 112
        %v408 = vpop.permute.xlu0 %407
        %s413 = scalar_lea.vmem [#allocation2], 120
        %414 = vst.msk [vmem:[%s413 + $0x1] sm:$0xff] %vm223, %v402
        %415 = vst.msk [vmem:[%s413 + $0x9] sm:$0xff] %vm223, %v404
        %416 = vst.msk [vmem:[%s413 + $0x1b1] sm:$0xff] %vm223, %v406
        %417 = vst.msk [vmem:[%s413 + $0x1b9] sm:$0xff] %vm223, %v408
        %418 = vrot.lane.b32.xlu0 %v337, 108
        %v419 = vpop.permute.xlu0 %418
        %420 = vrot.lane.b32.xlu0 %v338, 108
        %v421 = vpop.permute.xlu0 %420
        %422 = vrot.lane.b32.xlu0 %v339, 108
        %v423 = vpop.permute.xlu0 %422
        %424 = vrot.lane.b32.xlu0 %v340, 108
        %v425 = vpop.permute.xlu0 %424
        %s430 = scalar_lea.vmem [#allocation2], 144
        %431 = vst.msk [vmem:[%s430 + $0x1] sm:$0xff] %vm223, %v419
        %432 = vst.msk [vmem:[%s430 + $0x9] sm:$0xff] %vm223, %v421
        %433 = vst.msk [vmem:[%s430 + $0x1b1] sm:$0xff] %vm223, %v423
        %434 = vst.msk [vmem:[%s430 + $0x1b9] sm:$0xff] %vm223, %v425
        %435 = vrot.lane.b32.xlu0 %v337, 104
        %v436 = vpop.permute.xlu0 %435
        %437 = vrot.lane.b32.xlu0 %v338, 104
        %v438 = vpop.permute.xlu0 %437
        %439 = vrot.lane.b32.xlu0 %v339, 104
        %v440 = vpop.permute.xlu0 %439
        %441 = vrot.lane.b32.xlu0 %v340, 104
        %v442 = vpop.permute.xlu0 %441
        %s447 = scalar_lea.vmem [#allocation2], 168
        %448 = vst.msk [vmem:[%s447 + $0x1] sm:$0xff] %vm223, %v436
        %449 = vst.msk [vmem:[%s447 + $0x9] sm:$0xff] %vm223, %v438
        %450 = vst.msk [vmem:[%s447 + $0x1b1] sm:$0xff] %vm223, %v440
        %451 = vst.msk [vmem:[%s447 + $0x1b9] sm:$0xff] %vm223, %v442
        %452 = vrot.lane.b32.xlu0 %v337, 100
        %v453 = vpop.permute.xlu0 %452
        %454 = vrot.lane.b32.xlu0 %v338, 100
        %v455 = vpop.permute.xlu0 %454
        %456 = vrot.lane.b32.xlu0 %v339, 100
        %v457 = vpop.permute.xlu0 %456
        %458 = vrot.lane.b32.xlu0 %v340, 100
        %v459 = vpop.permute.xlu0 %458
        %s464 = scalar_lea.vmem [#allocation2], 192
        %465 = vst.msk [vmem:[%s464 + $0x1] sm:$0xff] %vm223, %v453
        %466 = vst.msk [vmem:[%s464 + $0x9] sm:$0xff] %vm223, %v455
        %467 = vst.msk [vmem:[%s464 + $0x1b1] sm:$0xff] %vm223, %v457
        %468 = vst.msk [vmem:[%s464 + $0x1b9] sm:$0xff] %vm223, %v459
        %469 = vrot.lane.b32.xlu0 %v337, 96
        %v470 = vpop.permute.xlu0 %469
        %471 = vrot.lane.b32.xlu0 %v338, 96
        %v472 = vpop.permute.xlu0 %471
        %473 = vrot.lane.b32.xlu0 %v339, 96
        %v474 = vpop.permute.xlu0 %473
        %475 = vrot.lane.b32.xlu0 %v340, 96
        %v476 = vpop.permute.xlu0 %475
        %s481 = scalar_lea.vmem [#allocation2], 216
        %482 = vst.msk [vmem:[%s481 + $0x1] sm:$0xff] %vm223, %v470
        %483 = vst.msk [vmem:[%s481 + $0x9] sm:$0xff] %vm223, %v472
        %484 = vst.msk [vmem:[%s481 + $0x1b1] sm:$0xff] %vm223, %v474
        %485 = vst.msk [vmem:[%s481 + $0x1b9] sm:$0xff] %vm223, %v476
        %486 = vrot.lane.b32.xlu0 %v337, 92
        %v487 = vpop.permute.xlu0 %486
        %488 = vrot.lane.b32.xlu0 %v338, 92
        %v489 = vpop.permute.xlu0 %488
        %490 = vrot.lane.b32.xlu0 %v339, 92
        %v491 = vpop.permute.xlu0 %490
        %492 = vrot.lane.b32.xlu0 %v340, 92
        %v493 = vpop.permute.xlu0 %492
        %s498 = scalar_lea.vmem [#allocation2], 240
        %499 = vst.msk [vmem:[%s498 + $0x1] sm:$0xff] %vm223, %v487
        %500 = vst.msk [vmem:[%s498 + $0x9] sm:$0xff] %vm223, %v489
        %501 = vst.msk [vmem:[%s498 + $0x1b1] sm:$0xff] %vm223, %v491
        %502 = vst.msk [vmem:[%s498 + $0x1b9] sm:$0xff] %vm223, %v493
        %503 = vrot.lane.b32.xlu0 %v337, 88
        %v504 = vpop.permute.xlu0 %503
        %505 = vrot.lane.b32.xlu0 %v338, 88
        %v506 = vpop.permute.xlu0 %505
        %507 = vrot.lane.b32.xlu0 %v339, 88
        %v508 = vpop.permute.xlu0 %507
        %509 = vrot.lane.b32.xlu0 %v340, 88
        %v510 = vpop.permute.xlu0 %509
        %s515 = scalar_lea.vmem [#allocation2], 264
        %516 = vst.msk [vmem:[%s515 + $0x1] sm:$0xff] %vm223, %v504
        %517 = vst.msk [vmem:[%s515 + $0x9] sm:$0xff] %vm223, %v506
        %518 = vst.msk [vmem:[%s515 + $0x1b1] sm:$0xff] %vm223, %v508
        %519 = vst.msk [vmem:[%s515 + $0x1b9] sm:$0xff] %vm223, %v510
        %520 = vrot.lane.b32.xlu0 %v337, 84
        %v521 = vpop.permute.xlu0 %520
        %522 = vrot.lane.b32.xlu0 %v338, 84
        %v523 = vpop.permute.xlu0 %522
        %524 = vrot.lane.b32.xlu0 %v339, 84
        %v525 = vpop.permute.xlu0 %524
        %526 = vrot.lane.b32.xlu0 %v340, 84
        %v527 = vpop.permute.xlu0 %526
        %s532 = scalar_lea.vmem [#allocation2], 288
        %533 = vst.msk [vmem:[%s532 + $0x1] sm:$0xff] %vm223, %v521
        %534 = vst.msk [vmem:[%s532 + $0x9] sm:$0xff] %vm223, %v523
        %535 = vst.msk [vmem:[%s532 + $0x1b1] sm:$0xff] %vm223, %v525
        %536 = vst.msk [vmem:[%s532 + $0x1b9] sm:$0xff] %vm223, %v527
        %537 = vrot.lane.b32.xlu0 %v337, 80
        %v538 = vpop.permute.xlu0 %537
        %539 = vrot.lane.b32.xlu0 %v338, 80
        %v540 = vpop.permute.xlu0 %539
        %541 = vrot.lane.b32.xlu0 %v339, 80
        %v542 = vpop.permute.xlu0 %541
        %543 = vrot.lane.b32.xlu0 %v340, 80
        %v544 = vpop.permute.xlu0 %543
        %s549 = scalar_lea.vmem [#allocation2], 312
        %550 = vst.msk [vmem:[%s549 + $0x1] sm:$0xff] %vm223, %v538
        %551 = vst.msk [vmem:[%s549 + $0x9] sm:$0xff] %vm223, %v540
        %552 = vst.msk [vmem:[%s549 + $0x1b1] sm:$0xff] %vm223, %v542
        %553 = vst.msk [vmem:[%s549 + $0x1b9] sm:$0xff] %vm223, %v544
        %554 = vrot.lane.b32.xlu0 %v337, 76
        %v555 = vpop.permute.xlu0 %554
        %556 = vrot.lane.b32.xlu0 %v338, 76
        %v557 = vpop.permute.xlu0 %556
        %558 = vrot.lane.b32.xlu0 %v339, 76
        %v559 = vpop.permute.xlu0 %558
        %560 = vrot.lane.b32.xlu0 %v340, 76
        %v561 = vpop.permute.xlu0 %560
        %s566 = scalar_lea.vmem [#allocation2], 336
        %567 = vst.msk [vmem:[%s566 + $0x1] sm:$0xff] %vm223, %v555
        %568 = vst.msk [vmem:[%s566 + $0x9] sm:$0xff] %vm223, %v557
        %569 = vst.msk [vmem:[%s566 + $0x1b1] sm:$0xff] %vm223, %v559
        %570 = vst.msk [vmem:[%s566 + $0x1b9] sm:$0xff] %vm223, %v561
        %571 = vrot.lane.b32.xlu0 %v337, 72
        %v572 = vpop.permute.xlu0 %571
        %573 = vrot.lane.b32.xlu0 %v338, 72
        %v574 = vpop.permute.xlu0 %573
        %575 = vrot.lane.b32.xlu0 %v339, 72
        %v576 = vpop.permute.xlu0 %575
        %577 = vrot.lane.b32.xlu0 %v340, 72
        %v578 = vpop.permute.xlu0 %577
        %s583 = scalar_lea.vmem [#allocation2], 360
        %584 = vst.msk [vmem:[%s583 + $0x1] sm:$0xff] %vm223, %v572
        %585 = vst.msk [vmem:[%s583 + $0x9] sm:$0xff] %vm223, %v574
        %586 = vst.msk [vmem:[%s583 + $0x1b1] sm:$0xff] %vm223, %v576
        %587 = vst.msk [vmem:[%s583 + $0x1b9] sm:$0xff] %vm223, %v578
        %588 = vrot.lane.b32.xlu0 %v337, 68
        %v589 = vpop.permute.xlu0 %588
        %590 = vrot.lane.b32.xlu0 %v338, 68
        %v591 = vpop.permute.xlu0 %590
        %592 = vrot.lane.b32.xlu0 %v339, 68
        %v593 = vpop.permute.xlu0 %592
        %594 = vrot.lane.b32.xlu0 %v340, 68
        %v595 = vpop.permute.xlu0 %594
        %s600 = scalar_lea.vmem [#allocation2], 384
        %601 = vst.msk [vmem:[%s600 + $0x1] sm:$0xff] %vm223, %v589
        %602 = vst.msk [vmem:[%s600 + $0x9] sm:$0xff] %vm223, %v591
        %603 = vst.msk [vmem:[%s600 + $0x1b1] sm:$0xff] %vm223, %v593
        %604 = vst.msk [vmem:[%s600 + $0x1b9] sm:$0xff] %vm223, %v595
        %605 = vst [vmem:[#allocation4] sm:$0x1] 0.0
      $region40: #{simsiam_forward.2} parent=35 // pred_fallthru
        _
      %p606 = scmp.eq.s32.totalorder %s21, 1
      %p607 = pnand %p606, %p218
      %p608 = pneg %p607
      // Predicated region
      $region41: #{simsiam_forward.2} parent=35 // pred_check
        _
      $region42: #{simsiam_forward.2} parent=35 // pred_check_branch
        %610 = sbr.rel (%p607) target = $region44
      $region43: #{simsiam_forward.2} parent=35 // pred_region
        %v611 = vld [vmem:[#allocation4] sm:$0x1]
        %v612 = vmul.f32 %v611, 0.001953125
        %613 = vst [vmem:[#allocation4] sm:$0x1] %v612
        %614 = vst [vmem:[#allocation5] sm:$0x1] 0.0
      $region44: #{simsiam_forward.2} parent=35 // pred_fallthru
        _
      %p615 = scmp.eq.s32.totalorder %s21, 2
      %p616 = pnand %p615, %p218
      %p617 = pneg %p616
      // Predicated region
      $region45: #{simsiam_forward.2} parent=35 // pred_check
        _
      $region46: #{simsiam_forward.2} parent=35 // pred_check_branch
        %619 = sbr.rel (%p616) target = $region48
      $region47: #{simsiam_forward.2} parent=35 // pred_region
        %v620 = vld [vmem:[#allocation5] sm:$0x1]
        %v621 = vmul.f32 %v620, 0.001953125
        %v622 = vld [vmem:[%s2] sm:$0x1]
        %v623 = vadd.f32 %v621, 1e-05
        %v624 = vrsqrt.pop %v623
        %v625 = vmul.f32 %v624, %v623
        %v626 = vmul.f32 %v625, %v624
        %v627 = vmul.f32 0.5, %v626
        %v628 = vsub.f32 1.5, %v627
        %v629 = vmul.f32 %v624, %v628
        %vm630 = vweird.f32 %v623
        %vm631 = vweird.f32 %v624
        %vm632 = vmor %vm630, %vm631
        %v633 = vsel %vm632, %v624, %v629
        %v634 = vmul.f32 %v622, %v633
        %635 = vst [vmem:[#allocation6] sm:$0x1] %v634
        %v636 = vld [vmem:[%s3] sm:$0x1]
        %v637 = vld [vmem:[#allocation4] sm:$0x1]
        %v638 = vld [vmem:[#allocation6] sm:$0x1]
        %v639 = vmul.f32 %v637, %v638
        %v640 = vsub.f32 %v636, %v639
        %641 = vst [vmem:[#allocation7] sm:$0x1] %v640
        %642 = vst [vmem:[#allocation8] sm:$0x3] 0.0
      $region48: #{simsiam_forward.2} parent=35 // pred_fallthru
        _
      // Predicated region
      $region49: #{simsiam_forward.2} parent=35 // pred_check
        %p643 = pneg %p217
      $region50: #{simsiam_forward.2} parent=35 // pred_check_branch
        %645 = sbr.rel (%p643) target = $region52
      $region51: #{simsiam_forward.2} parent=35 // pred_region
        %s646 = scalar_lea.vmem [#allocation2], %s216
        %v647 = vld [vmem:[%s646] sm:$0xff]
        %v648 = vld [vmem:[%s646 + $0x8] sm:$0xff]
        %v649 = vld [vmem:[%s646 + $0x18] sm:$0xff]
        %v650 = vld [vmem:[%s646 + $0x20] sm:$0xff]
        %v651 = vld [vmem:[%s646 + $0x30] sm:$0xff]
        %v652 = vld [vmem:[%s646 + $0x38] sm:$0xff]
        %v653 = vld [vmem:[%s646 + $0x48] sm:$0xff]
        %v654 = vld [vmem:[%s646 + $0x50] sm:$0xff]
        %v655 = vld [vmem:[%s646 + $0x60] sm:$0xff]
        %v656 = vld [vmem:[%s646 + $0x68] sm:$0xff]
        %v657 = vld [vmem:[%s646 + $0x78] sm:$0xff]
        %v658 = vld [vmem:[%s646 + $0x80] sm:$0xff]
        %v659 = vld [vmem:[%s646 + $0x90] sm:$0xff]
        %v660 = vld [vmem:[%s646 + $0x98] sm:$0xff]
        %v661 = vld [vmem:[%s646 + $0xa8] sm:$0xff]
        %v662 = vld [vmem:[%s646 + $0xb0] sm:$0xff]
        %v663 = vld [vmem:[%s646 + $0xc0] sm:$0xff]
        %v664 = vld [vmem:[%s646 + $0xc8] sm:$0xff]
        %v665 = vld [vmem:[%s646 + $0xd8] sm:$0xff]
        %v666 = vld [vmem:[%s646 + $0xe0] sm:$0xff]
        %v667 = vld [vmem:[%s646 + $0xf0] sm:$0xff]
        %v668 = vld [vmem:[%s646 + $0xf8] sm:$0xff]
        %v669 = vld [vmem:[%s646 + $0x108] sm:$0xff]
        %v670 = vld [vmem:[%s646 + $0x110] sm:$0xff]
        %v671 = vld [vmem:[%s646 + $0x120] sm:$0xff]
        %v672 = vld [vmem:[%s646 + $0x128] sm:$0xff]
        %v673 = vld [vmem:[%s646 + $0x138] sm:$0xff]
        %v674 = vld [vmem:[%s646 + $0x140] sm:$0xff]
        %v675 = vld [vmem:[%s646 + $0x150] sm:$0xff]
        %v676 = vld [vmem:[%s646 + $0x158] sm:$0xff]
        %v677 = vld [vmem:[%s646 + $0x168] sm:$0xff]
        %v678 = vld [vmem:[%s646 + $0x170] sm:$0xff]
        %v679 = vld [vmem:[%s646 + $0x1b0] sm:$0xff]
        %v680 = vld [vmem:[%s646 + $0x1b8] sm:$0xff]
        %v681 = vld [vmem:[%s646 + $0x1c8] sm:$0xff]
        %v682 = vld [vmem:[%s646 + $0x1d0] sm:$0xff]
        %v683 = vld [vmem:[%s646 + $0x1e0] sm:$0xff]
        %v684 = vld [vmem:[%s646 + $0x1e8] sm:$0xff]
        %v685 = vld [vmem:[%s646 + $0x1f8] sm:$0xff]
        %v686 = vld [vmem:[%s646 + $0x200] sm:$0xff]
        %v687 = vld [vmem:[%s646 + $0x210] sm:$0xff]
        %v688 = vld [vmem:[%s646 + $0x218] sm:$0xff]
        %v689 = vld [vmem:[%s646 + $0x228] sm:$0xff]
        %v690 = vld [vmem:[%s646 + $0x230] sm:$0xff]
        %v691 = vld [vmem:[%s646 + $0x240] sm:$0xff]
        %v692 = vld [vmem:[%s646 + $0x248] sm:$0xff]
        %v693 = vld [vmem:[%s646 + $0x258] sm:$0xff]
        %v694 = vld [vmem:[%s646 + $0x260] sm:$0xff]
        %v695 = vld [vmem:[%s646 + $0x270] sm:$0xff]
        %v696 = vld [vmem:[%s646 + $0x278] sm:$0xff]
        %v697 = vld [vmem:[%s646 + $0x288] sm:$0xff]
        %v698 = vld [vmem:[%s646 + $0x290] sm:$0xff]
        %v699 = vld [vmem:[%s646 + $0x2a0] sm:$0xff]
        %v700 = vld [vmem:[%s646 + $0x2a8] sm:$0xff]
        %v701 = vld [vmem:[%s646 + $0x2b8] sm:$0xff]
        %v702 = vld [vmem:[%s646 + $0x2c0] sm:$0xff]
        %v703 = vld [vmem:[%s646 + $0x2d0] sm:$0xff]
        %v704 = vld [vmem:[%s646 + $0x2d8] sm:$0xff]
        %v705 = vld [vmem:[%s646 + $0x2e8] sm:$0xff]
        %v706 = vld [vmem:[%s646 + $0x2f0] sm:$0xff]
        %v707 = vld [vmem:[%s646 + $0x300] sm:$0xff]
        %v708 = vld [vmem:[%s646 + $0x308] sm:$0xff]
        %v709 = vld [vmem:[%s646 + $0x318] sm:$0xff]
        %v710 = vld [vmem:[%s646 + $0x320] sm:$0xff]
        %s711 = sadd.s32 %s216, 24
        %s712 = scalar_lea.vmem [#allocation2], %s711
        %v713 = vld [vmem:[%s712] sm:$0xff]
        %v714 = vld [vmem:[%s712 + $0x8] sm:$0xff]
        %v715 = vld [vmem:[%s712 + $0x18] sm:$0xff]
        %v716 = vld [vmem:[%s712 + $0x20] sm:$0xff]
        %v717 = vld [vmem:[%s712 + $0x30] sm:$0xff]
        %v718 = vld [vmem:[%s712 + $0x38] sm:$0xff]
        %v719 = vld [vmem:[%s712 + $0x48] sm:$0xff]
        %v720 = vld [vmem:[%s712 + $0x50] sm:$0xff]
        %v721 = vld [vmem:[%s712 + $0x60] sm:$0xff]
        %v722 = vld [vmem:[%s712 + $0x68] sm:$0xff]
        %v723 = vld [vmem:[%s712 + $0x78] sm:$0xff]
        %v724 = vld [vmem:[%s712 + $0x80] sm:$0xff]
        %v725 = vld [vmem:[%s712 + $0x90] sm:$0xff]
        %v726 = vld [vmem:[%s712 + $0x98] sm:$0xff]
        %v727 = vld [vmem:[%s712 + $0xa8] sm:$0xff]
        %v728 = vld [vmem:[%s712 + $0xb0] sm:$0xff]
        %v729 = vld [vmem:[%s712 + $0xc0] sm:$0xff]
        %v730 = vld [vmem:[%s712 + $0xc8] sm:$0xff]
        %v731 = vld [vmem:[%s712 + $0xd8] sm:$0xff]
        %v732 = vld [vmem:[%s712 + $0xe0] sm:$0xff]
        %v733 = vld [vmem:[%s712 + $0xf0] sm:$0xff]
        %v734 = vld [vmem:[%s712 + $0xf8] sm:$0xff]
        %v735 = vld [vmem:[%s712 + $0x108] sm:$0xff]
        %v736 = vld [vmem:[%s712 + $0x110] sm:$0xff]
        %v737 = vld [vmem:[%s712 + $0x120] sm:$0xff]
        %v738 = vld [vmem:[%s712 + $0x128] sm:$0xff]
        %v739 = vld [vmem:[%s712 + $0x138] sm:$0xff]
        %v740 = vld [vmem:[%s712 + $0x140] sm:$0xff]
        %v741 = vld [vmem:[%s712 + $0x150] sm:$0xff]
        %v742 = vld [vmem:[%s712 + $0x158] sm:$0xff]
        %v743 = vld [vmem:[%s712 + $0x168] sm:$0xff]
        %v744 = vld [vmem:[%s712 + $0x170] sm:$0xff]
        %v745 = vld [vmem:[%s712 + $0x1b0] sm:$0xff]
        %v746 = vld [vmem:[%s712 + $0x1b8] sm:$0xff]
        %v747 = vld [vmem:[%s712 + $0x1c8] sm:$0xff]
        %v748 = vld [vmem:[%s712 + $0x1d0] sm:$0xff]
        %v749 = vld [vmem:[%s712 + $0x1e0] sm:$0xff]
        %v750 = vld [vmem:[%s712 + $0x1e8] sm:$0xff]
        %v751 = vld [vmem:[%s712 + $0x1f8] sm:$0xff]
        %v752 = vld [vmem:[%s712 + $0x200] sm:$0xff]
        %v753 = vld [vmem:[%s712 + $0x210] sm:$0xff]
        %v754 = vld [vmem:[%s712 + $0x218] sm:$0xff]
        %v755 = vld [vmem:[%s712 + $0x228] sm:$0xff]
        %v756 = vld [vmem:[%s712 + $0x230] sm:$0xff]
        %v757 = vld [vmem:[%s712 + $0x240] sm:$0xff]
        %v758 = vld [vmem:[%s712 + $0x248] sm:$0xff]
        %v759 = vld [vmem:[%s712 + $0x258] sm:$0xff]
        %v760 = vld [vmem:[%s712 + $0x260] sm:$0xff]
        %v761 = vld [vmem:[%s712 + $0x270] sm:$0xff]
        %v762 = vld [vmem:[%s712 + $0x278] sm:$0xff]
        %v763 = vld [vmem:[%s712 + $0x288] sm:$0xff]
        %v764 = vld [vmem:[%s712 + $0x290] sm:$0xff]
        %v765 = vld [vmem:[%s712 + $0x2a0] sm:$0xff]
        %v766 = vld [vmem:[%s712 + $0x2a8] sm:$0xff]
        %v767 = vld [vmem:[%s712 + $0x2b8] sm:$0xff]
        %v768 = vld [vmem:[%s712 + $0x2c0] sm:$0xff]
        %v769 = vld [vmem:[%s712 + $0x2d0] sm:$0xff]
        %v770 = vld [vmem:[%s712 + $0x2d8] sm:$0xff]
        %v771 = vld [vmem:[%s712 + $0x2e8] sm:$0xff]
        %v772 = vld [vmem:[%s712 + $0x2f0] sm:$0xff]
        %v773 = vld [vmem:[%s712 + $0x300] sm:$0xff]
        %v774 = vld [vmem:[%s712 + $0x308] sm:$0xff]
        %v775 = vld [vmem:[%s712 + $0x318] sm:$0xff]
        %v776 = vld [vmem:[%s712 + $0x320] sm:$0xff]
        %s777 = sadd.s32 %s216, 48
        %s778 = scalar_lea.vmem [#allocation2], %s777
        %v779 = vld [vmem:[%s778] sm:$0xff]
        %v780 = vld [vmem:[%s778 + $0x8] sm:$0xff]
        %v781 = vld [vmem:[%s778 + $0x18] sm:$0xff]
        %v782 = vld [vmem:[%s778 + $0x20] sm:$0xff]
        %v783 = vld [vmem:[%s778 + $0x30] sm:$0xff]
        %v784 = vld [vmem:[%s778 + $0x38] sm:$0xff]
        %v785 = vld [vmem:[%s778 + $0x48] sm:$0xff]
        %v786 = vld [vmem:[%s778 + $0x50] sm:$0xff]
        %v787 = vld [vmem:[%s778 + $0x60] sm:$0xff]
        %v788 = vld [vmem:[%s778 + $0x68] sm:$0xff]
        %v789 = vld [vmem:[%s778 + $0x78] sm:$0xff]
        %v790 = vld [vmem:[%s778 + $0x80] sm:$0xff]
        %v791 = vld [vmem:[%s778 + $0x90] sm:$0xff]
        %v792 = vld [vmem:[%s778 + $0x98] sm:$0xff]
        %v793 = vld [vmem:[%s778 + $0xa8] sm:$0xff]
        %v794 = vld [vmem:[%s778 + $0xb0] sm:$0xff]
        %v795 = vld [vmem:[%s778 + $0xc0] sm:$0xff]
        %v796 = vld [vmem:[%s778 + $0xc8] sm:$0xff]
        %v797 = vld [vmem:[%s778 + $0xd8] sm:$0xff]
        %v798 = vld [vmem:[%s778 + $0xe0] sm:$0xff]
        %v799 = vld [vmem:[%s778 + $0xf0] sm:$0xff]
        %v800 = vld [vmem:[%s778 + $0xf8] sm:$0xff]
        %v801 = vld [vmem:[%s778 + $0x108] sm:$0xff]
        %v802 = vld [vmem:[%s778 + $0x110] sm:$0xff]
        %v803 = vld [vmem:[%s778 + $0x120] sm:$0xff]
        %v804 = vld [vmem:[%s778 + $0x128] sm:$0xff]
        %v805 = vld [vmem:[%s778 + $0x138] sm:$0xff]
        %v806 = vld [vmem:[%s778 + $0x140] sm:$0xff]
        %v807 = vld [vmem:[%s778 + $0x150] sm:$0xff]
        %v808 = vld [vmem:[%s778 + $0x158] sm:$0xff]
        %v809 = vld [vmem:[%s778 + $0x168] sm:$0xff]
        %v810 = vld [vmem:[%s778 + $0x170] sm:$0xff]
        %v811 = vld [vmem:[%s778 + $0x1b0] sm:$0xff]
        %v812 = vld [vmem:[%s778 + $0x1b8] sm:$0xff]
        %v813 = vld [vmem:[%s778 + $0x1c8] sm:$0xff]
        %v814 = vld [vmem:[%s778 + $0x1d0] sm:$0xff]
        %v815 = vld [vmem:[%s778 + $0x1e0] sm:$0xff]
        %v816 = vld [vmem:[%s778 + $0x1e8] sm:$0xff]
        %v817 = vld [vmem:[%s778 + $0x1f8] sm:$0xff]
        %v818 = vld [vmem:[%s778 + $0x200] sm:$0xff]
        %v819 = vld [vmem:[%s778 + $0x210] sm:$0xff]
        %v820 = vld [vmem:[%s778 + $0x218] sm:$0xff]
        %v821 = vld [vmem:[%s778 + $0x228] sm:$0xff]
        %v822 = vld [vmem:[%s778 + $0x230] sm:$0xff]
        %v823 = vld [vmem:[%s778 + $0x240] sm:$0xff]
        %v824 = vld [vmem:[%s778 + $0x248] sm:$0xff]
        %v825 = vld [vmem:[%s778 + $0x258] sm:$0xff]
        %v826 = vld [vmem:[%s778 + $0x260] sm:$0xff]
        %v827 = vld [vmem:[%s778 + $0x270] sm:$0xff]
        %v828 = vld [vmem:[%s778 + $0x278] sm:$0xff]
        %v829 = vld [vmem:[%s778 + $0x288] sm:$0xff]
        %v830 = vld [vmem:[%s778 + $0x290] sm:$0xff]
        %v831 = vld [vmem:[%s778 + $0x2a0] sm:$0xff]
        %v832 = vld [vmem:[%s778 + $0x2a8] sm:$0xff]
        %v833 = vld [vmem:[%s778 + $0x2b8] sm:$0xff]
        %v834 = vld [vmem:[%s778 + $0x2c0] sm:$0xff]
        %v835 = vld [vmem:[%s778 + $0x2d0] sm:$0xff]
        %v836 = vld [vmem:[%s778 + $0x2d8] sm:$0xff]
        %v837 = vld [vmem:[%s778 + $0x2e8] sm:$0xff]
        %v838 = vld [vmem:[%s778 + $0x2f0] sm:$0xff]
        %v839 = vld [vmem:[%s778 + $0x300] sm:$0xff]
        %v840 = vld [vmem:[%s778 + $0x308] sm:$0xff]
        %v841 = vld [vmem:[%s778 + $0x318] sm:$0xff]
        %v842 = vld [vmem:[%s778 + $0x320] sm:$0xff]
        %s843 = sadd.s32 %s216, 1
        %s844 = scalar_lea.vmem [#allocation2], %s843
        %v845 = vld [vmem:[%s844] sm:$0xff]
        %v846 = vld [vmem:[%s844 + $0x8] sm:$0xff]
        %v847 = vld [vmem:[%s844 + $0x18] sm:$0xff]
        %v848 = vld [vmem:[%s844 + $0x20] sm:$0xff]
        %v849 = vld [vmem:[%s844 + $0x30] sm:$0xff]
        %v850 = vld [vmem:[%s844 + $0x38] sm:$0xff]
        %v851 = vld [vmem:[%s844 + $0x48] sm:$0xff]
        %v852 = vld [vmem:[%s844 + $0x50] sm:$0xff]
        %v853 = vld [vmem:[%s844 + $0x60] sm:$0xff]
        %v854 = vld [vmem:[%s844 + $0x68] sm:$0xff]
        %v855 = vld [vmem:[%s844 + $0x78] sm:$0xff]
        %v856 = vld [vmem:[%s844 + $0x80] sm:$0xff]
        %v857 = vld [vmem:[%s844 + $0x90] sm:$0xff]
        %v858 = vld [vmem:[%s844 + $0x98] sm:$0xff]
        %v859 = vld [vmem:[%s844 + $0xa8] sm:$0xff]
        %v860 = vld [vmem:[%s844 + $0xb0] sm:$0xff]
        %v861 = vld [vmem:[%s844 + $0xc0] sm:$0xff]
        %v862 = vld [vmem:[%s844 + $0xc8] sm:$0xff]
        %v863 = vld [vmem:[%s844 + $0xd8] sm:$0xff]
        %v864 = vld [vmem:[%s844 + $0xe0] sm:$0xff]
        %v865 = vld [vmem:[%s844 + $0xf0] sm:$0xff]
        %v866 = vld [vmem:[%s844 + $0xf8] sm:$0xff]
        %v867 = vld [vmem:[%s844 + $0x108] sm:$0xff]
        %v868 = vld [vmem:[%s844 + $0x110] sm:$0xff]
        %v869 = vld [vmem:[%s844 + $0x120] sm:$0xff]
        %v870 = vld [vmem:[%s844 + $0x128] sm:$0xff]
        %v871 = vld [vmem:[%s844 + $0x138] sm:$0xff]
        %v872 = vld [vmem:[%s844 + $0x140] sm:$0xff]
        %v873 = vld [vmem:[%s844 + $0x150] sm:$0xff]
        %v874 = vld [vmem:[%s844 + $0x158] sm:$0xff]
        %v875 = vld [vmem:[%s844 + $0x168] sm:$0xff]
        %v876 = vld [vmem:[%s844 + $0x170] sm:$0xff]
        %v877 = vld [vmem:[%s844 + $0x1b0] sm:$0xff]
        %v878 = vld [vmem:[%s844 + $0x1b8] sm:$0xff]
        %v879 = vld [vmem:[%s844 + $0x1c8] sm:$0xff]
        %v880 = vld [vmem:[%s844 + $0x1d0] sm:$0xff]
        %v881 = vld [vmem:[%s844 + $0x1e0] sm:$0xff]
        %v882 = vld [vmem:[%s844 + $0x1e8] sm:$0xff]
        %v883 = vld [vmem:[%s844 + $0x1f8] sm:$0xff]
        %v884 = vld [vmem:[%s844 + $0x200] sm:$0xff]
        %v885 = vld [vmem:[%s844 + $0x210] sm:$0xff]
        %v886 = vld [vmem:[%s844 + $0x218] sm:$0xff]
        %v887 = vld [vmem:[%s844 + $0x228] sm:$0xff]
        %v888 = vld [vmem:[%s844 + $0x230] sm:$0xff]
        %v889 = vld [vmem:[%s844 + $0x240] sm:$0xff]
        %v890 = vld [vmem:[%s844 + $0x248] sm:$0xff]
        %v891 = vld [vmem:[%s844 + $0x258] sm:$0xff]
        %v892 = vld [vmem:[%s844 + $0x260] sm:$0xff]
        %v893 = vld [vmem:[%s844 + $0x270] sm:$0xff]
        %v894 = vld [vmem:[%s844 + $0x278] sm:$0xff]
        %v895 = vld [vmem:[%s844 + $0x288] sm:$0xff]
        %v896 = vld [vmem:[%s844 + $0x290] sm:$0xff]
        %v897 = vld [vmem:[%s844 + $0x2a0] sm:$0xff]
        %v898 = vld [vmem:[%s844 + $0x2a8] sm:$0xff]
        %v899 = vld [vmem:[%s844 + $0x2b8] sm:$0xff]
        %v900 = vld [vmem:[%s844 + $0x2c0] sm:$0xff]
        %v901 = vld [vmem:[%s844 + $0x2d0] sm:$0xff]
        %v902 = vld [vmem:[%s844 + $0x2d8] sm:$0xff]
        %v903 = vld [vmem:[%s844 + $0x2e8] sm:$0xff]
        %v904 = vld [vmem:[%s844 + $0x2f0] sm:$0xff]
        %v905 = vld [vmem:[%s844 + $0x300] sm:$0xff]
        %v906 = vld [vmem:[%s844 + $0x308] sm:$0xff]
        %v907 = vld [vmem:[%s844 + $0x318] sm:$0xff]
        %v908 = vld [vmem:[%s844 + $0x320] sm:$0xff]
        %s909 = sadd.s32 %s843, 24
        %s910 = scalar_lea.vmem [#allocation2], %s909
        %v911 = vld [vmem:[%s910] sm:$0xff]
        %v912 = vld [vmem:[%s910 + $0x8] sm:$0xff]
        %v913 = vld [vmem:[%s910 + $0x18] sm:$0xff]
        %v914 = vld [vmem:[%s910 + $0x20] sm:$0xff]
        %v915 = vld [vmem:[%s910 + $0x30] sm:$0xff]
        %v916 = vld [vmem:[%s910 + $0x38] sm:$0xff]
        %v917 = vld [vmem:[%s910 + $0x48] sm:$0xff]
        %v918 = vld [vmem:[%s910 + $0x50] sm:$0xff]
        %v919 = vld [vmem:[%s910 + $0x60] sm:$0xff]
        %v920 = vld [vmem:[%s910 + $0x68] sm:$0xff]
        %v921 = vld [vmem:[%s910 + $0x78] sm:$0xff]
        %v922 = vld [vmem:[%s910 + $0x80] sm:$0xff]
        %v923 = vld [vmem:[%s910 + $0x90] sm:$0xff]
        %v924 = vld [vmem:[%s910 + $0x98] sm:$0xff]
        %v925 = vld [vmem:[%s910 + $0xa8] sm:$0xff]
        %v926 = vld [vmem:[%s910 + $0xb0] sm:$0xff]
        %v927 = vld [vmem:[%s910 + $0xc0] sm:$0xff]
        %v928 = vld [vmem:[%s910 + $0xc8] sm:$0xff]
        %v929 = vld [vmem:[%s910 + $0xd8] sm:$0xff]
        %v930 = vld [vmem:[%s910 + $0xe0] sm:$0xff]
        %v931 = vld [vmem:[%s910 + $0xf0] sm:$0xff]
        %v932 = vld [vmem:[%s910 + $0xf8] sm:$0xff]
        %v933 = vld [vmem:[%s910 + $0x108] sm:$0xff]
        %v934 = vld [vmem:[%s910 + $0x110] sm:$0xff]
        %v935 = vld [vmem:[%s910 + $0x120] sm:$0xff]
        %v936 = vld [vmem:[%s910 + $0x128] sm:$0xff]
        %v937 = vld [vmem:[%s910 + $0x138] sm:$0xff]
        %v938 = vld [vmem:[%s910 + $0x140] sm:$0xff]
        %v939 = vld [vmem:[%s910 + $0x150] sm:$0xff]
        %v940 = vld [vmem:[%s910 + $0x158] sm:$0xff]
        %v941 = vld [vmem:[%s910 + $0x168] sm:$0xff]
        %v942 = vld [vmem:[%s910 + $0x170] sm:$0xff]
        %v943 = vld [vmem:[%s910 + $0x1b0] sm:$0xff]
        %v944 = vld [vmem:[%s910 + $0x1b8] sm:$0xff]
        %v945 = vld [vmem:[%s910 + $0x1c8] sm:$0xff]
        %v946 = vld [vmem:[%s910 + $0x1d0] sm:$0xff]
        %v947 = vld [vmem:[%s910 + $0x1e0] sm:$0xff]
        %v948 = vld [vmem:[%s910 + $0x1e8] sm:$0xff]
        %v949 = vld [vmem:[%s910 + $0x1f8] sm:$0xff]
        %v950 = vld [vmem:[%s910 + $0x200] sm:$0xff]
        %v951 = vld [vmem:[%s910 + $0x210] sm:$0xff]
        %v952 = vld [vmem:[%s910 + $0x218] sm:$0xff]
        %v953 = vld [vmem:[%s910 + $0x228] sm:$0xff]
        %v954 = vld [vmem:[%s910 + $0x230] sm:$0xff]
        %v955 = vld [vmem:[%s910 + $0x240] sm:$0xff]
        %v956 = vld [vmem:[%s910 + $0x248] sm:$0xff]
        %v957 = vld [vmem:[%s910 + $0x258] sm:$0xff]
        %v958 = vld [vmem:[%s910 + $0x260] sm:$0xff]
        %v959 = vld [vmem:[%s910 + $0x270] sm:$0xff]
        %v960 = vld [vmem:[%s910 + $0x278] sm:$0xff]
        %v961 = vld [vmem:[%s910 + $0x288] sm:$0xff]
        %v962 = vld [vmem:[%s910 + $0x290] sm:$0xff]
        %v963 = vld [vmem:[%s910 + $0x2a0] sm:$0xff]
        %v964 = vld [vmem:[%s910 + $0x2a8] sm:$0xff]
        %v965 = vld [vmem:[%s910 + $0x2b8] sm:$0xff]
        %v966 = vld [vmem:[%s910 + $0x2c0] sm:$0xff]
        %v967 = vld [vmem:[%s910 + $0x2d0] sm:$0xff]
        %v968 = vld [vmem:[%s910 + $0x2d8] sm:$0xff]
        %v969 = vld [vmem:[%s910 + $0x2e8] sm:$0xff]
        %v970 = vld [vmem:[%s910 + $0x2f0] sm:$0xff]
        %v971 = vld [vmem:[%s910 + $0x300] sm:$0xff]
        %v972 = vld [vmem:[%s910 + $0x308] sm:$0xff]
        %v973 = vld [vmem:[%s910 + $0x318] sm:$0xff]
        %v974 = vld [vmem:[%s910 + $0x320] sm:$0xff]
        %s975 = sadd.s32 %s843, 48
        %s976 = scalar_lea.vmem [#allocation2], %s975
        %v977 = vld [vmem:[%s976] sm:$0xff]
        %v978 = vld [vmem:[%s976 + $0x8] sm:$0xff]
        %v979 = vld [vmem:[%s976 + $0x18] sm:$0xff]
        %v980 = vld [vmem:[%s976 + $0x20] sm:$0xff]
        %v981 = vld [vmem:[%s976 + $0x30] sm:$0xff]
        %v982 = vld [vmem:[%s976 + $0x38] sm:$0xff]
        %v983 = vld [vmem:[%s976 + $0x48] sm:$0xff]
        %v984 = vld [vmem:[%s976 + $0x50] sm:$0xff]
        %v985 = vld [vmem:[%s976 + $0x60] sm:$0xff]
        %v986 = vld [vmem:[%s976 + $0x68] sm:$0xff]
        %v987 = vld [vmem:[%s976 + $0x78] sm:$0xff]
        %v988 = vld [vmem:[%s976 + $0x80] sm:$0xff]
        %v989 = vld [vmem:[%s976 + $0x90] sm:$0xff]
        %v990 = vld [vmem:[%s976 + $0x98] sm:$0xff]
        %v991 = vld [vmem:[%s976 + $0xa8] sm:$0xff]
        %v992 = vld [vmem:[%s976 + $0xb0] sm:$0xff]
        %v993 = vld [vmem:[%s976 + $0xc0] sm:$0xff]
        %v994 = vld [vmem:[%s976 + $0xc8] sm:$0xff]
        %v995 = vld [vmem:[%s976 + $0xd8] sm:$0xff]
        %v996 = vld [vmem:[%s976 + $0xe0] sm:$0xff]
        %v997 = vld [vmem:[%s976 + $0xf0] sm:$0xff]
        %v998 = vld [vmem:[%s976 + $0xf8] sm:$0xff]
        %v999 = vld [vmem:[%s976 + $0x108] sm:$0xff]
        %v1000 = vld [vmem:[%s976 + $0x110] sm:$0xff]
        %v1001 = vld [vmem:[%s976 + $0x120] sm:$0xff]
        %v1002 = vld [vmem:[%s976 + $0x128] sm:$0xff]
        %v1003 = vld [vmem:[%s976 + $0x138] sm:$0xff]
        %v1004 = vld [vmem:[%s976 + $0x140] sm:$0xff]
        %v1005 = vld [vmem:[%s976 + $0x150] sm:$0xff]
        %v1006 = vld [vmem:[%s976 + $0x158] sm:$0xff]
        %v1007 = vld [vmem:[%s976 + $0x168] sm:$0xff]
        %v1008 = vld [vmem:[%s976 + $0x170] sm:$0xff]
        %v1009 = vld [vmem:[%s976 + $0x1b0] sm:$0xff]
        %v1010 = vld [vmem:[%s976 + $0x1b8] sm:$0xff]
        %v1011 = vld [vmem:[%s976 + $0x1c8] sm:$0xff]
        %v1012 = vld [vmem:[%s976 + $0x1d0] sm:$0xff]
        %v1013 = vld [vmem:[%s976 + $0x1e0] sm:$0xff]
        %v1014 = vld [vmem:[%s976 + $0x1e8] sm:$0xff]
        %v1015 = vld [vmem:[%s976 + $0x1f8] sm:$0xff]
        %v1016 = vld [vmem:[%s976 + $0x200] sm:$0xff]
        %v1017 = vld [vmem:[%s976 + $0x210] sm:$0xff]
        %v1018 = vld [vmem:[%s976 + $0x218] sm:$0xff]
        %v1019 = vld [vmem:[%s976 + $0x228] sm:$0xff]
        %v1020 = vld [vmem:[%s976 + $0x230] sm:$0xff]
        %v1021 = vld [vmem:[%s976 + $0x240] sm:$0xff]
        %v1022 = vld [vmem:[%s976 + $0x248] sm:$0xff]
        %v1023 = vld [vmem:[%s976 + $0x258] sm:$0xff]
        %v1024 = vld [vmem:[%s976 + $0x260] sm:$0xff]
        %v1025 = vld [vmem:[%s976 + $0x270] sm:$0xff]
        %v1026 = vld [vmem:[%s976 + $0x278] sm:$0xff]
        %v1027 = vld [vmem:[%s976 + $0x288] sm:$0xff]
        %v1028 = vld [vmem:[%s976 + $0x290] sm:$0xff]
        %v1029 = vld [vmem:[%s976 + $0x2a0] sm:$0xff]
        %v1030 = vld [vmem:[%s976 + $0x2a8] sm:$0xff]
        %v1031 = vld [vmem:[%s976 + $0x2b8] sm:$0xff]
        %v1032 = vld [vmem:[%s976 + $0x2c0] sm:$0xff]
        %v1033 = vld [vmem:[%s976 + $0x2d0] sm:$0xff]
        %v1034 = vld [vmem:[%s976 + $0x2d8] sm:$0xff]
        %v1035 = vld [vmem:[%s976 + $0x2e8] sm:$0xff]
        %v1036 = vld [vmem:[%s976 + $0x2f0] sm:$0xff]
        %v1037 = vld [vmem:[%s976 + $0x300] sm:$0xff]
        %v1038 = vld [vmem:[%s976 + $0x308] sm:$0xff]
        %v1039 = vld [vmem:[%s976 + $0x318] sm:$0xff]
        %v1040 = vld [vmem:[%s976 + $0x320] sm:$0xff]
        %s1041 = sadd.s32 %s216, 2
        %s1042 = scalar_lea.vmem [#allocation2], %s1041
        %v1043 = vld [vmem:[%s1042] sm:$0xff]
        %v1044 = vld [vmem:[%s1042 + $0x8] sm:$0xff]
        %v1045 = vld [vmem:[%s1042 + $0x18] sm:$0xff]
        %v1046 = vld [vmem:[%s1042 + $0x20] sm:$0xff]
        %v1047 = vld [vmem:[%s1042 + $0x30] sm:$0xff]
        %v1048 = vld [vmem:[%s1042 + $0x38] sm:$0xff]
        %v1049 = vld [vmem:[%s1042 + $0x48] sm:$0xff]
        %v1050 = vld [vmem:[%s1042 + $0x50] sm:$0xff]
        %v1051 = vld [vmem:[%s1042 + $0x60] sm:$0xff]
        %v1052 = vld [vmem:[%s1042 + $0x68] sm:$0xff]
        %v1053 = vld [vmem:[%s1042 + $0x78] sm:$0xff]
        %v1054 = vld [vmem:[%s1042 + $0x80] sm:$0xff]
        %v1055 = vld [vmem:[%s1042 + $0x90] sm:$0xff]
        %v1056 = vld [vmem:[%s1042 + $0x98] sm:$0xff]
        %v1057 = vld [vmem:[%s1042 + $0xa8] sm:$0xff]
        %v1058 = vld [vmem:[%s1042 + $0xb0] sm:$0xff]
        %v1059 = vld [vmem:[%s1042 + $0xc0] sm:$0xff]
        %v1060 = vld [vmem:[%s1042 + $0xc8] sm:$0xff]
        %v1061 = vld [vmem:[%s1042 + $0xd8] sm:$0xff]
        %v1062 = vld [vmem:[%s1042 + $0xe0] sm:$0xff]
        %v1063 = vld [vmem:[%s1042 + $0xf0] sm:$0xff]
        %v1064 = vld [vmem:[%s1042 + $0xf8] sm:$0xff]
        %v1065 = vld [vmem:[%s1042 + $0x108] sm:$0xff]
        %v1066 = vld [vmem:[%s1042 + $0x110] sm:$0xff]
        %v1067 = vld [vmem:[%s1042 + $0x120] sm:$0xff]
        %v1068 = vld [vmem:[%s1042 + $0x128] sm:$0xff]
        %v1069 = vld [vmem:[%s1042 + $0x138] sm:$0xff]
        %v1070 = vld [vmem:[%s1042 + $0x140] sm:$0xff]
        %v1071 = vld [vmem:[%s1042 + $0x150] sm:$0xff]
        %v1072 = vld [vmem:[%s1042 + $0x158] sm:$0xff]
        %v1073 = vld [vmem:[%s1042 + $0x168] sm:$0xff]
        %v1074 = vld [vmem:[%s1042 + $0x170] sm:$0xff]
        %v1075 = vld [vmem:[%s1042 + $0x1b0] sm:$0xff]
        %v1076 = vld [vmem:[%s1042 + $0x1b8] sm:$0xff]
        %v1077 = vld [vmem:[%s1042 + $0x1c8] sm:$0xff]
        %v1078 = vld [vmem:[%s1042 + $0x1d0] sm:$0xff]
        %v1079 = vld [vmem:[%s1042 + $0x1e0] sm:$0xff]
        %v1080 = vld [vmem:[%s1042 + $0x1e8] sm:$0xff]
        %v1081 = vld [vmem:[%s1042 + $0x1f8] sm:$0xff]
        %v1082 = vld [vmem:[%s1042 + $0x200] sm:$0xff]
        %v1083 = vld [vmem:[%s1042 + $0x210] sm:$0xff]
        %v1084 = vld [vmem:[%s1042 + $0x218] sm:$0xff]
        %v1085 = vld [vmem:[%s1042 + $0x228] sm:$0xff]
        %v1086 = vld [vmem:[%s1042 + $0x230] sm:$0xff]
        %v1087 = vld [vmem:[%s1042 + $0x240] sm:$0xff]
        %v1088 = vld [vmem:[%s1042 + $0x248] sm:$0xff]
        %v1089 = vld [vmem:[%s1042 + $0x258] sm:$0xff]
        %v1090 = vld [vmem:[%s1042 + $0x260] sm:$0xff]
        %v1091 = vld [vmem:[%s1042 + $0x270] sm:$0xff]
        %v1092 = vld [vmem:[%s1042 + $0x278] sm:$0xff]
        %v1093 = vld [vmem:[%s1042 + $0x288] sm:$0xff]
        %v1094 = vld [vmem:[%s1042 + $0x290] sm:$0xff]
        %v1095 = vld [vmem:[%s1042 + $0x2a0] sm:$0xff]
        %v1096 = vld [vmem:[%s1042 + $0x2a8] sm:$0xff]
        %v1097 = vld [vmem:[%s1042 + $0x2b8] sm:$0xff]
        %v1098 = vld [vmem:[%s1042 + $0x2c0] sm:$0xff]
        %v1099 = vld [vmem:[%s1042 + $0x2d0] sm:$0xff]
        %v1100 = vld [vmem:[%s1042 + $0x2d8] sm:$0xff]
        %v1101 = vld [vmem:[%s1042 + $0x2e8] sm:$0xff]
        %v1102 = vld [vmem:[%s1042 + $0x2f0] sm:$0xff]
        %v1103 = vld [vmem:[%s1042 + $0x300] sm:$0xff]
        %v1104 = vld [vmem:[%s1042 + $0x308] sm:$0xff]
        %v1105 = vld [vmem:[%s1042 + $0x318] sm:$0xff]
        %v1106 = vld [vmem:[%s1042 + $0x320] sm:$0xff]
        %s1107 = sadd.s32 %s1041, 24
        %s1108 = scalar_lea.vmem [#allocation2], %s1107
        %v1109 = vld [vmem:[%s1108] sm:$0xff]
        %v1110 = vld [vmem:[%s1108 + $0x8] sm:$0xff]
        %v1111 = vld [vmem:[%s1108 + $0x18] sm:$0xff]
        %v1112 = vld [vmem:[%s1108 + $0x20] sm:$0xff]
        %v1113 = vld [vmem:[%s1108 + $0x30] sm:$0xff]
        %v1114 = vld [vmem:[%s1108 + $0x38] sm:$0xff]
        %v1115 = vld [vmem:[%s1108 + $0x48] sm:$0xff]
        %v1116 = vld [vmem:[%s1108 + $0x50] sm:$0xff]
        %v1117 = vld [vmem:[%s1108 + $0x60] sm:$0xff]
        %v1118 = vld [vmem:[%s1108 + $0x68] sm:$0xff]
        %v1119 = vld [vmem:[%s1108 + $0x78] sm:$0xff]
        %v1120 = vld [vmem:[%s1108 + $0x80] sm:$0xff]
        %v1121 = vld [vmem:[%s1108 + $0x90] sm:$0xff]
        %v1122 = vld [vmem:[%s1108 + $0x98] sm:$0xff]
        %v1123 = vld [vmem:[%s1108 + $0xa8] sm:$0xff]
        %v1124 = vld [vmem:[%s1108 + $0xb0] sm:$0xff]
        %v1125 = vld [vmem:[%s1108 + $0xc0] sm:$0xff]
        %v1126 = vld [vmem:[%s1108 + $0xc8] sm:$0xff]
        %v1127 = vld [vmem:[%s1108 + $0xd8] sm:$0xff]
        %v1128 = vld [vmem:[%s1108 + $0xe0] sm:$0xff]
        %v1129 = vld [vmem:[%s1108 + $0xf0] sm:$0xff]
        %v1130 = vld [vmem:[%s1108 + $0xf8] sm:$0xff]
        %v1131 = vld [vmem:[%s1108 + $0x108] sm:$0xff]
        %v1132 = vld [vmem:[%s1108 + $0x110] sm:$0xff]
        %v1133 = vld [vmem:[%s1108 + $0x120] sm:$0xff]
        %v1134 = vld [vmem:[%s1108 + $0x128] sm:$0xff]
        %v1135 = vld [vmem:[%s1108 + $0x138] sm:$0xff]
        %v1136 = vld [vmem:[%s1108 + $0x140] sm:$0xff]
        %v1137 = vld [vmem:[%s1108 + $0x150] sm:$0xff]
        %v1138 = vld [vmem:[%s1108 + $0x158] sm:$0xff]
        %v1139 = vld [vmem:[%s1108 + $0x168] sm:$0xff]
        %v1140 = vld [vmem:[%s1108 + $0x170] sm:$0xff]
        %v1141 = vld [vmem:[%s1108 + $0x1b0] sm:$0xff]
        %v1142 = vld [vmem:[%s1108 + $0x1b8] sm:$0xff]
        %v1143 = vld [vmem:[%s1108 + $0x1c8] sm:$0xff]
        %v1144 = vld [vmem:[%s1108 + $0x1d0] sm:$0xff]
        %v1145 = vld [vmem:[%s1108 + $0x1e0] sm:$0xff]
        %v1146 = vld [vmem:[%s1108 + $0x1e8] sm:$0xff]
        %v1147 = vld [vmem:[%s1108 + $0x1f8] sm:$0xff]
        %v1148 = vld [vmem:[%s1108 + $0x200] sm:$0xff]
        %v1149 = vld [vmem:[%s1108 + $0x210] sm:$0xff]
        %v1150 = vld [vmem:[%s1108 + $0x218] sm:$0xff]
        %v1151 = vld [vmem:[%s1108 + $0x228] sm:$0xff]
        %v1152 = vld [vmem:[%s1108 + $0x230] sm:$0xff]
        %v1153 = vld [vmem:[%s1108 + $0x240] sm:$0xff]
        %v1154 = vld [vmem:[%s1108 + $0x248] sm:$0xff]
        %v1155 = vld [vmem:[%s1108 + $0x258] sm:$0xff]
        %v1156 = vld [vmem:[%s1108 + $0x260] sm:$0xff]
        %v1157 = vld [vmem:[%s1108 + $0x270] sm:$0xff]
        %v1158 = vld [vmem:[%s1108 + $0x278] sm:$0xff]
        %v1159 = vld [vmem:[%s1108 + $0x288] sm:$0xff]
        %v1160 = vld [vmem:[%s1108 + $0x290] sm:$0xff]
        %v1161 = vld [vmem:[%s1108 + $0x2a0] sm:$0xff]
        %v1162 = vld [vmem:[%s1108 + $0x2a8] sm:$0xff]
        %v1163 = vld [vmem:[%s1108 + $0x2b8] sm:$0xff]
        %v1164 = vld [vmem:[%s1108 + $0x2c0] sm:$0xff]
        %v1165 = vld [vmem:[%s1108 + $0x2d0] sm:$0xff]
        %v1166 = vld [vmem:[%s1108 + $0x2d8] sm:$0xff]
        %v1167 = vld [vmem:[%s1108 + $0x2e8] sm:$0xff]
        %v1168 = vld [vmem:[%s1108 + $0x2f0] sm:$0xff]
        %v1169 = vld [vmem:[%s1108 + $0x300] sm:$0xff]
        %v1170 = vld [vmem:[%s1108 + $0x308] sm:$0xff]
        %v1171 = vld [vmem:[%s1108 + $0x318] sm:$0xff]
        %v1172 = vld [vmem:[%s1108 + $0x320] sm:$0xff]
        %s1173 = sadd.s32 %s1041, 48
        %s1174 = scalar_lea.vmem [#allocation2], %s1173
        %v1175 = vld [vmem:[%s1174] sm:$0xff]
        %v1176 = vld [vmem:[%s1174 + $0x8] sm:$0xff]
        %v1177 = vld [vmem:[%s1174 + $0x18] sm:$0xff]
        %v1178 = vld [vmem:[%s1174 + $0x20] sm:$0xff]
        %v1179 = vld [vmem:[%s1174 + $0x30] sm:$0xff]
        %v1180 = vld [vmem:[%s1174 + $0x38] sm:$0xff]
        %v1181 = vld [vmem:[%s1174 + $0x48] sm:$0xff]
        %v1182 = vld [vmem:[%s1174 + $0x50] sm:$0xff]
        %v1183 = vld [vmem:[%s1174 + $0x60] sm:$0xff]
        %v1184 = vld [vmem:[%s1174 + $0x68] sm:$0xff]
        %v1185 = vld [vmem:[%s1174 + $0x78] sm:$0xff]
        %v1186 = vld [vmem:[%s1174 + $0x80] sm:$0xff]
        %v1187 = vld [vmem:[%s1174 + $0x90] sm:$0xff]
        %v1188 = vld [vmem:[%s1174 + $0x98] sm:$0xff]
        %v1189 = vld [vmem:[%s1174 + $0xa8] sm:$0xff]
        %v1190 = vld [vmem:[%s1174 + $0xb0] sm:$0xff]
        %v1191 = vld [vmem:[%s1174 + $0xc0] sm:$0xff]
        %v1192 = vld [vmem:[%s1174 + $0xc8] sm:$0xff]
        %v1193 = vld [vmem:[%s1174 + $0xd8] sm:$0xff]
        %v1194 = vld [vmem:[%s1174 + $0xe0] sm:$0xff]
        %v1195 = vld [vmem:[%s1174 + $0xf0] sm:$0xff]
        %v1196 = vld [vmem:[%s1174 + $0xf8] sm:$0xff]
        %v1197 = vld [vmem:[%s1174 + $0x108] sm:$0xff]
        %v1198 = vld [vmem:[%s1174 + $0x110] sm:$0xff]
        %v1199 = vld [vmem:[%s1174 + $0x120] sm:$0xff]
        %v1200 = vld [vmem:[%s1174 + $0x128] sm:$0xff]
        %v1201 = vld [vmem:[%s1174 + $0x138] sm:$0xff]
        %v1202 = vld [vmem:[%s1174 + $0x140] sm:$0xff]
        %v1203 = vld [vmem:[%s1174 + $0x150] sm:$0xff]
        %v1204 = vld [vmem:[%s1174 + $0x158] sm:$0xff]
        %v1205 = vld [vmem:[%s1174 + $0x168] sm:$0xff]
        %v1206 = vld [vmem:[%s1174 + $0x170] sm:$0xff]
        %v1207 = vld [vmem:[%s1174 + $0x1b0] sm:$0xff]
        %v1208 = vld [vmem:[%s1174 + $0x1b8] sm:$0xff]
        %v1209 = vld [vmem:[%s1174 + $0x1c8] sm:$0xff]
        %v1210 = vld [vmem:[%s1174 + $0x1d0] sm:$0xff]
        %v1211 = vld [vmem:[%s1174 + $0x1e0] sm:$0xff]
        %v1212 = vld [vmem:[%s1174 + $0x1e8] sm:$0xff]
        %v1213 = vld [vmem:[%s1174 + $0x1f8] sm:$0xff]
        %v1214 = vld [vmem:[%s1174 + $0x200] sm:$0xff]
        %v1215 = vld [vmem:[%s1174 + $0x210] sm:$0xff]
        %v1216 = vld [vmem:[%s1174 + $0x218] sm:$0xff]
        %v1217 = vld [vmem:[%s1174 + $0x228] sm:$0xff]
        %v1218 = vld [vmem:[%s1174 + $0x230] sm:$0xff]
        %v1219 = vld [vmem:[%s1174 + $0x240] sm:$0xff]
        %v1220 = vld [vmem:[%s1174 + $0x248] sm:$0xff]
        %v1221 = vld [vmem:[%s1174 + $0x258] sm:$0xff]
        %v1222 = vld [vmem:[%s1174 + $0x260] sm:$0xff]
        %v1223 = vld [vmem:[%s1174 + $0x270] sm:$0xff]
        %v1224 = vld [vmem:[%s1174 + $0x278] sm:$0xff]
        %v1225 = vld [vmem:[%s1174 + $0x288] sm:$0xff]
        %v1226 = vld [vmem:[%s1174 + $0x290] sm:$0xff]
        %v1227 = vld [vmem:[%s1174 + $0x2a0] sm:$0xff]
        %v1228 = vld [vmem:[%s1174 + $0x2a8] sm:$0xff]
        %v1229 = vld [vmem:[%s1174 + $0x2b8] sm:$0xff]
        %v1230 = vld [vmem:[%s1174 + $0x2c0] sm:$0xff]
        %v1231 = vld [vmem:[%s1174 + $0x2d0] sm:$0xff]
        %v1232 = vld [vmem:[%s1174 + $0x2d8] sm:$0xff]
        %v1233 = vld [vmem:[%s1174 + $0x2e8] sm:$0xff]
        %v1234 = vld [vmem:[%s1174 + $0x2f0] sm:$0xff]
        %v1235 = vld [vmem:[%s1174 + $0x300] sm:$0xff]
        %v1236 = vld [vmem:[%s1174 + $0x308] sm:$0xff]
        %v1237 = vld [vmem:[%s1174 + $0x318] sm:$0xff]
        %v1238 = vld [vmem:[%s1174 + $0x320] sm:$0xff]
        %1303 = vrot.lane.b32.xlu0 %v713, 4
        %v1304 = vpop.permute.xlu0 %1303
        %1305 = vrot.lane.b32.xlu0 %v714, 4
        %v1306 = vpop.permute.xlu0 %1305
        %1307 = vrot.lane.b32.xlu0 %v715, 4
        %v1308 = vpop.permute.xlu0 %1307
        %1309 = vrot.lane.b32.xlu0 %v716, 4
        %v1310 = vpop.permute.xlu0 %1309
        %1311 = vrot.lane.b32.xlu0 %v717, 4
        %v1312 = vpop.permute.xlu0 %1311
        %1313 = vrot.lane.b32.xlu0 %v718, 4
        %v1314 = vpop.permute.xlu0 %1313
        %1315 = vrot.lane.b32.xlu0 %v719, 4
        %v1316 = vpop.permute.xlu0 %1315
        %1317 = vrot.lane.b32.xlu0 %v720, 4
        %v1318 = vpop.permute.xlu0 %1317
        %1319 = vrot.lane.b32.xlu0 %v721, 4
        %v1320 = vpop.permute.xlu0 %1319
        %1321 = vrot.lane.b32.xlu0 %v722, 4
        %v1322 = vpop.permute.xlu0 %1321
        %1323 = vrot.lane.b32.xlu0 %v723, 4
        %v1324 = vpop.permute.xlu0 %1323
        %1325 = vrot.lane.b32.xlu0 %v724, 4
        %v1326 = vpop.permute.xlu0 %1325
        %1327 = vrot.lane.b32.xlu0 %v725, 4
        %v1328 = vpop.permute.xlu0 %1327
        %1329 = vrot.lane.b32.xlu0 %v726, 4
        %v1330 = vpop.permute.xlu0 %1329
        %1331 = vrot.lane.b32.xlu0 %v727, 4
        %v1332 = vpop.permute.xlu0 %1331
        %1333 = vrot.lane.b32.xlu0 %v728, 4
        %v1334 = vpop.permute.xlu0 %1333
        %1335 = vrot.lane.b32.xlu0 %v729, 4
        %v1336 = vpop.permute.xlu0 %1335
        %1337 = vrot.lane.b32.xlu0 %v730, 4
        %v1338 = vpop.permute.xlu0 %1337
        %1339 = vrot.lane.b32.xlu0 %v731, 4
        %v1340 = vpop.permute.xlu0 %1339
        %1341 = vrot.lane.b32.xlu0 %v732, 4
        %v1342 = vpop.permute.xlu0 %1341
        %1343 = vrot.lane.b32.xlu0 %v733, 4
        %v1344 = vpop.permute.xlu0 %1343
        %1345 = vrot.lane.b32.xlu0 %v734, 4
        %v1346 = vpop.permute.xlu0 %1345
        %1347 = vrot.lane.b32.xlu0 %v735, 4
        %v1348 = vpop.permute.xlu0 %1347
        %1349 = vrot.lane.b32.xlu0 %v736, 4
        %v1350 = vpop.permute.xlu0 %1349
        %1351 = vrot.lane.b32.xlu0 %v737, 4
        %v1352 = vpop.permute.xlu0 %1351
        %1353 = vrot.lane.b32.xlu0 %v738, 4
        %v1354 = vpop.permute.xlu0 %1353
        %1355 = vrot.lane.b32.xlu0 %v739, 4
        %v1356 = vpop.permute.xlu0 %1355
        %1357 = vrot.lane.b32.xlu0 %v740, 4
        %v1358 = vpop.permute.xlu0 %1357
        %1359 = vrot.lane.b32.xlu0 %v741, 4
        %v1360 = vpop.permute.xlu0 %1359
        %1361 = vrot.lane.b32.xlu0 %v742, 4
        %v1362 = vpop.permute.xlu0 %1361
        %1363 = vrot.lane.b32.xlu0 %v743, 4
        %v1364 = vpop.permute.xlu0 %1363
        %1365 = vrot.lane.b32.xlu0 %v744, 4
        %v1366 = vpop.permute.xlu0 %1365
        %1367 = vrot.lane.b32.xlu0 %v745, 4
        %v1368 = vpop.permute.xlu0 %1367
        %1369 = vrot.lane.b32.xlu0 %v746, 4
        %v1370 = vpop.permute.xlu0 %1369
        %1371 = vrot.lane.b32.xlu0 %v747, 4
        %v1372 = vpop.permute.xlu0 %1371
        %1373 = vrot.lane.b32.xlu0 %v748, 4
        %v1374 = vpop.permute.xlu0 %1373
        %1375 = vrot.lane.b32.xlu0 %v749, 4
        %v1376 = vpop.permute.xlu0 %1375
        %1377 = vrot.lane.b32.xlu0 %v750, 4
        %v1378 = vpop.permute.xlu0 %1377
        %1379 = vrot.lane.b32.xlu0 %v751, 4
        %v1380 = vpop.permute.xlu0 %1379
        %1381 = vrot.lane.b32.xlu0 %v752, 4
        %v1382 = vpop.permute.xlu0 %1381
        %1383 = vrot.lane.b32.xlu0 %v753, 4
        %v1384 = vpop.permute.xlu0 %1383
        %1385 = vrot.lane.b32.xlu0 %v754, 4
        %v1386 = vpop.permute.xlu0 %1385
        %1387 = vrot.lane.b32.xlu0 %v755, 4
        %v1388 = vpop.permute.xlu0 %1387
        %1389 = vrot.lane.b32.xlu0 %v756, 4
        %v1390 = vpop.permute.xlu0 %1389
        %1391 = vrot.lane.b32.xlu0 %v757, 4
        %v1392 = vpop.permute.xlu0 %1391
        %1393 = vrot.lane.b32.xlu0 %v758, 4
        %v1394 = vpop.permute.xlu0 %1393
        %1395 = vrot.lane.b32.xlu0 %v759, 4
        %v1396 = vpop.permute.xlu0 %1395
        %1397 = vrot.lane.b32.xlu0 %v760, 4
        %v1398 = vpop.permute.xlu0 %1397
        %1399 = vrot.lane.b32.xlu0 %v761, 4
        %v1400 = vpop.permute.xlu0 %1399
        %1401 = vrot.lane.b32.xlu0 %v762, 4
        %v1402 = vpop.permute.xlu0 %1401
        %1403 = vrot.lane.b32.xlu0 %v763, 4
        %v1404 = vpop.permute.xlu0 %1403
        %1405 = vrot.lane.b32.xlu0 %v764, 4
        %v1406 = vpop.permute.xlu0 %1405
        %1407 = vrot.lane.b32.xlu0 %v765, 4
        %v1408 = vpop.permute.xlu0 %1407
        %1409 = vrot.lane.b32.xlu0 %v766, 4
        %v1410 = vpop.permute.xlu0 %1409
        %1411 = vrot.lane.b32.xlu0 %v767, 4
        %v1412 = vpop.permute.xlu0 %1411
        %1413 = vrot.lane.b32.xlu0 %v768, 4
        %v1414 = vpop.permute.xlu0 %1413
        %1415 = vrot.lane.b32.xlu0 %v769, 4
        %v1416 = vpop.permute.xlu0 %1415
        %1417 = vrot.lane.b32.xlu0 %v770, 4
        %v1418 = vpop.permute.xlu0 %1417
        %1419 = vrot.lane.b32.xlu0 %v771, 4
        %v1420 = vpop.permute.xlu0 %1419
        %1421 = vrot.lane.b32.xlu0 %v772, 4
        %v1422 = vpop.permute.xlu0 %1421
        %1423 = vrot.lane.b32.xlu0 %v773, 4
        %v1424 = vpop.permute.xlu0 %1423
        %1425 = vrot.lane.b32.xlu0 %v774, 4
        %v1426 = vpop.permute.xlu0 %1425
        %1427 = vrot.lane.b32.xlu0 %v775, 4
        %v1428 = vpop.permute.xlu0 %1427
        %1429 = vrot.lane.b32.xlu0 %v776, 4
        %v1430 = vpop.permute.xlu0 %1429
        %1559 = vrot.lane.b32.xlu0 %v779, 8
        %v1560 = vpop.permute.xlu0 %1559
        %1561 = vrot.lane.b32.xlu0 %v780, 8
        %v1562 = vpop.permute.xlu0 %1561
        %1563 = vrot.lane.b32.xlu0 %v781, 8
        %v1564 = vpop.permute.xlu0 %1563
        %1565 = vrot.lane.b32.xlu0 %v782, 8
        %v1566 = vpop.permute.xlu0 %1565
        %1567 = vrot.lane.b32.xlu0 %v783, 8
        %v1568 = vpop.permute.xlu0 %1567
        %1569 = vrot.lane.b32.xlu0 %v784, 8
        %v1570 = vpop.permute.xlu0 %1569
        %1571 = vrot.lane.b32.xlu0 %v785, 8
        %v1572 = vpop.permute.xlu0 %1571
        %1573 = vrot.lane.b32.xlu0 %v786, 8
        %v1574 = vpop.permute.xlu0 %1573
        %1575 = vrot.lane.b32.xlu0 %v787, 8
        %v1576 = vpop.permute.xlu0 %1575
        %1577 = vrot.lane.b32.xlu0 %v788, 8
        %v1578 = vpop.permute.xlu0 %1577
        %1579 = vrot.lane.b32.xlu0 %v789, 8
        %v1580 = vpop.permute.xlu0 %1579
        %1581 = vrot.lane.b32.xlu0 %v790, 8
        %v1582 = vpop.permute.xlu0 %1581
        %1583 = vrot.lane.b32.xlu0 %v791, 8
        %v1584 = vpop.permute.xlu0 %1583
        %1585 = vrot.lane.b32.xlu0 %v792, 8
        %v1586 = vpop.permute.xlu0 %1585
        %1587 = vrot.lane.b32.xlu0 %v793, 8
        %v1588 = vpop.permute.xlu0 %1587
        %1589 = vrot.lane.b32.xlu0 %v794, 8
        %v1590 = vpop.permute.xlu0 %1589
        %1591 = vrot.lane.b32.xlu0 %v795, 8
        %v1592 = vpop.permute.xlu0 %1591
        %1593 = vrot.lane.b32.xlu0 %v796, 8
        %v1594 = vpop.permute.xlu0 %1593
        %1595 = vrot.lane.b32.xlu0 %v797, 8
        %v1596 = vpop.permute.xlu0 %1595
        %1597 = vrot.lane.b32.xlu0 %v798, 8
        %v1598 = vpop.permute.xlu0 %1597
        %1599 = vrot.lane.b32.xlu0 %v799, 8
        %v1600 = vpop.permute.xlu0 %1599
        %1601 = vrot.lane.b32.xlu0 %v800, 8
        %v1602 = vpop.permute.xlu0 %1601
        %1603 = vrot.lane.b32.xlu0 %v801, 8
        %v1604 = vpop.permute.xlu0 %1603
        %1605 = vrot.lane.b32.xlu0 %v802, 8
        %v1606 = vpop.permute.xlu0 %1605
        %1607 = vrot.lane.b32.xlu0 %v803, 8
        %v1608 = vpop.permute.xlu0 %1607
        %1609 = vrot.lane.b32.xlu0 %v804, 8
        %v1610 = vpop.permute.xlu0 %1609
        %1611 = vrot.lane.b32.xlu0 %v805, 8
        %v1612 = vpop.permute.xlu0 %1611
        %1613 = vrot.lane.b32.xlu0 %v806, 8
        %v1614 = vpop.permute.xlu0 %1613
        %1615 = vrot.lane.b32.xlu0 %v807, 8
        %v1616 = vpop.permute.xlu0 %1615
        %1617 = vrot.lane.b32.xlu0 %v808, 8
        %v1618 = vpop.permute.xlu0 %1617
        %1619 = vrot.lane.b32.xlu0 %v809, 8
        %v1620 = vpop.permute.xlu0 %1619
        %1621 = vrot.lane.b32.xlu0 %v810, 8
        %v1622 = vpop.permute.xlu0 %1621
        %1623 = vrot.lane.b32.xlu0 %v811, 8
        %v1624 = vpop.permute.xlu0 %1623
        %1625 = vrot.lane.b32.xlu0 %v812, 8
        %v1626 = vpop.permute.xlu0 %1625
        %1627 = vrot.lane.b32.xlu0 %v813, 8
        %v1628 = vpop.permute.xlu0 %1627
        %1629 = vrot.lane.b32.xlu0 %v814, 8
        %v1630 = vpop.permute.xlu0 %1629
        %1631 = vrot.lane.b32.xlu0 %v815, 8
        %v1632 = vpop.permute.xlu0 %1631
        %1633 = vrot.lane.b32.xlu0 %v816, 8
        %v1634 = vpop.permute.xlu0 %1633
        %1635 = vrot.lane.b32.xlu0 %v817, 8
        %v1636 = vpop.permute.xlu0 %1635
        %1637 = vrot.lane.b32.xlu0 %v818, 8
        %v1638 = vpop.permute.xlu0 %1637
        %1639 = vrot.lane.b32.xlu0 %v819, 8
        %v1640 = vpop.permute.xlu0 %1639
        %1641 = vrot.lane.b32.xlu0 %v820, 8
        %v1642 = vpop.permute.xlu0 %1641
        %1643 = vrot.lane.b32.xlu0 %v821, 8
        %v1644 = vpop.permute.xlu0 %1643
        %1645 = vrot.lane.b32.xlu0 %v822, 8
        %v1646 = vpop.permute.xlu0 %1645
        %1647 = vrot.lane.b32.xlu0 %v823, 8
        %v1648 = vpop.permute.xlu0 %1647
        %1649 = vrot.lane.b32.xlu0 %v824, 8
        %v1650 = vpop.permute.xlu0 %1649
        %1651 = vrot.lane.b32.xlu0 %v825, 8
        %v1652 = vpop.permute.xlu0 %1651
        %1653 = vrot.lane.b32.xlu0 %v826, 8
        %v1654 = vpop.permute.xlu0 %1653
        %1655 = vrot.lane.b32.xlu0 %v827, 8
        %v1656 = vpop.permute.xlu0 %1655
        %1657 = vrot.lane.b32.xlu0 %v828, 8
        %v1658 = vpop.permute.xlu0 %1657
        %1659 = vrot.lane.b32.xlu0 %v829, 8
        %v1660 = vpop.permute.xlu0 %1659
        %1661 = vrot.lane.b32.xlu0 %v830, 8
        %v1662 = vpop.permute.xlu0 %1661
        %1663 = vrot.lane.b32.xlu0 %v831, 8
        %v1664 = vpop.permute.xlu0 %1663
        %1665 = vrot.lane.b32.xlu0 %v832, 8
        %v1666 = vpop.permute.xlu0 %1665
        %1667 = vrot.lane.b32.xlu0 %v833, 8
        %v1668 = vpop.permute.xlu0 %1667
        %1669 = vrot.lane.b32.xlu0 %v834, 8
        %v1670 = vpop.permute.xlu0 %1669
        %1671 = vrot.lane.b32.xlu0 %v835, 8
        %v1672 = vpop.permute.xlu0 %1671
        %1673 = vrot.lane.b32.xlu0 %v836, 8
        %v1674 = vpop.permute.xlu0 %1673
        %1675 = vrot.lane.b32.xlu0 %v837, 8
        %v1676 = vpop.permute.xlu0 %1675
        %1677 = vrot.lane.b32.xlu0 %v838, 8
        %v1678 = vpop.permute.xlu0 %1677
        %1679 = vrot.lane.b32.xlu0 %v839, 8
        %v1680 = vpop.permute.xlu0 %1679
        %1681 = vrot.lane.b32.xlu0 %v840, 8
        %v1682 = vpop.permute.xlu0 %1681
        %1683 = vrot.lane.b32.xlu0 %v841, 8
        %v1684 = vpop.permute.xlu0 %1683
        %1685 = vrot.lane.b32.xlu0 %v842, 8
        %v1686 = vpop.permute.xlu0 %1685
        %1815 = vrot.lane.b32.xlu0 %v845, 12
        %v1816 = vpop.permute.xlu0 %1815
        %1817 = vrot.lane.b32.xlu0 %v846, 12
        %v1818 = vpop.permute.xlu0 %1817
        %1819 = vrot.lane.b32.xlu0 %v847, 12
        %v1820 = vpop.permute.xlu0 %1819
        %1821 = vrot.lane.b32.xlu0 %v848, 12
        %v1822 = vpop.permute.xlu0 %1821
        %1823 = vrot.lane.b32.xlu0 %v849, 12
        %v1824 = vpop.permute.xlu0 %1823
        %1825 = vrot.lane.b32.xlu0 %v850, 12
        %v1826 = vpop.permute.xlu0 %1825
        %1827 = vrot.lane.b32.xlu0 %v851, 12
        %v1828 = vpop.permute.xlu0 %1827
        %1829 = vrot.lane.b32.xlu0 %v852, 12
        %v1830 = vpop.permute.xlu0 %1829
        %1831 = vrot.lane.b32.xlu0 %v853, 12
        %v1832 = vpop.permute.xlu0 %1831
        %1833 = vrot.lane.b32.xlu0 %v854, 12
        %v1834 = vpop.permute.xlu0 %1833
        %1835 = vrot.lane.b32.xlu0 %v855, 12
        %v1836 = vpop.permute.xlu0 %1835
        %1837 = vrot.lane.b32.xlu0 %v856, 12
        %v1838 = vpop.permute.xlu0 %1837
        %1839 = vrot.lane.b32.xlu0 %v857, 12
        %v1840 = vpop.permute.xlu0 %1839
        %1841 = vrot.lane.b32.xlu0 %v858, 12
        %v1842 = vpop.permute.xlu0 %1841
        %1843 = vrot.lane.b32.xlu0 %v859, 12
        %v1844 = vpop.permute.xlu0 %1843
        %1845 = vrot.lane.b32.xlu0 %v860, 12
        %v1846 = vpop.permute.xlu0 %1845
        %1847 = vrot.lane.b32.xlu0 %v861, 12
        %v1848 = vpop.permute.xlu0 %1847
        %1849 = vrot.lane.b32.xlu0 %v862, 12
        %v1850 = vpop.permute.xlu0 %1849
        %1851 = vrot.lane.b32.xlu0 %v863, 12
        %v1852 = vpop.permute.xlu0 %1851
        %1853 = vrot.lane.b32.xlu0 %v864, 12
        %v1854 = vpop.permute.xlu0 %1853
        %1855 = vrot.lane.b32.xlu0 %v865, 12
        %v1856 = vpop.permute.xlu0 %1855
        %1857 = vrot.lane.b32.xlu0 %v866, 12
        %v1858 = vpop.permute.xlu0 %1857
        %1859 = vrot.lane.b32.xlu0 %v867, 12
        %v1860 = vpop.permute.xlu0 %1859
        %1861 = vrot.lane.b32.xlu0 %v868, 12
        %v1862 = vpop.permute.xlu0 %1861
        %1863 = vrot.lane.b32.xlu0 %v869, 12
        %v1864 = vpop.permute.xlu0 %1863
        %1865 = vrot.lane.b32.xlu0 %v870, 12
        %v1866 = vpop.permute.xlu0 %1865
        %1867 = vrot.lane.b32.xlu0 %v871, 12
        %v1868 = vpop.permute.xlu0 %1867
        %1869 = vrot.lane.b32.xlu0 %v872, 12
        %v1870 = vpop.permute.xlu0 %1869
        %1871 = vrot.lane.b32.xlu0 %v873, 12
        %v1872 = vpop.permute.xlu0 %1871
        %1873 = vrot.lane.b32.xlu0 %v874, 12
        %v1874 = vpop.permute.xlu0 %1873
        %1875 = vrot.lane.b32.xlu0 %v875, 12
        %v1876 = vpop.permute.xlu0 %1875
        %1877 = vrot.lane.b32.xlu0 %v876, 12
        %v1878 = vpop.permute.xlu0 %1877
        %1879 = vrot.lane.b32.xlu0 %v877, 12
        %v1880 = vpop.permute.xlu0 %1879
        %1881 = vrot.lane.b32.xlu0 %v878, 12
        %v1882 = vpop.permute.xlu0 %1881
        %1883 = vrot.lane.b32.xlu0 %v879, 12
        %v1884 = vpop.permute.xlu0 %1883
        %1885 = vrot.lane.b32.xlu0 %v880, 12
        %v1886 = vpop.permute.xlu0 %1885
        %1887 = vrot.lane.b32.xlu0 %v881, 12
        %v1888 = vpop.permute.xlu0 %1887
        %1889 = vrot.lane.b32.xlu0 %v882, 12
        %v1890 = vpop.permute.xlu0 %1889
        %1891 = vrot.lane.b32.xlu0 %v883, 12
        %v1892 = vpop.permute.xlu0 %1891
        %1893 = vrot.lane.b32.xlu0 %v884, 12
        %v1894 = vpop.permute.xlu0 %1893
        %1895 = vrot.lane.b32.xlu0 %v885, 12
        %v1896 = vpop.permute.xlu0 %1895
        %1897 = vrot.lane.b32.xlu0 %v886, 12
        %v1898 = vpop.permute.xlu0 %1897
        %1899 = vrot.lane.b32.xlu0 %v887, 12
        %v1900 = vpop.permute.xlu0 %1899
        %1901 = vrot.lane.b32.xlu0 %v888, 12
        %v1902 = vpop.permute.xlu0 %1901
        %1903 = vrot.lane.b32.xlu0 %v889, 12
        %v1904 = vpop.permute.xlu0 %1903
        %1905 = vrot.lane.b32.xlu0 %v890, 12
        %v1906 = vpop.permute.xlu0 %1905
        %1907 = vrot.lane.b32.xlu0 %v891, 12
        %v1908 = vpop.permute.xlu0 %1907
        %1909 = vrot.lane.b32.xlu0 %v892, 12
        %v1910 = vpop.permute.xlu0 %1909
        %1911 = vrot.lane.b32.xlu0 %v893, 12
        %v1912 = vpop.permute.xlu0 %1911
        %1913 = vrot.lane.b32.xlu0 %v894, 12
        %v1914 = vpop.permute.xlu0 %1913
        %1915 = vrot.lane.b32.xlu0 %v895, 12
        %v1916 = vpop.permute.xlu0 %1915
        %1917 = vrot.lane.b32.xlu0 %v896, 12
        %v1918 = vpop.permute.xlu0 %1917
        %1919 = vrot.lane.b32.xlu0 %v897, 12
        %v1920 = vpop.permute.xlu0 %1919
        %1921 = vrot.lane.b32.xlu0 %v898, 12
        %v1922 = vpop.permute.xlu0 %1921
        %1923 = vrot.lane.b32.xlu0 %v899, 12
        %v1924 = vpop.permute.xlu0 %1923
        %1925 = vrot.lane.b32.xlu0 %v900, 12
        %v1926 = vpop.permute.xlu0 %1925
        %1927 = vrot.lane.b32.xlu0 %v901, 12
        %v1928 = vpop.permute.xlu0 %1927
        %1929 = vrot.lane.b32.xlu0 %v902, 12
        %v1930 = vpop.permute.xlu0 %1929
        %1931 = vrot.lane.b32.xlu0 %v903, 12
        %v1932 = vpop.permute.xlu0 %1931
        %1933 = vrot.lane.b32.xlu0 %v904, 12
        %v1934 = vpop.permute.xlu0 %1933
        %1935 = vrot.lane.b32.xlu0 %v905, 12
        %v1936 = vpop.permute.xlu0 %1935
        %1937 = vrot.lane.b32.xlu0 %v906, 12
        %v1938 = vpop.permute.xlu0 %1937
        %1939 = vrot.lane.b32.xlu0 %v907, 12
        %v1940 = vpop.permute.xlu0 %1939
        %1941 = vrot.lane.b32.xlu0 %v908, 12
        %v1942 = vpop.permute.xlu0 %1941
        %2071 = vrot.lane.b32.xlu0 %v911, 16
        %v2072 = vpop.permute.xlu0 %2071
        %2073 = vrot.lane.b32.xlu0 %v912, 16
        %v2074 = vpop.permute.xlu0 %2073
        %2075 = vrot.lane.b32.xlu0 %v913, 16
        %v2076 = vpop.permute.xlu0 %2075
        %2077 = vrot.lane.b32.xlu0 %v914, 16
        %v2078 = vpop.permute.xlu0 %2077
        %2079 = vrot.lane.b32.xlu0 %v915, 16
        %v2080 = vpop.permute.xlu0 %2079
        %2081 = vrot.lane.b32.xlu0 %v916, 16
        %v2082 = vpop.permute.xlu0 %2081
        %2083 = vrot.lane.b32.xlu0 %v917, 16
        %v2084 = vpop.permute.xlu0 %2083
        %2085 = vrot.lane.b32.xlu0 %v918, 16
        %v2086 = vpop.permute.xlu0 %2085
        %2087 = vrot.lane.b32.xlu0 %v919, 16
        %v2088 = vpop.permute.xlu0 %2087
        %2089 = vrot.lane.b32.xlu0 %v920, 16
        %v2090 = vpop.permute.xlu0 %2089
        %2091 = vrot.lane.b32.xlu0 %v921, 16
        %v2092 = vpop.permute.xlu0 %2091
        %2093 = vrot.lane.b32.xlu0 %v922, 16
        %v2094 = vpop.permute.xlu0 %2093
        %2095 = vrot.lane.b32.xlu0 %v923, 16
        %v2096 = vpop.permute.xlu0 %2095
        %2097 = vrot.lane.b32.xlu0 %v924, 16
        %v2098 = vpop.permute.xlu0 %2097
        %2099 = vrot.lane.b32.xlu0 %v925, 16
        %v2100 = vpop.permute.xlu0 %2099
        %2101 = vrot.lane.b32.xlu0 %v926, 16
        %v2102 = vpop.permute.xlu0 %2101
        %2103 = vrot.lane.b32.xlu0 %v927, 16
        %v2104 = vpop.permute.xlu0 %2103
        %2105 = vrot.lane.b32.xlu0 %v928, 16
        %v2106 = vpop.permute.xlu0 %2105
        %2107 = vrot.lane.b32.xlu0 %v929, 16
        %v2108 = vpop.permute.xlu0 %2107
        %2109 = vrot.lane.b32.xlu0 %v930, 16
        %v2110 = vpop.permute.xlu0 %2109
        %2111 = vrot.lane.b32.xlu0 %v931, 16
        %v2112 = vpop.permute.xlu0 %2111
        %2113 = vrot.lane.b32.xlu0 %v932, 16
        %v2114 = vpop.permute.xlu0 %2113
        %2115 = vrot.lane.b32.xlu0 %v933, 16
        %v2116 = vpop.permute.xlu0 %2115
        %2117 = vrot.lane.b32.xlu0 %v934, 16
        %v2118 = vpop.permute.xlu0 %2117
        %2119 = vrot.lane.b32.xlu0 %v935, 16
        %v2120 = vpop.permute.xlu0 %2119
        %2121 = vrot.lane.b32.xlu0 %v936, 16
        %v2122 = vpop.permute.xlu0 %2121
        %2123 = vrot.lane.b32.xlu0 %v937, 16
        %v2124 = vpop.permute.xlu0 %2123
        %2125 = vrot.lane.b32.xlu0 %v938, 16
        %v2126 = vpop.permute.xlu0 %2125
        %2127 = vrot.lane.b32.xlu0 %v939, 16
        %v2128 = vpop.permute.xlu0 %2127
        %2129 = vrot.lane.b32.xlu0 %v940, 16
        %v2130 = vpop.permute.xlu0 %2129
        %2131 = vrot.lane.b32.xlu0 %v941, 16
        %v2132 = vpop.permute.xlu0 %2131
        %2133 = vrot.lane.b32.xlu0 %v942, 16
        %v2134 = vpop.permute.xlu0 %2133
        %2135 = vrot.lane.b32.xlu0 %v943, 16
        %v2136 = vpop.permute.xlu0 %2135
        %2137 = vrot.lane.b32.xlu0 %v944, 16
        %v2138 = vpop.permute.xlu0 %2137
        %2139 = vrot.lane.b32.xlu0 %v945, 16
        %v2140 = vpop.permute.xlu0 %2139
        %2141 = vrot.lane.b32.xlu0 %v946, 16
        %v2142 = vpop.permute.xlu0 %2141
        %2143 = vrot.lane.b32.xlu0 %v947, 16
        %v2144 = vpop.permute.xlu0 %2143
        %2145 = vrot.lane.b32.xlu0 %v948, 16
        %v2146 = vpop.permute.xlu0 %2145
        %2147 = vrot.lane.b32.xlu0 %v949, 16
        %v2148 = vpop.permute.xlu0 %2147
        %2149 = vrot.lane.b32.xlu0 %v950, 16
        %v2150 = vpop.permute.xlu0 %2149
        %2151 = vrot.lane.b32.xlu0 %v951, 16
        %v2152 = vpop.permute.xlu0 %2151
        %2153 = vrot.lane.b32.xlu0 %v952, 16
        %v2154 = vpop.permute.xlu0 %2153
        %2155 = vrot.lane.b32.xlu0 %v953, 16
        %v2156 = vpop.permute.xlu0 %2155
        %2157 = vrot.lane.b32.xlu0 %v954, 16
        %v2158 = vpop.permute.xlu0 %2157
        %2159 = vrot.lane.b32.xlu0 %v955, 16
        %v2160 = vpop.permute.xlu0 %2159
        %2161 = vrot.lane.b32.xlu0 %v956, 16
        %v2162 = vpop.permute.xlu0 %2161
        %2163 = vrot.lane.b32.xlu0 %v957, 16
        %v2164 = vpop.permute.xlu0 %2163
        %2165 = vrot.lane.b32.xlu0 %v958, 16
        %v2166 = vpop.permute.xlu0 %2165
        %2167 = vrot.lane.b32.xlu0 %v959, 16
        %v2168 = vpop.permute.xlu0 %2167
        %2169 = vrot.lane.b32.xlu0 %v960, 16
        %v2170 = vpop.permute.xlu0 %2169
        %2171 = vrot.lane.b32.xlu0 %v961, 16
        %v2172 = vpop.permute.xlu0 %2171
        %2173 = vrot.lane.b32.xlu0 %v962, 16
        %v2174 = vpop.permute.xlu0 %2173
        %2175 = vrot.lane.b32.xlu0 %v963, 16
        %v2176 = vpop.permute.xlu0 %2175
        %2177 = vrot.lane.b32.xlu0 %v964, 16
        %v2178 = vpop.permute.xlu0 %2177
        %2179 = vrot.lane.b32.xlu0 %v965, 16
        %v2180 = vpop.permute.xlu0 %2179
        %2181 = vrot.lane.b32.xlu0 %v966, 16
        %v2182 = vpop.permute.xlu0 %2181
        %2183 = vrot.lane.b32.xlu0 %v967, 16
        %v2184 = vpop.permute.xlu0 %2183
        %2185 = vrot.lane.b32.xlu0 %v968, 16
        %v2186 = vpop.permute.xlu0 %2185
        %2187 = vrot.lane.b32.xlu0 %v969, 16
        %v2188 = vpop.permute.xlu0 %2187
        %2189 = vrot.lane.b32.xlu0 %v970, 16
        %v2190 = vpop.permute.xlu0 %2189
        %2191 = vrot.lane.b32.xlu0 %v971, 16
        %v2192 = vpop.permute.xlu0 %2191
        %2193 = vrot.lane.b32.xlu0 %v972, 16
        %v2194 = vpop.permute.xlu0 %2193
        %2195 = vrot.lane.b32.xlu0 %v973, 16
        %v2196 = vpop.permute.xlu0 %2195
        %2197 = vrot.lane.b32.xlu0 %v974, 16
        %v2198 = vpop.permute.xlu0 %2197
        %2327 = vrot.lane.b32.xlu0 %v977, 20
        %v2328 = vpop.permute.xlu0 %2327
        %2329 = vrot.lane.b32.xlu0 %v978, 20
        %v2330 = vpop.permute.xlu0 %2329
        %2331 = vrot.lane.b32.xlu0 %v979, 20
        %v2332 = vpop.permute.xlu0 %2331
        %2333 = vrot.lane.b32.xlu0 %v980, 20
        %v2334 = vpop.permute.xlu0 %2333
        %2335 = vrot.lane.b32.xlu0 %v981, 20
        %v2336 = vpop.permute.xlu0 %2335
        %2337 = vrot.lane.b32.xlu0 %v982, 20
        %v2338 = vpop.permute.xlu0 %2337
        %2339 = vrot.lane.b32.xlu0 %v983, 20
        %v2340 = vpop.permute.xlu0 %2339
        %2341 = vrot.lane.b32.xlu0 %v984, 20
        %v2342 = vpop.permute.xlu0 %2341
        %2343 = vrot.lane.b32.xlu0 %v985, 20
        %v2344 = vpop.permute.xlu0 %2343
        %2345 = vrot.lane.b32.xlu0 %v986, 20
        %v2346 = vpop.permute.xlu0 %2345
        %2347 = vrot.lane.b32.xlu0 %v987, 20
        %v2348 = vpop.permute.xlu0 %2347
        %2349 = vrot.lane.b32.xlu0 %v988, 20
        %v2350 = vpop.permute.xlu0 %2349
        %2351 = vrot.lane.b32.xlu0 %v989, 20
        %v2352 = vpop.permute.xlu0 %2351
        %2353 = vrot.lane.b32.xlu0 %v990, 20
        %v2354 = vpop.permute.xlu0 %2353
        %2355 = vrot.lane.b32.xlu0 %v991, 20
        %v2356 = vpop.permute.xlu0 %2355
        %2357 = vrot.lane.b32.xlu0 %v992, 20
        %v2358 = vpop.permute.xlu0 %2357
        %2359 = vrot.lane.b32.xlu0 %v993, 20
        %v2360 = vpop.permute.xlu0 %2359
        %2361 = vrot.lane.b32.xlu0 %v994, 20
        %v2362 = vpop.permute.xlu0 %2361
        %2363 = vrot.lane.b32.xlu0 %v995, 20
        %v2364 = vpop.permute.xlu0 %2363
        %2365 = vrot.lane.b32.xlu0 %v996, 20
        %v2366 = vpop.permute.xlu0 %2365
        %2367 = vrot.lane.b32.xlu0 %v997, 20
        %v2368 = vpop.permute.xlu0 %2367
        %2369 = vrot.lane.b32.xlu0 %v998, 20
        %v2370 = vpop.permute.xlu0 %2369
        %2371 = vrot.lane.b32.xlu0 %v999, 20
        %v2372 = vpop.permute.xlu0 %2371
        %2373 = vrot.lane.b32.xlu0 %v1000, 20
        %v2374 = vpop.permute.xlu0 %2373
        %2375 = vrot.lane.b32.xlu0 %v1001, 20
        %v2376 = vpop.permute.xlu0 %2375
        %2377 = vrot.lane.b32.xlu0 %v1002, 20
        %v2378 = vpop.permute.xlu0 %2377
        %2379 = vrot.lane.b32.xlu0 %v1003, 20
        %v2380 = vpop.permute.xlu0 %2379
        %2381 = vrot.lane.b32.xlu0 %v1004, 20
        %v2382 = vpop.permute.xlu0 %2381
        %2383 = vrot.lane.b32.xlu0 %v1005, 20
        %v2384 = vpop.permute.xlu0 %2383
        %2385 = vrot.lane.b32.xlu0 %v1006, 20
        %v2386 = vpop.permute.xlu0 %2385
        %2387 = vrot.lane.b32.xlu0 %v1007, 20
        %v2388 = vpop.permute.xlu0 %2387
        %2389 = vrot.lane.b32.xlu0 %v1008, 20
        %v2390 = vpop.permute.xlu0 %2389
        %2391 = vrot.lane.b32.xlu0 %v1009, 20
        %v2392 = vpop.permute.xlu0 %2391
        %2393 = vrot.lane.b32.xlu0 %v1010, 20
        %v2394 = vpop.permute.xlu0 %2393
        %2395 = vrot.lane.b32.xlu0 %v1011, 20
        %v2396 = vpop.permute.xlu0 %2395
        %2397 = vrot.lane.b32.xlu0 %v1012, 20
        %v2398 = vpop.permute.xlu0 %2397
        %2399 = vrot.lane.b32.xlu0 %v1013, 20
        %v2400 = vpop.permute.xlu0 %2399
        %2401 = vrot.lane.b32.xlu0 %v1014, 20
        %v2402 = vpop.permute.xlu0 %2401
        %2403 = vrot.lane.b32.xlu0 %v1015, 20
        %v2404 = vpop.permute.xlu0 %2403
        %2405 = vrot.lane.b32.xlu0 %v1016, 20
        %v2406 = vpop.permute.xlu0 %2405
        %2407 = vrot.lane.b32.xlu0 %v1017, 20
        %v2408 = vpop.permute.xlu0 %2407
        %2409 = vrot.lane.b32.xlu0 %v1018, 20
        %v2410 = vpop.permute.xlu0 %2409
        %2411 = vrot.lane.b32.xlu0 %v1019, 20
        %v2412 = vpop.permute.xlu0 %2411
        %2413 = vrot.lane.b32.xlu0 %v1020, 20
        %v2414 = vpop.permute.xlu0 %2413
        %2415 = vrot.lane.b32.xlu0 %v1021, 20
        %v2416 = vpop.permute.xlu0 %2415
        %2417 = vrot.lane.b32.xlu0 %v1022, 20
        %v2418 = vpop.permute.xlu0 %2417
        %2419 = vrot.lane.b32.xlu0 %v1023, 20
        %v2420 = vpop.permute.xlu0 %2419
        %2421 = vrot.lane.b32.xlu0 %v1024, 20
        %v2422 = vpop.permute.xlu0 %2421
        %2423 = vrot.lane.b32.xlu0 %v1025, 20
        %v2424 = vpop.permute.xlu0 %2423
        %2425 = vrot.lane.b32.xlu0 %v1026, 20
        %v2426 = vpop.permute.xlu0 %2425
        %2427 = vrot.lane.b32.xlu0 %v1027, 20
        %v2428 = vpop.permute.xlu0 %2427
        %2429 = vrot.lane.b32.xlu0 %v1028, 20
        %v2430 = vpop.permute.xlu0 %2429
        %2431 = vrot.lane.b32.xlu0 %v1029, 20
        %v2432 = vpop.permute.xlu0 %2431
        %2433 = vrot.lane.b32.xlu0 %v1030, 20
        %v2434 = vpop.permute.xlu0 %2433
        %2435 = vrot.lane.b32.xlu0 %v1031, 20
        %v2436 = vpop.permute.xlu0 %2435
        %2437 = vrot.lane.b32.xlu0 %v1032, 20
        %v2438 = vpop.permute.xlu0 %2437
        %2439 = vrot.lane.b32.xlu0 %v1033, 20
        %v2440 = vpop.permute.xlu0 %2439
        %2441 = vrot.lane.b32.xlu0 %v1034, 20
        %v2442 = vpop.permute.xlu0 %2441
        %2443 = vrot.lane.b32.xlu0 %v1035, 20
        %v2444 = vpop.permute.xlu0 %2443
        %2445 = vrot.lane.b32.xlu0 %v1036, 20
        %v2446 = vpop.permute.xlu0 %2445
        %2447 = vrot.lane.b32.xlu0 %v1037, 20
        %v2448 = vpop.permute.xlu0 %2447
        %2449 = vrot.lane.b32.xlu0 %v1038, 20
        %v2450 = vpop.permute.xlu0 %2449
        %2451 = vrot.lane.b32.xlu0 %v1039, 20
        %v2452 = vpop.permute.xlu0 %2451
        %2453 = vrot.lane.b32.xlu0 %v1040, 20
        %v2454 = vpop.permute.xlu0 %2453
        %2583 = vrot.lane.b32.xlu0 %v1043, 24
        %v2584 = vpop.permute.xlu0 %2583
        %2585 = vrot.lane.b32.xlu0 %v1044, 24
        %v2586 = vpop.permute.xlu0 %2585
        %2587 = vrot.lane.b32.xlu0 %v1045, 24
        %v2588 = vpop.permute.xlu0 %2587
        %2589 = vrot.lane.b32.xlu0 %v1046, 24
        %v2590 = vpop.permute.xlu0 %2589
        %2591 = vrot.lane.b32.xlu0 %v1047, 24
        %v2592 = vpop.permute.xlu0 %2591
        %2593 = vrot.lane.b32.xlu0 %v1048, 24
        %v2594 = vpop.permute.xlu0 %2593
        %2595 = vrot.lane.b32.xlu0 %v1049, 24
        %v2596 = vpop.permute.xlu0 %2595
        %2597 = vrot.lane.b32.xlu0 %v1050, 24
        %v2598 = vpop.permute.xlu0 %2597
        %2599 = vrot.lane.b32.xlu0 %v1051, 24
        %v2600 = vpop.permute.xlu0 %2599
        %2601 = vrot.lane.b32.xlu0 %v1052, 24
        %v2602 = vpop.permute.xlu0 %2601
        %2603 = vrot.lane.b32.xlu0 %v1053, 24
        %v2604 = vpop.permute.xlu0 %2603
        %2605 = vrot.lane.b32.xlu0 %v1054, 24
        %v2606 = vpop.permute.xlu0 %2605
        %2607 = vrot.lane.b32.xlu0 %v1055, 24
        %v2608 = vpop.permute.xlu0 %2607
        %2609 = vrot.lane.b32.xlu0 %v1056, 24
        %v2610 = vpop.permute.xlu0 %2609
        %2611 = vrot.lane.b32.xlu0 %v1057, 24
        %v2612 = vpop.permute.xlu0 %2611
        %2613 = vrot.lane.b32.xlu0 %v1058, 24
        %v2614 = vpop.permute.xlu0 %2613
        %2615 = vrot.lane.b32.xlu0 %v1059, 24
        %v2616 = vpop.permute.xlu0 %2615
        %2617 = vrot.lane.b32.xlu0 %v1060, 24
        %v2618 = vpop.permute.xlu0 %2617
        %2619 = vrot.lane.b32.xlu0 %v1061, 24
        %v2620 = vpop.permute.xlu0 %2619
        %2621 = vrot.lane.b32.xlu0 %v1062, 24
        %v2622 = vpop.permute.xlu0 %2621
        %2623 = vrot.lane.b32.xlu0 %v1063, 24
        %v2624 = vpop.permute.xlu0 %2623
        %2625 = vrot.lane.b32.xlu0 %v1064, 24
        %v2626 = vpop.permute.xlu0 %2625
        %2627 = vrot.lane.b32.xlu0 %v1065, 24
        %v2628 = vpop.permute.xlu0 %2627
        %2629 = vrot.lane.b32.xlu0 %v1066, 24
        %v2630 = vpop.permute.xlu0 %2629
        %2631 = vrot.lane.b32.xlu0 %v1067, 24
        %v2632 = vpop.permute.xlu0 %2631
        %2633 = vrot.lane.b32.xlu0 %v1068, 24
        %v2634 = vpop.permute.xlu0 %2633
        %2635 = vrot.lane.b32.xlu0 %v1069, 24
        %v2636 = vpop.permute.xlu0 %2635
        %2637 = vrot.lane.b32.xlu0 %v1070, 24
        %v2638 = vpop.permute.xlu0 %2637
        %2639 = vrot.lane.b32.xlu0 %v1071, 24
        %v2640 = vpop.permute.xlu0 %2639
        %2641 = vrot.lane.b32.xlu0 %v1072, 24
        %v2642 = vpop.permute.xlu0 %2641
        %2643 = vrot.lane.b32.xlu0 %v1073, 24
        %v2644 = vpop.permute.xlu0 %2643
        %2645 = vrot.lane.b32.xlu0 %v1074, 24
        %v2646 = vpop.permute.xlu0 %2645
        %2647 = vrot.lane.b32.xlu0 %v1075, 24
        %v2648 = vpop.permute.xlu0 %2647
        %2649 = vrot.lane.b32.xlu0 %v1076, 24
        %v2650 = vpop.permute.xlu0 %2649
        %2651 = vrot.lane.b32.xlu0 %v1077, 24
        %v2652 = vpop.permute.xlu0 %2651
        %2653 = vrot.lane.b32.xlu0 %v1078, 24
        %v2654 = vpop.permute.xlu0 %2653
        %2655 = vrot.lane.b32.xlu0 %v1079, 24
        %v2656 = vpop.permute.xlu0 %2655
        %2657 = vrot.lane.b32.xlu0 %v1080, 24
        %v2658 = vpop.permute.xlu0 %2657
        %2659 = vrot.lane.b32.xlu0 %v1081, 24
        %v2660 = vpop.permute.xlu0 %2659
        %2661 = vrot.lane.b32.xlu0 %v1082, 24
        %v2662 = vpop.permute.xlu0 %2661
        %2663 = vrot.lane.b32.xlu0 %v1083, 24
        %v2664 = vpop.permute.xlu0 %2663
        %2665 = vrot.lane.b32.xlu0 %v1084, 24
        %v2666 = vpop.permute.xlu0 %2665
        %2667 = vrot.lane.b32.xlu0 %v1085, 24
        %v2668 = vpop.permute.xlu0 %2667
        %2669 = vrot.lane.b32.xlu0 %v1086, 24
        %v2670 = vpop.permute.xlu0 %2669
        %2671 = vrot.lane.b32.xlu0 %v1087, 24
        %v2672 = vpop.permute.xlu0 %2671
        %2673 = vrot.lane.b32.xlu0 %v1088, 24
        %v2674 = vpop.permute.xlu0 %2673
        %2675 = vrot.lane.b32.xlu0 %v1089, 24
        %v2676 = vpop.permute.xlu0 %2675
        %2677 = vrot.lane.b32.xlu0 %v1090, 24
        %v2678 = vpop.permute.xlu0 %2677
        %2679 = vrot.lane.b32.xlu0 %v1091, 24
        %v2680 = vpop.permute.xlu0 %2679
        %2681 = vrot.lane.b32.xlu0 %v1092, 24
        %v2682 = vpop.permute.xlu0 %2681
        %2683 = vrot.lane.b32.xlu0 %v1093, 24
        %v2684 = vpop.permute.xlu0 %2683
        %2685 = vrot.lane.b32.xlu0 %v1094, 24
        %v2686 = vpop.permute.xlu0 %2685
        %2687 = vrot.lane.b32.xlu0 %v1095, 24
        %v2688 = vpop.permute.xlu0 %2687
        %2689 = vrot.lane.b32.xlu0 %v1096, 24
        %v2690 = vpop.permute.xlu0 %2689
        %2691 = vrot.lane.b32.xlu0 %v1097, 24
        %v2692 = vpop.permute.xlu0 %2691
        %2693 = vrot.lane.b32.xlu0 %v1098, 24
        %v2694 = vpop.permute.xlu0 %2693
        %2695 = vrot.lane.b32.xlu0 %v1099, 24
        %v2696 = vpop.permute.xlu0 %2695
        %2697 = vrot.lane.b32.xlu0 %v1100, 24
        %v2698 = vpop.permute.xlu0 %2697
        %2699 = vrot.lane.b32.xlu0 %v1101, 24
        %v2700 = vpop.permute.xlu0 %2699
        %2701 = vrot.lane.b32.xlu0 %v1102, 24
        %v2702 = vpop.permute.xlu0 %2701
        %2703 = vrot.lane.b32.xlu0 %v1103, 24
        %v2704 = vpop.permute.xlu0 %2703
        %2705 = vrot.lane.b32.xlu0 %v1104, 24
        %v2706 = vpop.permute.xlu0 %2705
        %2707 = vrot.lane.b32.xlu0 %v1105, 24
        %v2708 = vpop.permute.xlu0 %2707
        %2709 = vrot.lane.b32.xlu0 %v1106, 24
        %v2710 = vpop.permute.xlu0 %2709
        %2839 = vrot.lane.b32.xlu0 %v1109, 28
        %v2840 = vpop.permute.xlu0 %2839
        %2841 = vrot.lane.b32.xlu0 %v1110, 28
        %v2842 = vpop.permute.xlu0 %2841
        %2843 = vrot.lane.b32.xlu0 %v1111, 28
        %v2844 = vpop.permute.xlu0 %2843
        %2845 = vrot.lane.b32.xlu0 %v1112, 28
        %v2846 = vpop.permute.xlu0 %2845
        %2847 = vrot.lane.b32.xlu0 %v1113, 28
        %v2848 = vpop.permute.xlu0 %2847
        %2849 = vrot.lane.b32.xlu0 %v1114, 28
        %v2850 = vpop.permute.xlu0 %2849
        %2851 = vrot.lane.b32.xlu0 %v1115, 28
        %v2852 = vpop.permute.xlu0 %2851
        %2853 = vrot.lane.b32.xlu0 %v1116, 28
        %v2854 = vpop.permute.xlu0 %2853
        %2855 = vrot.lane.b32.xlu0 %v1117, 28
        %v2856 = vpop.permute.xlu0 %2855
        %2857 = vrot.lane.b32.xlu0 %v1118, 28
        %v2858 = vpop.permute.xlu0 %2857
        %2859 = vrot.lane.b32.xlu0 %v1119, 28
        %v2860 = vpop.permute.xlu0 %2859
        %2861 = vrot.lane.b32.xlu0 %v1120, 28
        %v2862 = vpop.permute.xlu0 %2861
        %2863 = vrot.lane.b32.xlu0 %v1121, 28
        %v2864 = vpop.permute.xlu0 %2863
        %2865 = vrot.lane.b32.xlu0 %v1122, 28
        %v2866 = vpop.permute.xlu0 %2865
        %2867 = vrot.lane.b32.xlu0 %v1123, 28
        %v2868 = vpop.permute.xlu0 %2867
        %2869 = vrot.lane.b32.xlu0 %v1124, 28
        %v2870 = vpop.permute.xlu0 %2869
        %2871 = vrot.lane.b32.xlu0 %v1125, 28
        %v2872 = vpop.permute.xlu0 %2871
        %2873 = vrot.lane.b32.xlu0 %v1126, 28
        %v2874 = vpop.permute.xlu0 %2873
        %2875 = vrot.lane.b32.xlu0 %v1127, 28
        %v2876 = vpop.permute.xlu0 %2875
        %2877 = vrot.lane.b32.xlu0 %v1128, 28
        %v2878 = vpop.permute.xlu0 %2877
        %2879 = vrot.lane.b32.xlu0 %v1129, 28
        %v2880 = vpop.permute.xlu0 %2879
        %2881 = vrot.lane.b32.xlu0 %v1130, 28
        %v2882 = vpop.permute.xlu0 %2881
        %2883 = vrot.lane.b32.xlu0 %v1131, 28
        %v2884 = vpop.permute.xlu0 %2883
        %2885 = vrot.lane.b32.xlu0 %v1132, 28
        %v2886 = vpop.permute.xlu0 %2885
        %2887 = vrot.lane.b32.xlu0 %v1133, 28
        %v2888 = vpop.permute.xlu0 %2887
        %2889 = vrot.lane.b32.xlu0 %v1134, 28
        %v2890 = vpop.permute.xlu0 %2889
        %2891 = vrot.lane.b32.xlu0 %v1135, 28
        %v2892 = vpop.permute.xlu0 %2891
        %2893 = vrot.lane.b32.xlu0 %v1136, 28
        %v2894 = vpop.permute.xlu0 %2893
        %2895 = vrot.lane.b32.xlu0 %v1137, 28
        %v2896 = vpop.permute.xlu0 %2895
        %2897 = vrot.lane.b32.xlu0 %v1138, 28
        %v2898 = vpop.permute.xlu0 %2897
        %2899 = vrot.lane.b32.xlu0 %v1139, 28
        %v2900 = vpop.permute.xlu0 %2899
        %2901 = vrot.lane.b32.xlu0 %v1140, 28
        %v2902 = vpop.permute.xlu0 %2901
        %2903 = vrot.lane.b32.xlu0 %v1141, 28
        %v2904 = vpop.permute.xlu0 %2903
        %2905 = vrot.lane.b32.xlu0 %v1142, 28
        %v2906 = vpop.permute.xlu0 %2905
        %2907 = vrot.lane.b32.xlu0 %v1143, 28
        %v2908 = vpop.permute.xlu0 %2907
        %2909 = vrot.lane.b32.xlu0 %v1144, 28
        %v2910 = vpop.permute.xlu0 %2909
        %2911 = vrot.lane.b32.xlu0 %v1145, 28
        %v2912 = vpop.permute.xlu0 %2911
        %2913 = vrot.lane.b32.xlu0 %v1146, 28
        %v2914 = vpop.permute.xlu0 %2913
        %2915 = vrot.lane.b32.xlu0 %v1147, 28
        %v2916 = vpop.permute.xlu0 %2915
        %2917 = vrot.lane.b32.xlu0 %v1148, 28
        %v2918 = vpop.permute.xlu0 %2917
        %2919 = vrot.lane.b32.xlu0 %v1149, 28
        %v2920 = vpop.permute.xlu0 %2919
        %2921 = vrot.lane.b32.xlu0 %v1150, 28
        %v2922 = vpop.permute.xlu0 %2921
        %2923 = vrot.lane.b32.xlu0 %v1151, 28
        %v2924 = vpop.permute.xlu0 %2923
        %2925 = vrot.lane.b32.xlu0 %v1152, 28
        %v2926 = vpop.permute.xlu0 %2925
        %2927 = vrot.lane.b32.xlu0 %v1153, 28
        %v2928 = vpop.permute.xlu0 %2927
        %2929 = vrot.lane.b32.xlu0 %v1154, 28
        %v2930 = vpop.permute.xlu0 %2929
        %2931 = vrot.lane.b32.xlu0 %v1155, 28
        %v2932 = vpop.permute.xlu0 %2931
        %2933 = vrot.lane.b32.xlu0 %v1156, 28
        %v2934 = vpop.permute.xlu0 %2933
        %2935 = vrot.lane.b32.xlu0 %v1157, 28
        %v2936 = vpop.permute.xlu0 %2935
        %2937 = vrot.lane.b32.xlu0 %v1158, 28
        %v2938 = vpop.permute.xlu0 %2937
        %2939 = vrot.lane.b32.xlu0 %v1159, 28
        %v2940 = vpop.permute.xlu0 %2939
        %2941 = vrot.lane.b32.xlu0 %v1160, 28
        %v2942 = vpop.permute.xlu0 %2941
        %2943 = vrot.lane.b32.xlu0 %v1161, 28
        %v2944 = vpop.permute.xlu0 %2943
        %2945 = vrot.lane.b32.xlu0 %v1162, 28
        %v2946 = vpop.permute.xlu0 %2945
        %2947 = vrot.lane.b32.xlu0 %v1163, 28
        %v2948 = vpop.permute.xlu0 %2947
        %2949 = vrot.lane.b32.xlu0 %v1164, 28
        %v2950 = vpop.permute.xlu0 %2949
        %2951 = vrot.lane.b32.xlu0 %v1165, 28
        %v2952 = vpop.permute.xlu0 %2951
        %2953 = vrot.lane.b32.xlu0 %v1166, 28
        %v2954 = vpop.permute.xlu0 %2953
        %2955 = vrot.lane.b32.xlu0 %v1167, 28
        %v2956 = vpop.permute.xlu0 %2955
        %2957 = vrot.lane.b32.xlu0 %v1168, 28
        %v2958 = vpop.permute.xlu0 %2957
        %2959 = vrot.lane.b32.xlu0 %v1169, 28
        %v2960 = vpop.permute.xlu0 %2959
        %2961 = vrot.lane.b32.xlu0 %v1170, 28
        %v2962 = vpop.permute.xlu0 %2961
        %2963 = vrot.lane.b32.xlu0 %v1171, 28
        %v2964 = vpop.permute.xlu0 %2963
        %2965 = vrot.lane.b32.xlu0 %v1172, 28
        %v2966 = vpop.permute.xlu0 %2965
        %3095 = vrot.lane.b32.xlu0 %v1175, 32
        %v3096 = vpop.permute.xlu0 %3095
        %3097 = vrot.lane.b32.xlu0 %v1176, 32
        %v3098 = vpop.permute.xlu0 %3097
        %3099 = vrot.lane.b32.xlu0 %v1177, 32
        %v3100 = vpop.permute.xlu0 %3099
        %3101 = vrot.lane.b32.xlu0 %v1178, 32
        %v3102 = vpop.permute.xlu0 %3101
        %3103 = vrot.lane.b32.xlu0 %v1179, 32
        %v3104 = vpop.permute.xlu0 %3103
        %3105 = vrot.lane.b32.xlu0 %v1180, 32
        %v3106 = vpop.permute.xlu0 %3105
        %3107 = vrot.lane.b32.xlu0 %v1181, 32
        %v3108 = vpop.permute.xlu0 %3107
        %3109 = vrot.lane.b32.xlu0 %v1182, 32
        %v3110 = vpop.permute.xlu0 %3109
        %3111 = vrot.lane.b32.xlu0 %v1183, 32
        %v3112 = vpop.permute.xlu0 %3111
        %3113 = vrot.lane.b32.xlu0 %v1184, 32
        %v3114 = vpop.permute.xlu0 %3113
        %3115 = vrot.lane.b32.xlu0 %v1185, 32
        %v3116 = vpop.permute.xlu0 %3115
        %3117 = vrot.lane.b32.xlu0 %v1186, 32
        %v3118 = vpop.permute.xlu0 %3117
        %3119 = vrot.lane.b32.xlu0 %v1187, 32
        %v3120 = vpop.permute.xlu0 %3119
        %3121 = vrot.lane.b32.xlu0 %v1188, 32
        %v3122 = vpop.permute.xlu0 %3121
        %3123 = vrot.lane.b32.xlu0 %v1189, 32
        %v3124 = vpop.permute.xlu0 %3123
        %3125 = vrot.lane.b32.xlu0 %v1190, 32
        %v3126 = vpop.permute.xlu0 %3125
        %3127 = vrot.lane.b32.xlu0 %v1191, 32
        %v3128 = vpop.permute.xlu0 %3127
        %3129 = vrot.lane.b32.xlu0 %v1192, 32
        %v3130 = vpop.permute.xlu0 %3129
        %3131 = vrot.lane.b32.xlu0 %v1193, 32
        %v3132 = vpop.permute.xlu0 %3131
        %3133 = vrot.lane.b32.xlu0 %v1194, 32
        %v3134 = vpop.permute.xlu0 %3133
        %3135 = vrot.lane.b32.xlu0 %v1195, 32
        %v3136 = vpop.permute.xlu0 %3135
        %3137 = vrot.lane.b32.xlu0 %v1196, 32
        %v3138 = vpop.permute.xlu0 %3137
        %3139 = vrot.lane.b32.xlu0 %v1197, 32
        %v3140 = vpop.permute.xlu0 %3139
        %3141 = vrot.lane.b32.xlu0 %v1198, 32
        %v3142 = vpop.permute.xlu0 %3141
        %3143 = vrot.lane.b32.xlu0 %v1199, 32
        %v3144 = vpop.permute.xlu0 %3143
        %3145 = vrot.lane.b32.xlu0 %v1200, 32
        %v3146 = vpop.permute.xlu0 %3145
        %3147 = vrot.lane.b32.xlu0 %v1201, 32
        %v3148 = vpop.permute.xlu0 %3147
        %3149 = vrot.lane.b32.xlu0 %v1202, 32
        %v3150 = vpop.permute.xlu0 %3149
        %3151 = vrot.lane.b32.xlu0 %v1203, 32
        %v3152 = vpop.permute.xlu0 %3151
        %3153 = vrot.lane.b32.xlu0 %v1204, 32
        %v3154 = vpop.permute.xlu0 %3153
        %3155 = vrot.lane.b32.xlu0 %v1205, 32
        %v3156 = vpop.permute.xlu0 %3155
        %3157 = vrot.lane.b32.xlu0 %v1206, 32
        %v3158 = vpop.permute.xlu0 %3157
        %3159 = vrot.lane.b32.xlu0 %v1207, 32
        %v3160 = vpop.permute.xlu0 %3159
        %3161 = vrot.lane.b32.xlu0 %v1208, 32
        %v3162 = vpop.permute.xlu0 %3161
        %3163 = vrot.lane.b32.xlu0 %v1209, 32
        %v3164 = vpop.permute.xlu0 %3163
        %3165 = vrot.lane.b32.xlu0 %v1210, 32
        %v3166 = vpop.permute.xlu0 %3165
        %3167 = vrot.lane.b32.xlu0 %v1211, 32
        %v3168 = vpop.permute.xlu0 %3167
        %3169 = vrot.lane.b32.xlu0 %v1212, 32
        %v3170 = vpop.permute.xlu0 %3169
        %3171 = vrot.lane.b32.xlu0 %v1213, 32
        %v3172 = vpop.permute.xlu0 %3171
        %3173 = vrot.lane.b32.xlu0 %v1214, 32
        %v3174 = vpop.permute.xlu0 %3173
        %3175 = vrot.lane.b32.xlu0 %v1215, 32
        %v3176 = vpop.permute.xlu0 %3175
        %3177 = vrot.lane.b32.xlu0 %v1216, 32
        %v3178 = vpop.permute.xlu0 %3177
        %3179 = vrot.lane.b32.xlu0 %v1217, 32
        %v3180 = vpop.permute.xlu0 %3179
        %3181 = vrot.lane.b32.xlu0 %v1218, 32
        %v3182 = vpop.permute.xlu0 %3181
        %3183 = vrot.lane.b32.xlu0 %v1219, 32
        %v3184 = vpop.permute.xlu0 %3183
        %3185 = vrot.lane.b32.xlu0 %v1220, 32
        %v3186 = vpop.permute.xlu0 %3185
        %3187 = vrot.lane.b32.xlu0 %v1221, 32
        %v3188 = vpop.permute.xlu0 %3187
        %3189 = vrot.lane.b32.xlu0 %v1222, 32
        %v3190 = vpop.permute.xlu0 %3189
        %3191 = vrot.lane.b32.xlu0 %v1223, 32
        %v3192 = vpop.permute.xlu0 %3191
        %3193 = vrot.lane.b32.xlu0 %v1224, 32
        %v3194 = vpop.permute.xlu0 %3193
        %3195 = vrot.lane.b32.xlu0 %v1225, 32
        %v3196 = vpop.permute.xlu0 %3195
        %3197 = vrot.lane.b32.xlu0 %v1226, 32
        %v3198 = vpop.permute.xlu0 %3197
        %3199 = vrot.lane.b32.xlu0 %v1227, 32
        %v3200 = vpop.permute.xlu0 %3199
        %3201 = vrot.lane.b32.xlu0 %v1228, 32
        %v3202 = vpop.permute.xlu0 %3201
        %3203 = vrot.lane.b32.xlu0 %v1229, 32
        %v3204 = vpop.permute.xlu0 %3203
        %3205 = vrot.lane.b32.xlu0 %v1230, 32
        %v3206 = vpop.permute.xlu0 %3205
        %3207 = vrot.lane.b32.xlu0 %v1231, 32
        %v3208 = vpop.permute.xlu0 %3207
        %3209 = vrot.lane.b32.xlu0 %v1232, 32
        %v3210 = vpop.permute.xlu0 %3209
        %3211 = vrot.lane.b32.xlu0 %v1233, 32
        %v3212 = vpop.permute.xlu0 %3211
        %3213 = vrot.lane.b32.xlu0 %v1234, 32
        %v3214 = vpop.permute.xlu0 %3213
        %3215 = vrot.lane.b32.xlu0 %v1235, 32
        %v3216 = vpop.permute.xlu0 %3215
        %3217 = vrot.lane.b32.xlu0 %v1236, 32
        %v3218 = vpop.permute.xlu0 %3217
        %3219 = vrot.lane.b32.xlu0 %v1237, 32
        %v3220 = vpop.permute.xlu0 %3219
        %3221 = vrot.lane.b32.xlu0 %v1238, 32
        %v3222 = vpop.permute.xlu0 %3221
        %vm3287 = vcmask 31744
        %v3288 = vsel %vm3287, %v647, %v1304
        %v3289 = vsel %vm3287, %v648, %v1306
        %v3290 = vsel %vm3287, %v649, %v1308
        %v3291 = vsel %vm3287, %v650, %v1310
        %v3292 = vsel %vm3287, %v651, %v1312
        %v3293 = vsel %vm3287, %v652, %v1314
        %v3294 = vsel %vm3287, %v653, %v1316
        %v3295 = vsel %vm3287, %v654, %v1318
        %v3296 = vsel %vm3287, %v655, %v1320
        %v3297 = vsel %vm3287, %v656, %v1322
        %v3298 = vsel %vm3287, %v657, %v1324
        %v3299 = vsel %vm3287, %v658, %v1326
        %v3300 = vsel %vm3287, %v659, %v1328
        %v3301 = vsel %vm3287, %v660, %v1330
        %v3302 = vsel %vm3287, %v661, %v1332
        %v3303 = vsel %vm3287, %v662, %v1334
        %v3304 = vsel %vm3287, %v663, %v1336
        %v3305 = vsel %vm3287, %v664, %v1338
        %v3306 = vsel %vm3287, %v665, %v1340
        %v3307 = vsel %vm3287, %v666, %v1342
        %v3308 = vsel %vm3287, %v667, %v1344
        %v3309 = vsel %vm3287, %v668, %v1346
        %v3310 = vsel %vm3287, %v669, %v1348
        %v3311 = vsel %vm3287, %v670, %v1350
        %v3312 = vsel %vm3287, %v671, %v1352
        %v3313 = vsel %vm3287, %v672, %v1354
        %v3314 = vsel %vm3287, %v673, %v1356
        %v3315 = vsel %vm3287, %v674, %v1358
        %v3316 = vsel %vm3287, %v675, %v1360
        %v3317 = vsel %vm3287, %v676, %v1362
        %v3318 = vsel %vm3287, %v677, %v1364
        %v3319 = vsel %vm3287, %v678, %v1366
        %v3320 = vsel %vm3287, %v679, %v1368
        %v3321 = vsel %vm3287, %v680, %v1370
        %v3322 = vsel %vm3287, %v681, %v1372
        %v3323 = vsel %vm3287, %v682, %v1374
        %v3324 = vsel %vm3287, %v683, %v1376
        %v3325 = vsel %vm3287, %v684, %v1378
        %v3326 = vsel %vm3287, %v685, %v1380
        %v3327 = vsel %vm3287, %v686, %v1382
        %v3328 = vsel %vm3287, %v687, %v1384
        %v3329 = vsel %vm3287, %v688, %v1386
        %v3330 = vsel %vm3287, %v689, %v1388
        %v3331 = vsel %vm3287, %v690, %v1390
        %v3332 = vsel %vm3287, %v691, %v1392
        %v3333 = vsel %vm3287, %v692, %v1394
        %v3334 = vsel %vm3287, %v693, %v1396
        %v3335 = vsel %vm3287, %v694, %v1398
        %v3336 = vsel %vm3287, %v695, %v1400
        %v3337 = vsel %vm3287, %v696, %v1402
        %v3338 = vsel %vm3287, %v697, %v1404
        %v3339 = vsel %vm3287, %v698, %v1406
        %v3340 = vsel %vm3287, %v699, %v1408
        %v3341 = vsel %vm3287, %v700, %v1410
        %v3342 = vsel %vm3287, %v701, %v1412
        %v3343 = vsel %vm3287, %v702, %v1414
        %v3344 = vsel %vm3287, %v703, %v1416
        %v3345 = vsel %vm3287, %v704, %v1418
        %v3346 = vsel %vm3287, %v705, %v1420
        %v3347 = vsel %vm3287, %v706, %v1422
        %v3348 = vsel %vm3287, %v707, %v1424
        %v3349 = vsel %vm3287, %v708, %v1426
        %v3350 = vsel %vm3287, %v709, %v1428
        %v3351 = vsel %vm3287, %v710, %v1430
        %vm3352 = vcmask 64512
        %v3353 = vsel %vm3352, %v3288, %v1560
        %v3354 = vsel %vm3352, %v3289, %v1562
        %v3355 = vsel %vm3352, %v3290, %v1564
        %v3356 = vsel %vm3352, %v3291, %v1566
        %v3357 = vsel %vm3352, %v3292, %v1568
        %v3358 = vsel %vm3352, %v3293, %v1570
        %v3359 = vsel %vm3352, %v3294, %v1572
        %v3360 = vsel %vm3352, %v3295, %v1574
        %v3361 = vsel %vm3352, %v3296, %v1576
        %v3362 = vsel %vm3352, %v3297, %v1578
        %v3363 = vsel %vm3352, %v3298, %v1580
        %v3364 = vsel %vm3352, %v3299, %v1582
        %v3365 = vsel %vm3352, %v3300, %v1584
        %v3366 = vsel %vm3352, %v3301, %v1586
        %v3367 = vsel %vm3352, %v3302, %v1588
        %v3368 = vsel %vm3352, %v3303, %v1590
        %v3369 = vsel %vm3352, %v3304, %v1592
        %v3370 = vsel %vm3352, %v3305, %v1594
        %v3371 = vsel %vm3352, %v3306, %v1596
        %v3372 = vsel %vm3352, %v3307, %v1598
        %v3373 = vsel %vm3352, %v3308, %v1600
        %v3374 = vsel %vm3352, %v3309, %v1602
        %v3375 = vsel %vm3352, %v3310, %v1604
        %v3376 = vsel %vm3352, %v3311, %v1606
        %v3377 = vsel %vm3352, %v3312, %v1608
        %v3378 = vsel %vm3352, %v3313, %v1610
        %v3379 = vsel %vm3352, %v3314, %v1612
        %v3380 = vsel %vm3352, %v3315, %v1614
        %v3381 = vsel %vm3352, %v3316, %v1616
        %v3382 = vsel %vm3352, %v3317, %v1618
        %v3383 = vsel %vm3352, %v3318, %v1620
        %v3384 = vsel %vm3352, %v3319, %v1622
        %v3385 = vsel %vm3352, %v3320, %v1624
        %v3386 = vsel %vm3352, %v3321, %v1626
        %v3387 = vsel %vm3352, %v3322, %v1628
        %v3388 = vsel %vm3352, %v3323, %v1630
        %v3389 = vsel %vm3352, %v3324, %v1632
        %v3390 = vsel %vm3352, %v3325, %v1634
        %v3391 = vsel %vm3352, %v3326, %v1636
        %v3392 = vsel %vm3352, %v3327, %v1638
        %v3393 = vsel %vm3352, %v3328, %v1640
        %v3394 = vsel %vm3352, %v3329, %v1642
        %v3395 = vsel %vm3352, %v3330, %v1644
        %v3396 = vsel %vm3352, %v3331, %v1646
        %v3397 = vsel %vm3352, %v3332, %v1648
        %v3398 = vsel %vm3352, %v3333, %v1650
        %v3399 = vsel %vm3352, %v3334, %v1652
        %v3400 = vsel %vm3352, %v3335, %v1654
        %v3401 = vsel %vm3352, %v3336, %v1656
        %v3402 = vsel %vm3352, %v3337, %v1658
        %v3403 = vsel %vm3352, %v3338, %v1660
        %v3404 = vsel %vm3352, %v3339, %v1662
        %v3405 = vsel %vm3352, %v3340, %v1664
        %v3406 = vsel %vm3352, %v3341, %v1666
        %v3407 = vsel %vm3352, %v3342, %v1668
        %v3408 = vsel %vm3352, %v3343, %v1670
        %v3409 = vsel %vm3352, %v3344, %v1672
        %v3410 = vsel %vm3352, %v3345, %v1674
        %v3411 = vsel %vm3352, %v3346, %v1676
        %v3412 = vsel %vm3352, %v3347, %v1678
        %v3413 = vsel %vm3352, %v3348, %v1680
        %v3414 = vsel %vm3352, %v3349, %v1682
        %v3415 = vsel %vm3352, %v3350, %v1684
        %v3416 = vsel %vm3352, %v3351, %v1686
        %vm3417 = vcmask 97280
        %v3418 = vsel %vm3417, %v3353, %v1816
        %v3419 = vsel %vm3417, %v3354, %v1818
        %v3420 = vsel %vm3417, %v3355, %v1820
        %v3421 = vsel %vm3417, %v3356, %v1822
        %v3422 = vsel %vm3417, %v3357, %v1824
        %v3423 = vsel %vm3417, %v3358, %v1826
        %v3424 = vsel %vm3417, %v3359, %v1828
        %v3425 = vsel %vm3417, %v3360, %v1830
        %v3426 = vsel %vm3417, %v3361, %v1832
        %v3427 = vsel %vm3417, %v3362, %v1834
        %v3428 = vsel %vm3417, %v3363, %v1836
        %v3429 = vsel %vm3417, %v3364, %v1838
        %v3430 = vsel %vm3417, %v3365, %v1840
        %v3431 = vsel %vm3417, %v3366, %v1842
        %v3432 = vsel %vm3417, %v3367, %v1844
        %v3433 = vsel %vm3417, %v3368, %v1846
        %v3434 = vsel %vm3417, %v3369, %v1848
        %v3435 = vsel %vm3417, %v3370, %v1850
        %v3436 = vsel %vm3417, %v3371, %v1852
        %v3437 = vsel %vm3417, %v3372, %v1854
        %v3438 = vsel %vm3417, %v3373, %v1856
        %v3439 = vsel %vm3417, %v3374, %v1858
        %v3440 = vsel %vm3417, %v3375, %v1860
        %v3441 = vsel %vm3417, %v3376, %v1862
        %v3442 = vsel %vm3417, %v3377, %v1864
        %v3443 = vsel %vm3417, %v3378, %v1866
        %v3444 = vsel %vm3417, %v3379, %v1868
        %v3445 = vsel %vm3417, %v3380, %v1870
        %v3446 = vsel %vm3417, %v3381, %v1872
        %v3447 = vsel %vm3417, %v3382, %v1874
        %v3448 = vsel %vm3417, %v3383, %v1876
        %v3449 = vsel %vm3417, %v3384, %v1878
        %v3450 = vsel %vm3417, %v3385, %v1880
        %v3451 = vsel %vm3417, %v3386, %v1882
        %v3452 = vsel %vm3417, %v3387, %v1884
        %v3453 = vsel %vm3417, %v3388, %v1886
        %v3454 = vsel %vm3417, %v3389, %v1888
        %v3455 = vsel %vm3417, %v3390, %v1890
        %v3456 = vsel %vm3417, %v3391, %v1892
        %v3457 = vsel %vm3417, %v3392, %v1894
        %v3458 = vsel %vm3417, %v3393, %v1896
        %v3459 = vsel %vm3417, %v3394, %v1898
        %v3460 = vsel %vm3417, %v3395, %v1900
        %v3461 = vsel %vm3417, %v3396, %v1902
        %v3462 = vsel %vm3417, %v3397, %v1904
        %v3463 = vsel %vm3417, %v3398, %v1906
        %v3464 = vsel %vm3417, %v3399, %v1908
        %v3465 = vsel %vm3417, %v3400, %v1910
        %v3466 = vsel %vm3417, %v3401, %v1912
        %v3467 = vsel %vm3417, %v3402, %v1914
        %v3468 = vsel %vm3417, %v3403, %v1916
        %v3469 = vsel %vm3417, %v3404, %v1918
        %v3470 = vsel %vm3417, %v3405, %v1920
        %v3471 = vsel %vm3417, %v3406, %v1922
        %v3472 = vsel %vm3417, %v3407, %v1924
        %v3473 = vsel %vm3417, %v3408, %v1926
        %v3474 = vsel %vm3417, %v3409, %v1928
        %v3475 = vsel %vm3417, %v3410, %v1930
        %v3476 = vsel %vm3417, %v3411, %v1932
        %v3477 = vsel %vm3417, %v3412, %v1934
        %v3478 = vsel %vm3417, %v3413, %v1936
        %v3479 = vsel %vm3417, %v3414, %v1938
        %v3480 = vsel %vm3417, %v3415, %v1940
        %v3481 = vsel %vm3417, %v3416, %v1942
        %vm3482 = vcmask 130048
        %v3483 = vsel %vm3482, %v3418, %v2072
        %v3484 = vsel %vm3482, %v3419, %v2074
        %v3485 = vsel %vm3482, %v3420, %v2076
        %v3486 = vsel %vm3482, %v3421, %v2078
        %v3487 = vsel %vm3482, %v3422, %v2080
        %v3488 = vsel %vm3482, %v3423, %v2082
        %v3489 = vsel %vm3482, %v3424, %v2084
        %v3490 = vsel %vm3482, %v3425, %v2086
        %v3491 = vsel %vm3482, %v3426, %v2088
        %v3492 = vsel %vm3482, %v3427, %v2090
        %v3493 = vsel %vm3482, %v3428, %v2092
        %v3494 = vsel %vm3482, %v3429, %v2094
        %v3495 = vsel %vm3482, %v3430, %v2096
        %v3496 = vsel %vm3482, %v3431, %v2098
        %v3497 = vsel %vm3482, %v3432, %v2100
        %v3498 = vsel %vm3482, %v3433, %v2102
        %v3499 = vsel %vm3482, %v3434, %v2104
        %v3500 = vsel %vm3482, %v3435, %v2106
        %v3501 = vsel %vm3482, %v3436, %v2108
        %v3502 = vsel %vm3482, %v3437, %v2110
        %v3503 = vsel %vm3482, %v3438, %v2112
        %v3504 = vsel %vm3482, %v3439, %v2114
        %v3505 = vsel %vm3482, %v3440, %v2116
        %v3506 = vsel %vm3482, %v3441, %v2118
        %v3507 = vsel %vm3482, %v3442, %v2120
        %v3508 = vsel %vm3482, %v3443, %v2122
        %v3509 = vsel %vm3482, %v3444, %v2124
        %v3510 = vsel %vm3482, %v3445, %v2126
        %v3511 = vsel %vm3482, %v3446, %v2128
        %v3512 = vsel %vm3482, %v3447, %v2130
        %v3513 = vsel %vm3482, %v3448, %v2132
        %v3514 = vsel %vm3482, %v3449, %v2134
        %v3515 = vsel %vm3482, %v3450, %v2136
        %v3516 = vsel %vm3482, %v3451, %v2138
        %v3517 = vsel %vm3482, %v3452, %v2140
        %v3518 = vsel %vm3482, %v3453, %v2142
        %v3519 = vsel %vm3482, %v3454, %v2144
        %v3520 = vsel %vm3482, %v3455, %v2146
        %v3521 = vsel %vm3482, %v3456, %v2148
        %v3522 = vsel %vm3482, %v3457, %v2150
        %v3523 = vsel %vm3482, %v3458, %v2152
        %v3524 = vsel %vm3482, %v3459, %v2154
        %v3525 = vsel %vm3482, %v3460, %v2156
        %v3526 = vsel %vm3482, %v3461, %v2158
        %v3527 = vsel %vm3482, %v3462, %v2160
        %v3528 = vsel %vm3482, %v3463, %v2162
        %v3529 = vsel %vm3482, %v3464, %v2164
        %v3530 = vsel %vm3482, %v3465, %v2166
        %v3531 = vsel %vm3482, %v3466, %v2168
        %v3532 = vsel %vm3482, %v3467, %v2170
        %v3533 = vsel %vm3482, %v3468, %v2172
        %v3534 = vsel %vm3482, %v3469, %v2174
        %v3535 = vsel %vm3482, %v3470, %v2176
        %v3536 = vsel %vm3482, %v3471, %v2178
        %v3537 = vsel %vm3482, %v3472, %v2180
        %v3538 = vsel %vm3482, %v3473, %v2182
        %v3539 = vsel %vm3482, %v3474, %v2184
        %v3540 = vsel %vm3482, %v3475, %v2186
        %v3541 = vsel %vm3482, %v3476, %v2188
        %v3542 = vsel %vm3482, %v3477, %v2190
        %v3543 = vsel %vm3482, %v3478, %v2192
        %v3544 = vsel %vm3482, %v3479, %v2194
        %v3545 = vsel %vm3482, %v3480, %v2196
        %v3546 = vsel %vm3482, %v3481, %v2198
        %vm3547 = vcmask 162816
        %v3548 = vsel %vm3547, %v3483, %v2328
        %v3549 = vsel %vm3547, %v3484, %v2330
        %v3550 = vsel %vm3547, %v3485, %v2332
        %v3551 = vsel %vm3547, %v3486, %v2334
        %v3552 = vsel %vm3547, %v3487, %v2336
        %v3553 = vsel %vm3547, %v3488, %v2338
        %v3554 = vsel %vm3547, %v3489, %v2340
        %v3555 = vsel %vm3547, %v3490, %v2342
        %v3556 = vsel %vm3547, %v3491, %v2344
        %v3557 = vsel %vm3547, %v3492, %v2346
        %v3558 = vsel %vm3547, %v3493, %v2348
        %v3559 = vsel %vm3547, %v3494, %v2350
        %v3560 = vsel %vm3547, %v3495, %v2352
        %v3561 = vsel %vm3547, %v3496, %v2354
        %v3562 = vsel %vm3547, %v3497, %v2356
        %v3563 = vsel %vm3547, %v3498, %v2358
        %v3564 = vsel %vm3547, %v3499, %v2360
        %v3565 = vsel %vm3547, %v3500, %v2362
        %v3566 = vsel %vm3547, %v3501, %v2364
        %v3567 = vsel %vm3547, %v3502, %v2366
        %v3568 = vsel %vm3547, %v3503, %v2368
        %v3569 = vsel %vm3547, %v3504, %v2370
        %v3570 = vsel %vm3547, %v3505, %v2372
        %v3571 = vsel %vm3547, %v3506, %v2374
        %v3572 = vsel %vm3547, %v3507, %v2376
        %v3573 = vsel %vm3547, %v3508, %v2378
        %v3574 = vsel %vm3547, %v3509, %v2380
        %v3575 = vsel %vm3547, %v3510, %v2382
        %v3576 = vsel %vm3547, %v3511, %v2384
        %v3577 = vsel %vm3547, %v3512, %v2386
        %v3578 = vsel %vm3547, %v3513, %v2388
        %v3579 = vsel %vm3547, %v3514, %v2390
        %v3580 = vsel %vm3547, %v3515, %v2392
        %v3581 = vsel %vm3547, %v3516, %v2394
        %v3582 = vsel %vm3547, %v3517, %v2396
        %v3583 = vsel %vm3547, %v3518, %v2398
        %v3584 = vsel %vm3547, %v3519, %v2400
        %v3585 = vsel %vm3547, %v3520, %v2402
        %v3586 = vsel %vm3547, %v3521, %v2404
        %v3587 = vsel %vm3547, %v3522, %v2406
        %v3588 = vsel %vm3547, %v3523, %v2408
        %v3589 = vsel %vm3547, %v3524, %v2410
        %v3590 = vsel %vm3547, %v3525, %v2412
        %v3591 = vsel %vm3547, %v3526, %v2414
        %v3592 = vsel %vm3547, %v3527, %v2416
        %v3593 = vsel %vm3547, %v3528, %v2418
        %v3594 = vsel %vm3547, %v3529, %v2420
        %v3595 = vsel %vm3547, %v3530, %v2422
        %v3596 = vsel %vm3547, %v3531, %v2424
        %v3597 = vsel %vm3547, %v3532, %v2426
        %v3598 = vsel %vm3547, %v3533, %v2428
        %v3599 = vsel %vm3547, %v3534, %v2430
        %v3600 = vsel %vm3547, %v3535, %v2432
        %v3601 = vsel %vm3547, %v3536, %v2434
        %v3602 = vsel %vm3547, %v3537, %v2436
        %v3603 = vsel %vm3547, %v3538, %v2438
        %v3604 = vsel %vm3547, %v3539, %v2440
        %v3605 = vsel %vm3547, %v3540, %v2442
        %v3606 = vsel %vm3547, %v3541, %v2444
        %v3607 = vsel %vm3547, %v3542, %v2446
        %v3608 = vsel %vm3547, %v3543, %v2448
        %v3609 = vsel %vm3547, %v3544, %v2450
        %v3610 = vsel %vm3547, %v3545, %v2452
        %v3611 = vsel %vm3547, %v3546, %v2454
        %vm3612 = vcmask 195584
        %v3613 = vsel %vm3612, %v3548, %v2584
        %v3614 = vsel %vm3612, %v3549, %v2586
        %v3615 = vsel %vm3612, %v3550, %v2588
        %v3616 = vsel %vm3612, %v3551, %v2590
        %v3617 = vsel %vm3612, %v3552, %v2592
        %v3618 = vsel %vm3612, %v3553, %v2594
        %v3619 = vsel %vm3612, %v3554, %v2596
        %v3620 = vsel %vm3612, %v3555, %v2598
        %v3621 = vsel %vm3612, %v3556, %v2600
        %v3622 = vsel %vm3612, %v3557, %v2602
        %v3623 = vsel %vm3612, %v3558, %v2604
        %v3624 = vsel %vm3612, %v3559, %v2606
        %v3625 = vsel %vm3612, %v3560, %v2608
        %v3626 = vsel %vm3612, %v3561, %v2610
        %v3627 = vsel %vm3612, %v3562, %v2612
        %v3628 = vsel %vm3612, %v3563, %v2614
        %v3629 = vsel %vm3612, %v3564, %v2616
        %v3630 = vsel %vm3612, %v3565, %v2618
        %v3631 = vsel %vm3612, %v3566, %v2620
        %v3632 = vsel %vm3612, %v3567, %v2622
        %v3633 = vsel %vm3612, %v3568, %v2624
        %v3634 = vsel %vm3612, %v3569, %v2626
        %v3635 = vsel %vm3612, %v3570, %v2628
        %v3636 = vsel %vm3612, %v3571, %v2630
        %v3637 = vsel %vm3612, %v3572, %v2632
        %v3638 = vsel %vm3612, %v3573, %v2634
        %v3639 = vsel %vm3612, %v3574, %v2636
        %v3640 = vsel %vm3612, %v3575, %v2638
        %v3641 = vsel %vm3612, %v3576, %v2640
        %v3642 = vsel %vm3612, %v3577, %v2642
        %v3643 = vsel %vm3612, %v3578, %v2644
        %v3644 = vsel %vm3612, %v3579, %v2646
        %v3645 = vsel %vm3612, %v3580, %v2648
        %v3646 = vsel %vm3612, %v3581, %v2650
        %v3647 = vsel %vm3612, %v3582, %v2652
        %v3648 = vsel %vm3612, %v3583, %v2654
        %v3649 = vsel %vm3612, %v3584, %v2656
        %v3650 = vsel %vm3612, %v3585, %v2658
        %v3651 = vsel %vm3612, %v3586, %v2660
        %v3652 = vsel %vm3612, %v3587, %v2662
        %v3653 = vsel %vm3612, %v3588, %v2664
        %v3654 = vsel %vm3612, %v3589, %v2666
        %v3655 = vsel %vm3612, %v3590, %v2668
        %v3656 = vsel %vm3612, %v3591, %v2670
        %v3657 = vsel %vm3612, %v3592, %v2672
        %v3658 = vsel %vm3612, %v3593, %v2674
        %v3659 = vsel %vm3612, %v3594, %v2676
        %v3660 = vsel %vm3612, %v3595, %v2678
        %v3661 = vsel %vm3612, %v3596, %v2680
        %v3662 = vsel %vm3612, %v3597, %v2682
        %v3663 = vsel %vm3612, %v3598, %v2684
        %v3664 = vsel %vm3612, %v3599, %v2686
        %v3665 = vsel %vm3612, %v3600, %v2688
        %v3666 = vsel %vm3612, %v3601, %v2690
        %v3667 = vsel %vm3612, %v3602, %v2692
        %v3668 = vsel %vm3612, %v3603, %v2694
        %v3669 = vsel %vm3612, %v3604, %v2696
        %v3670 = vsel %vm3612, %v3605, %v2698
        %v3671 = vsel %vm3612, %v3606, %v2700
        %v3672 = vsel %vm3612, %v3607, %v2702
        %v3673 = vsel %vm3612, %v3608, %v2704
        %v3674 = vsel %vm3612, %v3609, %v2706
        %v3675 = vsel %vm3612, %v3610, %v2708
        %v3676 = vsel %vm3612, %v3611, %v2710
        %vm3677 = vcmask 228352
        %v3678 = vsel %vm3677, %v3613, %v2840
        %v3679 = vsel %vm3677, %v3614, %v2842
        %v3680 = vsel %vm3677, %v3615, %v2844
        %v3681 = vsel %vm3677, %v3616, %v2846
        %v3682 = vsel %vm3677, %v3617, %v2848
        %v3683 = vsel %vm3677, %v3618, %v2850
        %v3684 = vsel %vm3677, %v3619, %v2852
        %v3685 = vsel %vm3677, %v3620, %v2854
        %v3686 = vsel %vm3677, %v3621, %v2856
        %v3687 = vsel %vm3677, %v3622, %v2858
        %v3688 = vsel %vm3677, %v3623, %v2860
        %v3689 = vsel %vm3677, %v3624, %v2862
        %v3690 = vsel %vm3677, %v3625, %v2864
        %v3691 = vsel %vm3677, %v3626, %v2866
        %v3692 = vsel %vm3677, %v3627, %v2868
        %v3693 = vsel %vm3677, %v3628, %v2870
        %v3694 = vsel %vm3677, %v3629, %v2872
        %v3695 = vsel %vm3677, %v3630, %v2874
        %v3696 = vsel %vm3677, %v3631, %v2876
        %v3697 = vsel %vm3677, %v3632, %v2878
        %v3698 = vsel %vm3677, %v3633, %v2880
        %v3699 = vsel %vm3677, %v3634, %v2882
        %v3700 = vsel %vm3677, %v3635, %v2884
        %v3701 = vsel %vm3677, %v3636, %v2886
        %v3702 = vsel %vm3677, %v3637, %v2888
        %v3703 = vsel %vm3677, %v3638, %v2890
        %v3704 = vsel %vm3677, %v3639, %v2892
        %v3705 = vsel %vm3677, %v3640, %v2894
        %v3706 = vsel %vm3677, %v3641, %v2896
        %v3707 = vsel %vm3677, %v3642, %v2898
        %v3708 = vsel %vm3677, %v3643, %v2900
        %v3709 = vsel %vm3677, %v3644, %v2902
        %v3710 = vsel %vm3677, %v3645, %v2904
        %v3711 = vsel %vm3677, %v3646, %v2906
        %v3712 = vsel %vm3677, %v3647, %v2908
        %v3713 = vsel %vm3677, %v3648, %v2910
        %v3714 = vsel %vm3677, %v3649, %v2912
        %v3715 = vsel %vm3677, %v3650, %v2914
        %v3716 = vsel %vm3677, %v3651, %v2916
        %v3717 = vsel %vm3677, %v3652, %v2918
        %v3718 = vsel %vm3677, %v3653, %v2920
        %v3719 = vsel %vm3677, %v3654, %v2922
        %v3720 = vsel %vm3677, %v3655, %v2924
        %v3721 = vsel %vm3677, %v3656, %v2926
        %v3722 = vsel %vm3677, %v3657, %v2928
        %v3723 = vsel %vm3677, %v3658, %v2930
        %v3724 = vsel %vm3677, %v3659, %v2932
        %v3725 = vsel %vm3677, %v3660, %v2934
        %v3726 = vsel %vm3677, %v3661, %v2936
        %v3727 = vsel %vm3677, %v3662, %v2938
        %v3728 = vsel %vm3677, %v3663, %v2940
        %v3729 = vsel %vm3677, %v3664, %v2942
        %v3730 = vsel %vm3677, %v3665, %v2944
        %v3731 = vsel %vm3677, %v3666, %v2946
        %v3732 = vsel %vm3677, %v3667, %v2948
        %v3733 = vsel %vm3677, %v3668, %v2950
        %v3734 = vsel %vm3677, %v3669, %v2952
        %v3735 = vsel %vm3677, %v3670, %v2954
        %v3736 = vsel %vm3677, %v3671, %v2956
        %v3737 = vsel %vm3677, %v3672, %v2958
        %v3738 = vsel %vm3677, %v3673, %v2960
        %v3739 = vsel %vm3677, %v3674, %v2962
        %v3740 = vsel %vm3677, %v3675, %v2964
        %v3741 = vsel %vm3677, %v3676, %v2966
        %vm3742 = vcmask 261120
        %v3743 = vsel %vm3742, %v3678, %v3096
        %v3744 = vsel %vm3742, %v3679, %v3098
        %v3745 = vsel %vm3742, %v3680, %v3100
        %v3746 = vsel %vm3742, %v3681, %v3102
        %v3747 = vsel %vm3742, %v3682, %v3104
        %v3748 = vsel %vm3742, %v3683, %v3106
        %v3749 = vsel %vm3742, %v3684, %v3108
        %v3750 = vsel %vm3742, %v3685, %v3110
        %v3751 = vsel %vm3742, %v3686, %v3112
        %v3752 = vsel %vm3742, %v3687, %v3114
        %v3753 = vsel %vm3742, %v3688, %v3116
        %v3754 = vsel %vm3742, %v3689, %v3118
        %v3755 = vsel %vm3742, %v3690, %v3120
        %v3756 = vsel %vm3742, %v3691, %v3122
        %v3757 = vsel %vm3742, %v3692, %v3124
        %v3758 = vsel %vm3742, %v3693, %v3126
        %v3759 = vsel %vm3742, %v3694, %v3128
        %v3760 = vsel %vm3742, %v3695, %v3130
        %v3761 = vsel %vm3742, %v3696, %v3132
        %v3762 = vsel %vm3742, %v3697, %v3134
        %v3763 = vsel %vm3742, %v3698, %v3136
        %v3764 = vsel %vm3742, %v3699, %v3138
        %v3765 = vsel %vm3742, %v3700, %v3140
        %v3766 = vsel %vm3742, %v3701, %v3142
        %v3767 = vsel %vm3742, %v3702, %v3144
        %v3768 = vsel %vm3742, %v3703, %v3146
        %v3769 = vsel %vm3742, %v3704, %v3148
        %v3770 = vsel %vm3742, %v3705, %v3150
        %v3771 = vsel %vm3742, %v3706, %v3152
        %v3772 = vsel %vm3742, %v3707, %v3154
        %v3773 = vsel %vm3742, %v3708, %v3156
        %v3774 = vsel %vm3742, %v3709, %v3158
        %v3775 = vsel %vm3742, %v3710, %v3160
        %v3776 = vsel %vm3742, %v3711, %v3162
        %v3777 = vsel %vm3742, %v3712, %v3164
        %v3778 = vsel %vm3742, %v3713, %v3166
        %v3779 = vsel %vm3742, %v3714, %v3168
        %v3780 = vsel %vm3742, %v3715, %v3170
        %v3781 = vsel %vm3742, %v3716, %v3172
        %v3782 = vsel %vm3742, %v3717, %v3174
        %v3783 = vsel %vm3742, %v3718, %v3176
        %v3784 = vsel %vm3742, %v3719, %v3178
        %v3785 = vsel %vm3742, %v3720, %v3180
        %v3786 = vsel %vm3742, %v3721, %v3182
        %v3787 = vsel %vm3742, %v3722, %v3184
        %v3788 = vsel %vm3742, %v3723, %v3186
        %v3789 = vsel %vm3742, %v3724, %v3188
        %v3790 = vsel %vm3742, %v3725, %v3190
        %v3791 = vsel %vm3742, %v3726, %v3192
        %v3792 = vsel %vm3742, %v3727, %v3194
        %v3793 = vsel %vm3742, %v3728, %v3196
        %v3794 = vsel %vm3742, %v3729, %v3198
        %v3795 = vsel %vm3742, %v3730, %v3200
        %v3796 = vsel %vm3742, %v3731, %v3202
        %v3797 = vsel %vm3742, %v3732, %v3204
        %v3798 = vsel %vm3742, %v3733, %v3206
        %v3799 = vsel %vm3742, %v3734, %v3208
        %v3800 = vsel %vm3742, %v3735, %v3210
        %v3801 = vsel %vm3742, %v3736, %v3212
        %v3802 = vsel %vm3742, %v3737, %v3214
        %v3803 = vsel %vm3742, %v3738, %v3216
        %v3804 = vsel %vm3742, %v3739, %v3218
        %v3805 = vsel %vm3742, %v3740, %v3220
        %v3806 = vsel %vm3742, %v3741, %v3222
        %v3807 = vpack.c.bf16 %v3744, %v3743
        %v3808 = vpack.c.bf16 %v3746, %v3745
        %v3809 = vpack.c.bf16 %v3748, %v3747
        %v3810 = vpack.c.bf16 %v3750, %v3749
        %v3811 = vpack.c.bf16 %v3752, %v3751
        %v3812 = vpack.c.bf16 %v3754, %v3753
        %v3813 = vpack.c.bf16 %v3756, %v3755
        %v3814 = vpack.c.bf16 %v3758, %v3757
        %v3815 = vpack.c.bf16 %v3760, %v3759
        %v3816 = vpack.c.bf16 %v3762, %v3761
        %v3817 = vpack.c.bf16 %v3764, %v3763
        %v3818 = vpack.c.bf16 %v3766, %v3765
        %v3819 = vpack.c.bf16 %v3768, %v3767
        %v3820 = vpack.c.bf16 %v3770, %v3769
        %v3821 = vpack.c.bf16 %v3772, %v3771
        %v3822 = vpack.c.bf16 %v3774, %v3773
        %v3823 = vpack.c.bf16 %v3776, %v3775
        %v3824 = vpack.c.bf16 %v3778, %v3777
        %v3825 = vpack.c.bf16 %v3780, %v3779
        %v3826 = vpack.c.bf16 %v3782, %v3781
        %v3827 = vpack.c.bf16 %v3784, %v3783
        %v3828 = vpack.c.bf16 %v3786, %v3785
        %v3829 = vpack.c.bf16 %v3788, %v3787
        %v3830 = vpack.c.bf16 %v3790, %v3789
        %v3831 = vpack.c.bf16 %v3792, %v3791
        %v3832 = vpack.c.bf16 %v3794, %v3793
        %v3833 = vpack.c.bf16 %v3796, %v3795
        %v3834 = vpack.c.bf16 %v3798, %v3797
        %v3835 = vpack.c.bf16 %v3800, %v3799
        %v3836 = vpack.c.bf16 %v3802, %v3801
        %v3837 = vpack.c.bf16 %v3804, %v3803
        %v3838 = vpack.c.bf16 %v3806, %v3805
        %v3839 = vld [vmem:[%s1] sm:$0xf]
        %v3840 = vld [vmem:[%s1 + $0x4] sm:$0xf]
        %v3841 = vld [vmem:[%s1 + $0x8] sm:$0xf]
        %v3842 = vld [vmem:[%s1 + $0xc] sm:$0xf]
        %v3843 = vld [vmem:[%s1 + $0x10] sm:$0x3]
        %v3849 = vunpack.c.l.b16 %v3839
        %v3850 = vunpack.c.l.b16 %v3840
        %v3851 = vunpack.c.l.b16 %v3841
        %v3852 = vunpack.c.l.b16 %v3842
        %v3853 = vunpack.c.l.b16 %v3843
        %v3854 = vpack.c.b16 %v3850, %v3849
        %v3855 = vpack.c.b16 %v3852, %v3851
        %v3856 = vpack.c.b16 %v3853, %v3853
        %vm3859 = vcmask 293888
        %v3861 = vsel %vm3859, %v3807, 0
        %v3864 = vsel %vm3859, %v3808, 0
        %v3867 = vsel %vm3859, %v3809, 0
        %v3870 = vsel %vm3859, %v3810, 0
        %v3873 = vsel %vm3859, %v3811, 0
        %v3876 = vsel %vm3859, %v3812, 0
        %v3879 = vsel %vm3859, %v3813, 0
        %v3882 = vsel %vm3859, %v3814, 0
        %v3885 = vsel %vm3859, %v3815, 0
        %v3888 = vsel %vm3859, %v3816, 0
        %v3891 = vsel %vm3859, %v3817, 0
        %v3894 = vsel %vm3859, %v3818, 0
        %v3897 = vsel %vm3859, %v3819, 0
        %v3900 = vsel %vm3859, %v3820, 0
        %v3903 = vsel %vm3859, %v3821, 0
        %v3906 = vsel %vm3859, %v3822, 0
        %v3909 = vsel %vm3859, %v3823, 0
        %v3912 = vsel %vm3859, %v3824, 0
        %v3915 = vsel %vm3859, %v3825, 0
        %v3918 = vsel %vm3859, %v3826, 0
        %v3921 = vsel %vm3859, %v3827, 0
        %v3924 = vsel %vm3859, %v3828, 0
        %v3927 = vsel %vm3859, %v3829, 0
        %v3930 = vsel %vm3859, %v3830, 0
        %v3933 = vsel %vm3859, %v3831, 0
        %v3936 = vsel %vm3859, %v3832, 0
        %v3939 = vsel %vm3859, %v3833, 0
        %v3942 = vsel %vm3859, %v3834, 0
        %v3945 = vsel %vm3859, %v3835, 0
        %v3948 = vsel %vm3859, %v3836, 0
        %v3951 = vsel %vm3859, %v3837, 0
        %v3954 = vsel %vm3859, %v3838, 0
        %vm3956 = vcmask 1041408
        %v3958 = vsel %vm3956, %v3856, 0
        %3960 = vmatpush.bf16.msra.mxu0 0
        %3961 = vmatpush.bf16.msra.mxu0 0
        %3962 = vmatpush.bf16.msra.mxu0 0
        %3963 = vmatpush.bf16.msra.mxu0 0
        %3964 = vmatpush.bf16.msra.mxu0 0
        %3965 = vmatpush.bf16.msra.mxu0 %v3958
        %3966 = vmatpush.bf16.msra.mxu0 %v3855
        %3967 = vmatpush.bf16.msra.mxu0 %v3854
        %3968 = vmatmul.bf16.gmra.mxu0 %v3861
        %v3969 = vpop.f32.mrf.mxu0
        %v3970 = vadd.f32 0.0, %v3969
        %v3971 = vpop.f32.mrf.mxu0
        %v3972 = vadd.f32 0.0, %v3971
        %3973 = vmatmul.bf16.gmra.mxu0 %v3864
        %v3974 = vpop.f32.mrf.mxu0
        %v3975 = vadd.f32 0.0, %v3974
        %v3976 = vpop.f32.mrf.mxu0
        %v3977 = vadd.f32 0.0, %v3976
        %3978 = vmatmul.bf16.gmra.mxu0 %v3867
        %v3979 = vpop.f32.mrf.mxu0
        %v3980 = vadd.f32 0.0, %v3979
        %v3981 = vpop.f32.mrf.mxu0
        %v3982 = vadd.f32 0.0, %v3981
        %3983 = vmatmul.bf16.gmra.mxu0 %v3870
        %v3984 = vpop.f32.mrf.mxu0
        %v3985 = vadd.f32 0.0, %v3984
        %v3986 = vpop.f32.mrf.mxu0
        %v3987 = vadd.f32 0.0, %v3986
        %3988 = vmatmul.bf16.gmra.mxu0 %v3873
        %v3989 = vpop.f32.mrf.mxu0
        %v3990 = vadd.f32 0.0, %v3989
        %v3991 = vpop.f32.mrf.mxu0
        %v3992 = vadd.f32 0.0, %v3991
        %3993 = vmatmul.bf16.gmra.mxu0 %v3876
        %v3994 = vpop.f32.mrf.mxu0
        %v3995 = vadd.f32 0.0, %v3994
        %v3996 = vpop.f32.mrf.mxu0
        %v3997 = vadd.f32 0.0, %v3996
        %3998 = vmatmul.bf16.gmra.mxu0 %v3879
        %v3999 = vpop.f32.mrf.mxu0
        %v4000 = vadd.f32 0.0, %v3999
        %v4001 = vpop.f32.mrf.mxu0
        %v4002 = vadd.f32 0.0, %v4001
        %4003 = vmatmul.bf16.gmra.mxu0 %v3882
        %v4004 = vpop.f32.mrf.mxu0
        %v4005 = vadd.f32 0.0, %v4004
        %v4006 = vpop.f32.mrf.mxu0
        %v4007 = vadd.f32 0.0, %v4006
        %4008 = vmatmul.bf16.gmra.mxu0 %v3885
        %v4009 = vpop.f32.mrf.mxu0
        %v4010 = vadd.f32 0.0, %v4009
        %v4011 = vpop.f32.mrf.mxu0
        %v4012 = vadd.f32 0.0, %v4011
        %4013 = vmatmul.bf16.gmra.mxu0 %v3888
        %v4014 = vpop.f32.mrf.mxu0
        %v4015 = vadd.f32 0.0, %v4014
        %v4016 = vpop.f32.mrf.mxu0
        %v4017 = vadd.f32 0.0, %v4016
        %4018 = vmatmul.bf16.gmra.mxu0 %v3891
        %v4019 = vpop.f32.mrf.mxu0
        %v4020 = vadd.f32 0.0, %v4019
        %v4021 = vpop.f32.mrf.mxu0
        %v4022 = vadd.f32 0.0, %v4021
        %4023 = vmatmul.bf16.gmra.mxu0 %v3894
        %v4024 = vpop.f32.mrf.mxu0
        %v4025 = vadd.f32 0.0, %v4024
        %v4026 = vpop.f32.mrf.mxu0
        %v4027 = vadd.f32 0.0, %v4026
        %4028 = vmatmul.bf16.gmra.mxu0 %v3897
        %v4029 = vpop.f32.mrf.mxu0
        %v4030 = vadd.f32 0.0, %v4029
        %v4031 = vpop.f32.mrf.mxu0
        %v4032 = vadd.f32 0.0, %v4031
        %4033 = vmatmul.bf16.gmra.mxu0 %v3900
        %v4034 = vpop.f32.mrf.mxu0
        %v4035 = vadd.f32 0.0, %v4034
        %v4036 = vpop.f32.mrf.mxu0
        %v4037 = vadd.f32 0.0, %v4036
        %4038 = vmatmul.bf16.gmra.mxu0 %v3903
        %v4039 = vpop.f32.mrf.mxu0
        %v4040 = vadd.f32 0.0, %v4039
        %v4041 = vpop.f32.mrf.mxu0
        %v4042 = vadd.f32 0.0, %v4041
        %4043 = vmatmul.bf16.gmra.mxu0 %v3906
        %v4044 = vpop.f32.mrf.mxu0
        %v4045 = vadd.f32 0.0, %v4044
        %v4046 = vpop.f32.mrf.mxu0
        %v4047 = vadd.f32 0.0, %v4046
        %4048 = vmatmul.bf16.gmra.mxu0 %v3909
        %v4049 = vpop.f32.mrf.mxu0
        %v4050 = vadd.f32 0.0, %v4049
        %v4051 = vpop.f32.mrf.mxu0
        %v4052 = vadd.f32 0.0, %v4051
        %4053 = vmatmul.bf16.gmra.mxu0 %v3912
        %v4054 = vpop.f32.mrf.mxu0
        %v4055 = vadd.f32 0.0, %v4054
        %v4056 = vpop.f32.mrf.mxu0
        %v4057 = vadd.f32 0.0, %v4056
        %4058 = vmatmul.bf16.gmra.mxu0 %v3915
        %v4059 = vpop.f32.mrf.mxu0
        %v4060 = vadd.f32 0.0, %v4059
        %v4061 = vpop.f32.mrf.mxu0
        %v4062 = vadd.f32 0.0, %v4061
        %4063 = vmatmul.bf16.gmra.mxu0 %v3918
        %v4064 = vpop.f32.mrf.mxu0
        %v4065 = vadd.f32 0.0, %v4064
        %v4066 = vpop.f32.mrf.mxu0
        %v4067 = vadd.f32 0.0, %v4066
        %4068 = vmatmul.bf16.gmra.mxu0 %v3921
        %v4069 = vpop.f32.mrf.mxu0
        %v4070 = vadd.f32 0.0, %v4069
        %v4071 = vpop.f32.mrf.mxu0
        %v4072 = vadd.f32 0.0, %v4071
        %4073 = vmatmul.bf16.gmra.mxu0 %v3924
        %v4074 = vpop.f32.mrf.mxu0
        %v4075 = vadd.f32 0.0, %v4074
        %v4076 = vpop.f32.mrf.mxu0
        %v4077 = vadd.f32 0.0, %v4076
        %4078 = vmatmul.bf16.gmra.mxu0 %v3927
        %v4079 = vpop.f32.mrf.mxu0
        %v4080 = vadd.f32 0.0, %v4079
        %v4081 = vpop.f32.mrf.mxu0
        %v4082 = vadd.f32 0.0, %v4081
        %4083 = vmatmul.bf16.gmra.mxu0 %v3930
        %v4084 = vpop.f32.mrf.mxu0
        %v4085 = vadd.f32 0.0, %v4084
        %v4086 = vpop.f32.mrf.mxu0
        %v4087 = vadd.f32 0.0, %v4086
        %4088 = vmatmul.bf16.gmra.mxu0 %v3933
        %v4089 = vpop.f32.mrf.mxu0
        %v4090 = vadd.f32 0.0, %v4089
        %v4091 = vpop.f32.mrf.mxu0
        %v4092 = vadd.f32 0.0, %v4091
        %4093 = vmatmul.bf16.gmra.mxu0 %v3936
        %v4094 = vpop.f32.mrf.mxu0
        %v4095 = vadd.f32 0.0, %v4094
        %v4096 = vpop.f32.mrf.mxu0
        %v4097 = vadd.f32 0.0, %v4096
        %4098 = vmatmul.bf16.gmra.mxu0 %v3939
        %v4099 = vpop.f32.mrf.mxu0
        %v4100 = vadd.f32 0.0, %v4099
        %v4101 = vpop.f32.mrf.mxu0
        %v4102 = vadd.f32 0.0, %v4101
        %4103 = vmatmul.bf16.gmra.mxu0 %v3942
        %v4104 = vpop.f32.mrf.mxu0
        %v4105 = vadd.f32 0.0, %v4104
        %v4106 = vpop.f32.mrf.mxu0
        %v4107 = vadd.f32 0.0, %v4106
        %4108 = vmatmul.bf16.gmra.mxu0 %v3945
        %v4109 = vpop.f32.mrf.mxu0
        %v4110 = vadd.f32 0.0, %v4109
        %v4111 = vpop.f32.mrf.mxu0
        %v4112 = vadd.f32 0.0, %v4111
        %4113 = vmatmul.bf16.gmra.mxu0 %v3948
        %v4114 = vpop.f32.mrf.mxu0
        %v4115 = vadd.f32 0.0, %v4114
        %v4116 = vpop.f32.mrf.mxu0
        %v4117 = vadd.f32 0.0, %v4116
        %4118 = vmatmul.bf16.gmra.mxu0 %v3951
        %v4119 = vpop.f32.mrf.mxu0
        %v4120 = vadd.f32 0.0, %v4119
        %v4121 = vpop.f32.mrf.mxu0
        %v4122 = vadd.f32 0.0, %v4121
        %4123 = vmatmul.bf16.gmra.mxu0 %v3954
        %v4124 = vpop.f32.mrf.mxu0
        %v4125 = vadd.f32 0.0, %v4124
        %v4126 = vpop.f32.mrf.mxu0
        %v4127 = vadd.f32 0.0, %v4126
        %4128 = vdwg.mxu0
        %s4129 = scalar_lea.vmem [#allocation3], %s216
        %4130 = vst [vmem:[%s4129] sm:$0xff] %v3970
        %4131 = vst [vmem:[%s4129 + $0x8] sm:$0xff] %v3972
        %4132 = vst [vmem:[%s4129 + $0x10] sm:$0xff] %v3975
        %4133 = vst [vmem:[%s4129 + $0x18] sm:$0xff] %v3977
        %4134 = vst [vmem:[%s4129 + $0x20] sm:$0xff] %v3980
        %4135 = vst [vmem:[%s4129 + $0x28] sm:$0xff] %v3982
        %4136 = vst [vmem:[%s4129 + $0x30] sm:$0xff] %v3985
        %4137 = vst [vmem:[%s4129 + $0x38] sm:$0xff] %v3987
        %4138 = vst [vmem:[%s4129 + $0x40] sm:$0xff] %v3990
        %4139 = vst [vmem:[%s4129 + $0x48] sm:$0xff] %v3992
        %4140 = vst [vmem:[%s4129 + $0x50] sm:$0xff] %v3995
        %4141 = vst [vmem:[%s4129 + $0x58] sm:$0xff] %v3997
        %4142 = vst [vmem:[%s4129 + $0x60] sm:$0xff] %v4000
        %4143 = vst [vmem:[%s4129 + $0x68] sm:$0xff] %v4002
        %4144 = vst [vmem:[%s4129 + $0x70] sm:$0xff] %v4005
        %4145 = vst [vmem:[%s4129 + $0x78] sm:$0xff] %v4007
        %4146 = vst [vmem:[%s4129 + $0x80] sm:$0xff] %v4010
        %4147 = vst [vmem:[%s4129 + $0x88] sm:$0xff] %v4012
        %4148 = vst [vmem:[%s4129 + $0x90] sm:$0xff] %v4015
        %4149 = vst [vmem:[%s4129 + $0x98] sm:$0xff] %v4017
        %4150 = vst [vmem:[%s4129 + $0xa0] sm:$0xff] %v4020
        %4151 = vst [vmem:[%s4129 + $0xa8] sm:$0xff] %v4022
        %4152 = vst [vmem:[%s4129 + $0xb0] sm:$0xff] %v4025
        %4153 = vst [vmem:[%s4129 + $0xb8] sm:$0xff] %v4027
        %4154 = vst [vmem:[%s4129 + $0xc0] sm:$0xff] %v4030
        %4155 = vst [vmem:[%s4129 + $0xc8] sm:$0xff] %v4032
        %4156 = vst [vmem:[%s4129 + $0xd0] sm:$0xff] %v4035
        %4157 = vst [vmem:[%s4129 + $0xd8] sm:$0xff] %v4037
        %4158 = vst [vmem:[%s4129 + $0xe0] sm:$0xff] %v4040
        %4159 = vst [vmem:[%s4129 + $0xe8] sm:$0xff] %v4042
        %4160 = vst [vmem:[%s4129 + $0xf0] sm:$0xff] %v4045
        %4161 = vst [vmem:[%s4129 + $0xf8] sm:$0xff] %v4047
        %4162 = vst [vmem:[%s4129 + $0x100] sm:$0xff] %v4050
        %4163 = vst [vmem:[%s4129 + $0x108] sm:$0xff] %v4052
        %4164 = vst [vmem:[%s4129 + $0x110] sm:$0xff] %v4055
        %4165 = vst [vmem:[%s4129 + $0x118] sm:$0xff] %v4057
        %4166 = vst [vmem:[%s4129 + $0x120] sm:$0xff] %v4060
        %4167 = vst [vmem:[%s4129 + $0x128] sm:$0xff] %v4062
        %4168 = vst [vmem:[%s4129 + $0x130] sm:$0xff] %v4065
        %4169 = vst [vmem:[%s4129 + $0x138] sm:$0xff] %v4067
        %4170 = vst [vmem:[%s4129 + $0x140] sm:$0xff] %v4070
        %4171 = vst [vmem:[%s4129 + $0x148] sm:$0xff] %v4072
        %4172 = vst [vmem:[%s4129 + $0x150] sm:$0xff] %v4075
        %4173 = vst [vmem:[%s4129 + $0x158] sm:$0xff] %v4077
        %4174 = vst [vmem:[%s4129 + $0x160] sm:$0xff] %v4080
        %4175 = vst [vmem:[%s4129 + $0x168] sm:$0xff] %v4082
        %4176 = vst [vmem:[%s4129 + $0x170] sm:$0xff] %v4085
        %4177 = vst [vmem:[%s4129 + $0x178] sm:$0xff] %v4087
        %4178 = vst [vmem:[%s4129 + $0x180] sm:$0xff] %v4090
        %4179 = vst [vmem:[%s4129 + $0x188] sm:$0xff] %v4092
        %4180 = vst [vmem:[%s4129 + $0x190] sm:$0xff] %v4095
        %4181 = vst [vmem:[%s4129 + $0x198] sm:$0xff] %v4097
        %4182 = vst [vmem:[%s4129 + $0x1a0] sm:$0xff] %v4100
        %4183 = vst [vmem:[%s4129 + $0x1a8] sm:$0xff] %v4102
        %4184 = vst [vmem:[%s4129 + $0x1b0] sm:$0xff] %v4105
        %4185 = vst [vmem:[%s4129 + $0x1b8] sm:$0xff] %v4107
        %4186 = vst [vmem:[%s4129 + $0x1c0] sm:$0xff] %v4110
        %4187 = vst [vmem:[%s4129 + $0x1c8] sm:$0xff] %v4112
        %4188 = vst [vmem:[%s4129 + $0x1d0] sm:$0xff] %v4115
        %4189 = vst [vmem:[%s4129 + $0x1d8] sm:$0xff] %v4117
        %4190 = vst [vmem:[%s4129 + $0x1e0] sm:$0xff] %v4120
        %4191 = vst [vmem:[%s4129 + $0x1e8] sm:$0xff] %v4122
        %4192 = vst [vmem:[%s4129 + $0x1f0] sm:$0xff] %v4125
        %4193 = vst [vmem:[%s4129 + $0x1f8] sm:$0xff] %v4127
        %v4194 = vld [vmem:[#allocation4] sm:$0x1]
        %v4195 = vadd.f32 %v3970, %v3972
        %v4196 = vadd.f32 %v4195, %v3975
        %v4197 = vadd.f32 %v4196, %v3977
        %v4198 = vadd.f32 %v4197, %v3980
        %v4199 = vadd.f32 %v4198, %v3982
        %v4200 = vadd.f32 %v4199, %v3985
        %v4201 = vadd.f32 %v4200, %v3987
        %v4202 = vadd.f32 %v4201, %v3990
        %v4203 = vadd.f32 %v4202, %v3992
        %v4204 = vadd.f32 %v4203, %v3995
        %v4205 = vadd.f32 %v4204, %v3997
        %v4206 = vadd.f32 %v4205, %v4000
        %v4207 = vadd.f32 %v4206, %v4002
        %v4208 = vadd.f32 %v4207, %v4005
        %v4209 = vadd.f32 %v4208, %v4007
        %v4210 = vadd.f32 %v4209, %v4010
        %v4211 = vadd.f32 %v4210, %v4012
        %v4212 = vadd.f32 %v4211, %v4015
        %v4213 = vadd.f32 %v4212, %v4017
        %v4214 = vadd.f32 %v4213, %v4020
        %v4215 = vadd.f32 %v4214, %v4022
        %v4216 = vadd.f32 %v4215, %v4025
        %v4217 = vadd.f32 %v4216, %v4027
        %v4218 = vadd.f32 %v4217, %v4030
        %v4219 = vadd.f32 %v4218, %v4032
        %v4220 = vadd.f32 %v4219, %v4035
        %v4221 = vadd.f32 %v4220, %v4037
        %v4222 = vadd.f32 %v4221, %v4040
        %v4223 = vadd.f32 %v4222, %v4042
        %v4224 = vadd.f32 %v4223, %v4045
        %v4225 = vadd.f32 %v4224, %v4047
        %v4226 = vadd.f32 %v4225, %v4050
        %v4227 = vadd.f32 %v4226, %v4052
        %v4228 = vadd.f32 %v4227, %v4055
        %v4229 = vadd.f32 %v4228, %v4057
        %v4230 = vadd.f32 %v4229, %v4060
        %v4231 = vadd.f32 %v4230, %v4062
        %v4232 = vadd.f32 %v4231, %v4065
        %v4233 = vadd.f32 %v4232, %v4067
        %v4234 = vadd.f32 %v4233, %v4070
        %v4235 = vadd.f32 %v4234, %v4072
        %v4236 = vadd.f32 %v4235, %v4075
        %v4237 = vadd.f32 %v4236, %v4077
        %v4238 = vadd.f32 %v4237, %v4080
        %v4239 = vadd.f32 %v4238, %v4082
        %v4240 = vadd.f32 %v4239, %v4085
        %v4241 = vadd.f32 %v4240, %v4087
        %v4242 = vadd.f32 %v4241, %v4090
        %v4243 = vadd.f32 %v4242, %v4092
        %v4244 = vadd.f32 %v4243, %v4095
        %v4245 = vadd.f32 %v4244, %v4097
        %v4246 = vadd.f32 %v4245, %v4100
        %v4247 = vadd.f32 %v4246, %v4102
        %v4248 = vadd.f32 %v4247, %v4105
        %v4249 = vadd.f32 %v4248, %v4107
        %v4250 = vadd.f32 %v4249, %v4110
        %v4251 = vadd.f32 %v4250, %v4112
        %v4252 = vadd.f32 %v4251, %v4115
        %v4253 = vadd.f32 %v4252, %v4117
        %v4254 = vadd.f32 %v4253, %v4120
        %v4255 = vadd.f32 %v4254, %v4122
        %v4256 = vadd.f32 %v4255, %v4125
        %v4257 = vadd.f32 %v4256, %v4127
        %v4258 = vrot.slane %v4257, 4
        %v4259 = vadd.f32 %v4257, %v4258
        %v4260 = vrot.slane %v4259, 2
        %v4261 = vadd.f32 %v4259, %v4260
        %v4262 = vrot.slane %v4261, 1
        %v4263 = vadd.f32 %v4261, %v4262
        %v4264 = vadd.f32 %v4194, %v4263
        %4265 = vst [vmem:[#allocation4] sm:$0x1] %v4264
      $region52: #{simsiam_forward.2} parent=35 // pred_fallthru
        _
      // Predicated region
      $region53: #{simsiam_forward.2} parent=35 // pred_check
        %p4266 = pneg %p606
      $region54: #{simsiam_forward.2} parent=35 // pred_check_branch
        %4268 = sbr.rel (%p4266) target = $region56
      $region55: #{simsiam_forward.2} parent=35 // pred_region
        %s4269 = scalar_lea.vmem [#allocation3], %s216
        %v4270 = vld [vmem:[%s4269] sm:$0xff]
        %v4271 = vld [vmem:[%s4269 + $0x8] sm:$0xff]
        %v4272 = vld [vmem:[%s4269 + $0x10] sm:$0xff]
        %v4273 = vld [vmem:[%s4269 + $0x18] sm:$0xff]
        %v4274 = vld [vmem:[%s4269 + $0x20] sm:$0xff]
        %v4275 = vld [vmem:[%s4269 + $0x28] sm:$0xff]
        %v4276 = vld [vmem:[%s4269 + $0x30] sm:$0xff]
        %v4277 = vld [vmem:[%s4269 + $0x38] sm:$0xff]
        %v4278 = vld [vmem:[%s4269 + $0x40] sm:$0xff]
        %v4279 = vld [vmem:[%s4269 + $0x48] sm:$0xff]
        %v4280 = vld [vmem:[%s4269 + $0x50] sm:$0xff]
        %v4281 = vld [vmem:[%s4269 + $0x58] sm:$0xff]
        %v4282 = vld [vmem:[%s4269 + $0x60] sm:$0xff]
        %v4283 = vld [vmem:[%s4269 + $0x68] sm:$0xff]
        %v4284 = vld [vmem:[%s4269 + $0x70] sm:$0xff]
        %v4285 = vld [vmem:[%s4269 + $0x78] sm:$0xff]
        %v4286 = vld [vmem:[%s4269 + $0x80] sm:$0xff]
        %v4287 = vld [vmem:[%s4269 + $0x88] sm:$0xff]
        %v4288 = vld [vmem:[%s4269 + $0x90] sm:$0xff]
        %v4289 = vld [vmem:[%s4269 + $0x98] sm:$0xff]
        %v4290 = vld [vmem:[%s4269 + $0xa0] sm:$0xff]
        %v4291 = vld [vmem:[%s4269 + $0xa8] sm:$0xff]
        %v4292 = vld [vmem:[%s4269 + $0xb0] sm:$0xff]
        %v4293 = vld [vmem:[%s4269 + $0xb8] sm:$0xff]
        %v4294 = vld [vmem:[%s4269 + $0xc0] sm:$0xff]
        %v4295 = vld [vmem:[%s4269 + $0xc8] sm:$0xff]
        %v4296 = vld [vmem:[%s4269 + $0xd0] sm:$0xff]
        %v4297 = vld [vmem:[%s4269 + $0xd8] sm:$0xff]
        %v4298 = vld [vmem:[%s4269 + $0xe0] sm:$0xff]
        %v4299 = vld [vmem:[%s4269 + $0xe8] sm:$0xff]
        %v4300 = vld [vmem:[%s4269 + $0xf0] sm:$0xff]
        %v4301 = vld [vmem:[%s4269 + $0xf8] sm:$0xff]
        %v4302 = vld [vmem:[%s4269 + $0x100] sm:$0xff]
        %v4303 = vld [vmem:[%s4269 + $0x108] sm:$0xff]
        %v4304 = vld [vmem:[%s4269 + $0x110] sm:$0xff]
        %v4305 = vld [vmem:[%s4269 + $0x118] sm:$0xff]
        %v4306 = vld [vmem:[%s4269 + $0x120] sm:$0xff]
        %v4307 = vld [vmem:[%s4269 + $0x128] sm:$0xff]
        %v4308 = vld [vmem:[%s4269 + $0x130] sm:$0xff]
        %v4309 = vld [vmem:[%s4269 + $0x138] sm:$0xff]
        %v4310 = vld [vmem:[%s4269 + $0x140] sm:$0xff]
        %v4311 = vld [vmem:[%s4269 + $0x148] sm:$0xff]
        %v4312 = vld [vmem:[%s4269 + $0x150] sm:$0xff]
        %v4313 = vld [vmem:[%s4269 + $0x158] sm:$0xff]
        %v4314 = vld [vmem:[%s4269 + $0x160] sm:$0xff]
        %v4315 = vld [vmem:[%s4269 + $0x168] sm:$0xff]
        %v4316 = vld [vmem:[%s4269 + $0x170] sm:$0xff]
        %v4317 = vld [vmem:[%s4269 + $0x178] sm:$0xff]
        %v4318 = vld [vmem:[%s4269 + $0x180] sm:$0xff]
        %v4319 = vld [vmem:[%s4269 + $0x188] sm:$0xff]
        %v4320 = vld [vmem:[%s4269 + $0x190] sm:$0xff]
        %v4321 = vld [vmem:[%s4269 + $0x198] sm:$0xff]
        %v4322 = vld [vmem:[%s4269 + $0x1a0] sm:$0xff]
        %v4323 = vld [vmem:[%s4269 + $0x1a8] sm:$0xff]
        %v4324 = vld [vmem:[%s4269 + $0x1b0] sm:$0xff]
        %v4325 = vld [vmem:[%s4269 + $0x1b8] sm:$0xff]
        %v4326 = vld [vmem:[%s4269 + $0x1c0] sm:$0xff]
        %v4327 = vld [vmem:[%s4269 + $0x1c8] sm:$0xff]
        %v4328 = vld [vmem:[%s4269 + $0x1d0] sm:$0xff]
        %v4329 = vld [vmem:[%s4269 + $0x1d8] sm:$0xff]
        %v4330 = vld [vmem:[%s4269 + $0x1e0] sm:$0xff]
        %v4331 = vld [vmem:[%s4269 + $0x1e8] sm:$0xff]
        %v4332 = vld [vmem:[%s4269 + $0x1f0] sm:$0xff]
        %v4333 = vld [vmem:[%s4269 + $0x1f8] sm:$0xff]
        %v4334 = vld [vmem:[#allocation4] sm:$0x1]
        %v4336 = vperm.slane %v4334, 0
        %v4338 = vsub.f32 %v4270, %v4336
        %v4339 = vsub.f32 %v4271, %v4336
        %v4340 = vsub.f32 %v4272, %v4336
        %v4341 = vsub.f32 %v4273, %v4336
        %v4342 = vsub.f32 %v4274, %v4336
        %v4343 = vsub.f32 %v4275, %v4336
        %v4344 = vsub.f32 %v4276, %v4336
        %v4345 = vsub.f32 %v4277, %v4336
        %v4346 = vsub.f32 %v4278, %v4336
        %v4347 = vsub.f32 %v4279, %v4336
        %v4348 = vsub.f32 %v4280, %v4336
        %v4349 = vsub.f32 %v4281, %v4336
        %v4350 = vsub.f32 %v4282, %v4336
        %v4351 = vsub.f32 %v4283, %v4336
        %v4352 = vsub.f32 %v4284, %v4336
        %v4353 = vsub.f32 %v4285, %v4336
        %v4354 = vsub.f32 %v4286, %v4336
        %v4355 = vsub.f32 %v4287, %v4336
        %v4356 = vsub.f32 %v4288, %v4336
        %v4357 = vsub.f32 %v4289, %v4336
        %v4358 = vsub.f32 %v4290, %v4336
        %v4359 = vsub.f32 %v4291, %v4336
        %v4360 = vsub.f32 %v4292, %v4336
        %v4361 = vsub.f32 %v4293, %v4336
        %v4362 = vsub.f32 %v4294, %v4336
        %v4363 = vsub.f32 %v4295, %v4336
        %v4364 = vsub.f32 %v4296, %v4336
        %v4365 = vsub.f32 %v4297, %v4336
        %v4366 = vsub.f32 %v4298, %v4336
        %v4367 = vsub.f32 %v4299, %v4336
        %v4368 = vsub.f32 %v4300, %v4336
        %v4369 = vsub.f32 %v4301, %v4336
        %v4370 = vsub.f32 %v4302, %v4336
        %v4371 = vsub.f32 %v4303, %v4336
        %v4372 = vsub.f32 %v4304, %v4336
        %v4373 = vsub.f32 %v4305, %v4336
        %v4374 = vsub.f32 %v4306, %v4336
        %v4375 = vsub.f32 %v4307, %v4336
        %v4376 = vsub.f32 %v4308, %v4336
        %v4377 = vsub.f32 %v4309, %v4336
        %v4378 = vsub.f32 %v4310, %v4336
        %v4379 = vsub.f32 %v4311, %v4336
        %v4380 = vsub.f32 %v4312, %v4336
        %v4381 = vsub.f32 %v4313, %v4336
        %v4382 = vsub.f32 %v4314, %v4336
        %v4383 = vsub.f32 %v4315, %v4336
        %v4384 = vsub.f32 %v4316, %v4336
        %v4385 = vsub.f32 %v4317, %v4336
        %v4386 = vsub.f32 %v4318, %v4336
        %v4387 = vsub.f32 %v4319, %v4336
        %v4388 = vsub.f32 %v4320, %v4336
        %v4389 = vsub.f32 %v4321, %v4336
        %v4390 = vsub.f32 %v4322, %v4336
        %v4391 = vsub.f32 %v4323, %v4336
        %v4392 = vsub.f32 %v4324, %v4336
        %v4393 = vsub.f32 %v4325, %v4336
        %v4394 = vsub.f32 %v4326, %v4336
        %v4395 = vsub.f32 %v4327, %v4336
        %v4396 = vsub.f32 %v4328, %v4336
        %v4397 = vsub.f32 %v4329, %v4336
        %v4398 = vsub.f32 %v4330, %v4336
        %v4399 = vsub.f32 %v4331, %v4336
        %v4400 = vsub.f32 %v4332, %v4336
        %v4401 = vsub.f32 %v4333, %v4336
        %v4402 = vld [vmem:[#allocation5] sm:$0x1]
        %v4403 = vmul.f32 %v4338, %v4338
        %v4404 = vmul.f32 %v4339, %v4339
        %v4405 = vmul.f32 %v4340, %v4340
        %v4406 = vmul.f32 %v4341, %v4341
        %v4407 = vmul.f32 %v4342, %v4342
        %v4408 = vmul.f32 %v4343, %v4343
        %v4409 = vmul.f32 %v4344, %v4344
        %v4410 = vmul.f32 %v4345, %v4345
        %v4411 = vmul.f32 %v4346, %v4346
        %v4412 = vmul.f32 %v4347, %v4347
        %v4413 = vmul.f32 %v4348, %v4348
        %v4414 = vmul.f32 %v4349, %v4349
        %v4415 = vmul.f32 %v4350, %v4350
        %v4416 = vmul.f32 %v4351, %v4351
        %v4417 = vmul.f32 %v4352, %v4352
        %v4418 = vmul.f32 %v4353, %v4353
        %v4419 = vmul.f32 %v4354, %v4354
        %v4420 = vmul.f32 %v4355, %v4355
        %v4421 = vmul.f32 %v4356, %v4356
        %v4422 = vmul.f32 %v4357, %v4357
        %v4423 = vmul.f32 %v4358, %v4358
        %v4424 = vmul.f32 %v4359, %v4359
        %v4425 = vmul.f32 %v4360, %v4360
        %v4426 = vmul.f32 %v4361, %v4361
        %v4427 = vmul.f32 %v4362, %v4362
        %v4428 = vmul.f32 %v4363, %v4363
        %v4429 = vmul.f32 %v4364, %v4364
        %v4430 = vmul.f32 %v4365, %v4365
        %v4431 = vmul.f32 %v4366, %v4366
        %v4432 = vmul.f32 %v4367, %v4367
        %v4433 = vmul.f32 %v4368, %v4368
        %v4434 = vmul.f32 %v4369, %v4369
        %v4435 = vmul.f32 %v4370, %v4370
        %v4436 = vmul.f32 %v4371, %v4371
        %v4437 = vmul.f32 %v4372, %v4372
        %v4438 = vmul.f32 %v4373, %v4373
        %v4439 = vmul.f32 %v4374, %v4374
        %v4440 = vmul.f32 %v4375, %v4375
        %v4441 = vmul.f32 %v4376, %v4376
        %v4442 = vmul.f32 %v4377, %v4377
        %v4443 = vmul.f32 %v4378, %v4378
        %v4444 = vmul.f32 %v4379, %v4379
        %v4445 = vmul.f32 %v4380, %v4380
        %v4446 = vmul.f32 %v4381, %v4381
        %v4447 = vmul.f32 %v4382, %v4382
        %v4448 = vmul.f32 %v4383, %v4383
        %v4449 = vmul.f32 %v4384, %v4384
        %v4450 = vmul.f32 %v4385, %v4385
        %v4451 = vmul.f32 %v4386, %v4386
        %v4452 = vmul.f32 %v4387, %v4387
        %v4453 = vmul.f32 %v4388, %v4388
        %v4454 = vmul.f32 %v4389, %v4389
        %v4455 = vmul.f32 %v4390, %v4390
        %v4456 = vmul.f32 %v4391, %v4391
        %v4457 = vmul.f32 %v4392, %v4392
        %v4458 = vmul.f32 %v4393, %v4393
        %v4459 = vmul.f32 %v4394, %v4394
        %v4460 = vmul.f32 %v4395, %v4395
        %v4461 = vmul.f32 %v4396, %v4396
        %v4462 = vmul.f32 %v4397, %v4397
        %v4463 = vmul.f32 %v4398, %v4398
        %v4464 = vmul.f32 %v4399, %v4399
        %v4465 = vmul.f32 %v4400, %v4400
        %v4466 = vmul.f32 %v4401, %v4401
        %v4467 = vadd.f32 %v4403, %v4404
        %v4468 = vadd.f32 %v4467, %v4405
        %v4469 = vadd.f32 %v4468, %v4406
        %v4470 = vadd.f32 %v4469, %v4407
        %v4471 = vadd.f32 %v4470, %v4408
        %v4472 = vadd.f32 %v4471, %v4409
        %v4473 = vadd.f32 %v4472, %v4410
        %v4474 = vadd.f32 %v4473, %v4411
        %v4475 = vadd.f32 %v4474, %v4412
        %v4476 = vadd.f32 %v4475, %v4413
        %v4477 = vadd.f32 %v4476, %v4414
        %v4478 = vadd.f32 %v4477, %v4415
        %v4479 = vadd.f32 %v4478, %v4416
        %v4480 = vadd.f32 %v4479, %v4417
        %v4481 = vadd.f32 %v4480, %v4418
        %v4482 = vadd.f32 %v4481, %v4419
        %v4483 = vadd.f32 %v4482, %v4420
        %v4484 = vadd.f32 %v4483, %v4421
        %v4485 = vadd.f32 %v4484, %v4422
        %v4486 = vadd.f32 %v4485, %v4423
        %v4487 = vadd.f32 %v4486, %v4424
        %v4488 = vadd.f32 %v4487, %v4425
        %v4489 = vadd.f32 %v4488, %v4426
        %v4490 = vadd.f32 %v4489, %v4427
        %v4491 = vadd.f32 %v4490, %v4428
        %v4492 = vadd.f32 %v4491, %v4429
        %v4493 = vadd.f32 %v4492, %v4430
        %v4494 = vadd.f32 %v4493, %v4431
        %v4495 = vadd.f32 %v4494, %v4432
        %v4496 = vadd.f32 %v4495, %v4433
        %v4497 = vadd.f32 %v4496, %v4434
        %v4498 = vadd.f32 %v4497, %v4435
        %v4499 = vadd.f32 %v4498, %v4436
        %v4500 = vadd.f32 %v4499, %v4437
        %v4501 = vadd.f32 %v4500, %v4438
        %v4502 = vadd.f32 %v4501, %v4439
        %v4503 = vadd.f32 %v4502, %v4440
        %v4504 = vadd.f32 %v4503, %v4441
        %v4505 = vadd.f32 %v4504, %v4442
        %v4506 = vadd.f32 %v4505, %v4443
        %v4507 = vadd.f32 %v4506, %v4444
        %v4508 = vadd.f32 %v4507, %v4445
        %v4509 = vadd.f32 %v4508, %v4446
        %v4510 = vadd.f32 %v4509, %v4447
        %v4511 = vadd.f32 %v4510, %v4448
        %v4512 = vadd.f32 %v4511, %v4449
        %v4513 = vadd.f32 %v4512, %v4450
        %v4514 = vadd.f32 %v4513, %v4451
        %v4515 = vadd.f32 %v4514, %v4452
        %v4516 = vadd.f32 %v4515, %v4453
        %v4517 = vadd.f32 %v4516, %v4454
        %v4518 = vadd.f32 %v4517, %v4455
        %v4519 = vadd.f32 %v4518, %v4456
        %v4520 = vadd.f32 %v4519, %v4457
        %v4521 = vadd.f32 %v4520, %v4458
        %v4522 = vadd.f32 %v4521, %v4459
        %v4523 = vadd.f32 %v4522, %v4460
        %v4524 = vadd.f32 %v4523, %v4461
        %v4525 = vadd.f32 %v4524, %v4462
        %v4526 = vadd.f32 %v4525, %v4463
        %v4527 = vadd.f32 %v4526, %v4464
        %v4528 = vadd.f32 %v4527, %v4465
        %v4529 = vadd.f32 %v4528, %v4466
        %v4530 = vrot.slane %v4529, 4
        %v4531 = vadd.f32 %v4529, %v4530
        %v4532 = vrot.slane %v4531, 2
        %v4533 = vadd.f32 %v4531, %v4532
        %v4534 = vrot.slane %v4533, 1
        %v4535 = vadd.f32 %v4533, %v4534
        %v4536 = vadd.f32 %v4402, %v4535
        %4537 = vst [vmem:[#allocation5] sm:$0x1] %v4536
      $region56: #{simsiam_forward.2} parent=35 // pred_fallthru
        _
      // Predicated region
      $region57: #{simsiam_forward.2} parent=35 // pred_check
        %p4538 = pneg %p615
      $region58: #{simsiam_forward.2} parent=35 // pred_check_branch
        %4540 = sbr.rel (%p4538) target = $region60
      $region59: #{simsiam_forward.2} parent=35 // pred_region
        %s4541 = scalar_lea.vmem [#allocation3], %s216
        %v4542 = vld [vmem:[%s4541] sm:$0xff]
        %v4543 = vld [vmem:[%s4541 + $0x8] sm:$0xff]
        %v4544 = vld [vmem:[%s4541 + $0x10] sm:$0xff]
        %v4545 = vld [vmem:[%s4541 + $0x18] sm:$0xff]
        %v4546 = vld [vmem:[%s4541 + $0x20] sm:$0xff]
        %v4547 = vld [vmem:[%s4541 + $0x28] sm:$0xff]
        %v4548 = vld [vmem:[%s4541 + $0x30] sm:$0xff]
        %v4549 = vld [vmem:[%s4541 + $0x38] sm:$0xff]
        %v4550 = vld [vmem:[%s4541 + $0x40] sm:$0xff]
        %v4551 = vld [vmem:[%s4541 + $0x48] sm:$0xff]
        %v4552 = vld [vmem:[%s4541 + $0x50] sm:$0xff]
        %v4553 = vld [vmem:[%s4541 + $0x58] sm:$0xff]
        %v4554 = vld [vmem:[%s4541 + $0x60] sm:$0xff]
        %v4555 = vld [vmem:[%s4541 + $0x68] sm:$0xff]
        %v4556 = vld [vmem:[%s4541 + $0x70] sm:$0xff]
        %v4557 = vld [vmem:[%s4541 + $0x78] sm:$0xff]
        %v4558 = vld [vmem:[%s4541 + $0x80] sm:$0xff]
        %v4559 = vld [vmem:[%s4541 + $0x88] sm:$0xff]
        %v4560 = vld [vmem:[%s4541 + $0x90] sm:$0xff]
        %v4561 = vld [vmem:[%s4541 + $0x98] sm:$0xff]
        %v4562 = vld [vmem:[%s4541 + $0xa0] sm:$0xff]
        %v4563 = vld [vmem:[%s4541 + $0xa8] sm:$0xff]
        %v4564 = vld [vmem:[%s4541 + $0xb0] sm:$0xff]
        %v4565 = vld [vmem:[%s4541 + $0xb8] sm:$0xff]
        %v4566 = vld [vmem:[%s4541 + $0xc0] sm:$0xff]
        %v4567 = vld [vmem:[%s4541 + $0xc8] sm:$0xff]
        %v4568 = vld [vmem:[%s4541 + $0xd0] sm:$0xff]
        %v4569 = vld [vmem:[%s4541 + $0xd8] sm:$0xff]
        %v4570 = vld [vmem:[%s4541 + $0xe0] sm:$0xff]
        %v4571 = vld [vmem:[%s4541 + $0xe8] sm:$0xff]
        %v4572 = vld [vmem:[%s4541 + $0xf0] sm:$0xff]
        %v4573 = vld [vmem:[%s4541 + $0xf8] sm:$0xff]
        %v4574 = vld [vmem:[%s4541 + $0x100] sm:$0xff]
        %v4575 = vld [vmem:[%s4541 + $0x108] sm:$0xff]
        %v4576 = vld [vmem:[%s4541 + $0x110] sm:$0xff]
        %v4577 = vld [vmem:[%s4541 + $0x118] sm:$0xff]
        %v4578 = vld [vmem:[%s4541 + $0x120] sm:$0xff]
        %v4579 = vld [vmem:[%s4541 + $0x128] sm:$0xff]
        %v4580 = vld [vmem:[%s4541 + $0x130] sm:$0xff]
        %v4581 = vld [vmem:[%s4541 + $0x138] sm:$0xff]
        %v4582 = vld [vmem:[%s4541 + $0x140] sm:$0xff]
        %v4583 = vld [vmem:[%s4541 + $0x148] sm:$0xff]
        %v4584 = vld [vmem:[%s4541 + $0x150] sm:$0xff]
        %v4585 = vld [vmem:[%s4541 + $0x158] sm:$0xff]
        %v4586 = vld [vmem:[%s4541 + $0x160] sm:$0xff]
        %v4587 = vld [vmem:[%s4541 + $0x168] sm:$0xff]
        %v4588 = vld [vmem:[%s4541 + $0x170] sm:$0xff]
        %v4589 = vld [vmem:[%s4541 + $0x178] sm:$0xff]
        %v4590 = vld [vmem:[%s4541 + $0x180] sm:$0xff]
        %v4591 = vld [vmem:[%s4541 + $0x188] sm:$0xff]
        %v4592 = vld [vmem:[%s4541 + $0x190] sm:$0xff]
        %v4593 = vld [vmem:[%s4541 + $0x198] sm:$0xff]
        %v4594 = vld [vmem:[%s4541 + $0x1a0] sm:$0xff]
        %v4595 = vld [vmem:[%s4541 + $0x1a8] sm:$0xff]
        %v4596 = vld [vmem:[%s4541 + $0x1b0] sm:$0xff]
        %v4597 = vld [vmem:[%s4541 + $0x1b8] sm:$0xff]
        %v4598 = vld [vmem:[%s4541 + $0x1c0] sm:$0xff]
        %v4599 = vld [vmem:[%s4541 + $0x1c8] sm:$0xff]
        %v4600 = vld [vmem:[%s4541 + $0x1d0] sm:$0xff]
        %v4601 = vld [vmem:[%s4541 + $0x1d8] sm:$0xff]
        %v4602 = vld [vmem:[%s4541 + $0x1e0] sm:$0xff]
        %v4603 = vld [vmem:[%s4541 + $0x1e8] sm:$0xff]
        %v4604 = vld [vmem:[%s4541 + $0x1f0] sm:$0xff]
        %v4605 = vld [vmem:[%s4541 + $0x1f8] sm:$0xff]
        %v4606 = vld [vmem:[#allocation6] sm:$0x1]
        %v4608 = vperm.slane %v4606, 0
        %v4610 = vmul.f32 %v4542, %v4608
        %v4611 = vmul.f32 %v4543, %v4608
        %v4612 = vmul.f32 %v4544, %v4608
        %v4613 = vmul.f32 %v4545, %v4608
        %v4614 = vmul.f32 %v4546, %v4608
        %v4615 = vmul.f32 %v4547, %v4608
        %v4616 = vmul.f32 %v4548, %v4608
        %v4617 = vmul.f32 %v4549, %v4608
        %v4618 = vmul.f32 %v4550, %v4608
        %v4619 = vmul.f32 %v4551, %v4608
        %v4620 = vmul.f32 %v4552, %v4608
        %v4621 = vmul.f32 %v4553, %v4608
        %v4622 = vmul.f32 %v4554, %v4608
        %v4623 = vmul.f32 %v4555, %v4608
        %v4624 = vmul.f32 %v4556, %v4608
        %v4625 = vmul.f32 %v4557, %v4608
        %v4626 = vmul.f32 %v4558, %v4608
        %v4627 = vmul.f32 %v4559, %v4608
        %v4628 = vmul.f32 %v4560, %v4608
        %v4629 = vmul.f32 %v4561, %v4608
        %v4630 = vmul.f32 %v4562, %v4608
        %v4631 = vmul.f32 %v4563, %v4608
        %v4632 = vmul.f32 %v4564, %v4608
        %v4633 = vmul.f32 %v4565, %v4608
        %v4634 = vmul.f32 %v4566, %v4608
        %v4635 = vmul.f32 %v4567, %v4608
        %v4636 = vmul.f32 %v4568, %v4608
        %v4637 = vmul.f32 %v4569, %v4608
        %v4638 = vmul.f32 %v4570, %v4608
        %v4639 = vmul.f32 %v4571, %v4608
        %v4640 = vmul.f32 %v4572, %v4608
        %v4641 = vmul.f32 %v4573, %v4608
        %v4642 = vmul.f32 %v4574, %v4608
        %v4643 = vmul.f32 %v4575, %v4608
        %v4644 = vmul.f32 %v4576, %v4608
        %v4645 = vmul.f32 %v4577, %v4608
        %v4646 = vmul.f32 %v4578, %v4608
        %v4647 = vmul.f32 %v4579, %v4608
        %v4648 = vmul.f32 %v4580, %v4608
        %v4649 = vmul.f32 %v4581, %v4608
        %v4650 = vmul.f32 %v4582, %v4608
        %v4651 = vmul.f32 %v4583, %v4608
        %v4652 = vmul.f32 %v4584, %v4608
        %v4653 = vmul.f32 %v4585, %v4608
        %v4654 = vmul.f32 %v4586, %v4608
        %v4655 = vmul.f32 %v4587, %v4608
        %v4656 = vmul.f32 %v4588, %v4608
        %v4657 = vmul.f32 %v4589, %v4608
        %v4658 = vmul.f32 %v4590, %v4608
        %v4659 = vmul.f32 %v4591, %v4608
        %v4660 = vmul.f32 %v4592, %v4608
        %v4661 = vmul.f32 %v4593, %v4608
        %v4662 = vmul.f32 %v4594, %v4608
        %v4663 = vmul.f32 %v4595, %v4608
        %v4664 = vmul.f32 %v4596, %v4608
        %v4665 = vmul.f32 %v4597, %v4608
        %v4666 = vmul.f32 %v4598, %v4608
        %v4667 = vmul.f32 %v4599, %v4608
        %v4668 = vmul.f32 %v4600, %v4608
        %v4669 = vmul.f32 %v4601, %v4608
        %v4670 = vmul.f32 %v4602, %v4608
        %v4671 = vmul.f32 %v4603, %v4608
        %v4672 = vmul.f32 %v4604, %v4608
        %v4673 = vmul.f32 %v4605, %v4608
        %v4674 = vld [vmem:[#allocation7] sm:$0x1]
        %v4676 = vperm.slane %v4674, 0
        %v4678 = vadd.f32 %v4610, %v4676
        %v4679 = vadd.f32 %v4611, %v4676
        %v4680 = vadd.f32 %v4612, %v4676
        %v4681 = vadd.f32 %v4613, %v4676
        %v4682 = vadd.f32 %v4614, %v4676
        %v4683 = vadd.f32 %v4615, %v4676
        %v4684 = vadd.f32 %v4616, %v4676
        %v4685 = vadd.f32 %v4617, %v4676
        %v4686 = vadd.f32 %v4618, %v4676
        %v4687 = vadd.f32 %v4619, %v4676
        %v4688 = vadd.f32 %v4620, %v4676
        %v4689 = vadd.f32 %v4621, %v4676
        %v4690 = vadd.f32 %v4622, %v4676
        %v4691 = vadd.f32 %v4623, %v4676
        %v4692 = vadd.f32 %v4624, %v4676
        %v4693 = vadd.f32 %v4625, %v4676
        %v4694 = vadd.f32 %v4626, %v4676
        %v4695 = vadd.f32 %v4627, %v4676
        %v4696 = vadd.f32 %v4628, %v4676
        %v4697 = vadd.f32 %v4629, %v4676
        %v4698 = vadd.f32 %v4630, %v4676
        %v4699 = vadd.f32 %v4631, %v4676
        %v4700 = vadd.f32 %v4632, %v4676
        %v4701 = vadd.f32 %v4633, %v4676
        %v4702 = vadd.f32 %v4634, %v4676
        %v4703 = vadd.f32 %v4635, %v4676
        %v4704 = vadd.f32 %v4636, %v4676
        %v4705 = vadd.f32 %v4637, %v4676
        %v4706 = vadd.f32 %v4638, %v4676
        %v4707 = vadd.f32 %v4639, %v4676
        %v4708 = vadd.f32 %v4640, %v4676
        %v4709 = vadd.f32 %v4641, %v4676
        %v4710 = vadd.f32 %v4642, %v4676
        %v4711 = vadd.f32 %v4643, %v4676
        %v4712 = vadd.f32 %v4644, %v4676
        %v4713 = vadd.f32 %v4645, %v4676
        %v4714 = vadd.f32 %v4646, %v4676
        %v4715 = vadd.f32 %v4647, %v4676
        %v4716 = vadd.f32 %v4648, %v4676
        %v4717 = vadd.f32 %v4649, %v4676
        %v4718 = vadd.f32 %v4650, %v4676
        %v4719 = vadd.f32 %v4651, %v4676
        %v4720 = vadd.f32 %v4652, %v4676
        %v4721 = vadd.f32 %v4653, %v4676
        %v4722 = vadd.f32 %v4654, %v4676
        %v4723 = vadd.f32 %v4655, %v4676
        %v4724 = vadd.f32 %v4656, %v4676
        %v4725 = vadd.f32 %v4657, %v4676
        %v4726 = vadd.f32 %v4658, %v4676
        %v4727 = vadd.f32 %v4659, %v4676
        %v4728 = vadd.f32 %v4660, %v4676
        %v4729 = vadd.f32 %v4661, %v4676
        %v4730 = vadd.f32 %v4662, %v4676
        %v4731 = vadd.f32 %v4663, %v4676
        %v4732 = vadd.f32 %v4664, %v4676
        %v4733 = vadd.f32 %v4665, %v4676
        %v4734 = vadd.f32 %v4666, %v4676
        %v4735 = vadd.f32 %v4667, %v4676
        %v4736 = vadd.f32 %v4668, %v4676
        %v4737 = vadd.f32 %v4669, %v4676
        %v4738 = vadd.f32 %v4670, %v4676
        %v4739 = vadd.f32 %v4671, %v4676
        %v4740 = vadd.f32 %v4672, %v4676
        %v4741 = vadd.f32 %v4673, %v4676
        %v4742 = vmax.f32 %v4678, 0.0
        %v4743 = vmax.f32 %v4679, 0.0
        %v4744 = vmax.f32 %v4680, 0.0
        %v4745 = vmax.f32 %v4681, 0.0
        %v4746 = vmax.f32 %v4682, 0.0
        %v4747 = vmax.f32 %v4683, 0.0
        %v4748 = vmax.f32 %v4684, 0.0
        %v4749 = vmax.f32 %v4685, 0.0
        %v4750 = vmax.f32 %v4686, 0.0
        %v4751 = vmax.f32 %v4687, 0.0
        %v4752 = vmax.f32 %v4688, 0.0
        %v4753 = vmax.f32 %v4689, 0.0
        %v4754 = vmax.f32 %v4690, 0.0
        %v4755 = vmax.f32 %v4691, 0.0
        %v4756 = vmax.f32 %v4692, 0.0
        %v4757 = vmax.f32 %v4693, 0.0
        %v4758 = vmax.f32 %v4694, 0.0
        %v4759 = vmax.f32 %v4695, 0.0
        %v4760 = vmax.f32 %v4696, 0.0
        %v4761 = vmax.f32 %v4697, 0.0
        %v4762 = vmax.f32 %v4698, 0.0
        %v4763 = vmax.f32 %v4699, 0.0
        %v4764 = vmax.f32 %v4700, 0.0
        %v4765 = vmax.f32 %v4701, 0.0
        %v4766 = vmax.f32 %v4702, 0.0
        %v4767 = vmax.f32 %v4703, 0.0
        %v4768 = vmax.f32 %v4704, 0.0
        %v4769 = vmax.f32 %v4705, 0.0
        %v4770 = vmax.f32 %v4706, 0.0
        %v4771 = vmax.f32 %v4707, 0.0
        %v4772 = vmax.f32 %v4708, 0.0
        %v4773 = vmax.f32 %v4709, 0.0
        %v4774 = vmax.f32 %v4710, 0.0
        %v4775 = vmax.f32 %v4711, 0.0
        %v4776 = vmax.f32 %v4712, 0.0
        %v4777 = vmax.f32 %v4713, 0.0
        %v4778 = vmax.f32 %v4714, 0.0
        %v4779 = vmax.f32 %v4715, 0.0
        %v4780 = vmax.f32 %v4716, 0.0
        %v4781 = vmax.f32 %v4717, 0.0
        %v4782 = vmax.f32 %v4718, 0.0
        %v4783 = vmax.f32 %v4719, 0.0
        %v4784 = vmax.f32 %v4720, 0.0
        %v4785 = vmax.f32 %v4721, 0.0
        %v4786 = vmax.f32 %v4722, 0.0
        %v4787 = vmax.f32 %v4723, 0.0
        %v4788 = vmax.f32 %v4724, 0.0
        %v4789 = vmax.f32 %v4725, 0.0
        %v4790 = vmax.f32 %v4726, 0.0
        %v4791 = vmax.f32 %v4727, 0.0
        %v4792 = vmax.f32 %v4728, 0.0
        %v4793 = vmax.f32 %v4729, 0.0
        %v4794 = vmax.f32 %v4730, 0.0
        %v4795 = vmax.f32 %v4731, 0.0
        %v4796 = vmax.f32 %v4732, 0.0
        %v4797 = vmax.f32 %v4733, 0.0
        %v4798 = vmax.f32 %v4734, 0.0
        %v4799 = vmax.f32 %v4735, 0.0
        %v4800 = vmax.f32 %v4736, 0.0
        %v4801 = vmax.f32 %v4737, 0.0
        %v4802 = vmax.f32 %v4738, 0.0
        %v4803 = vmax.f32 %v4739, 0.0
        %v4804 = vmax.f32 %v4740, 0.0
        %v4805 = vmax.f32 %v4741, 0.0
        %v4806 = vld [vmem:[#allocation8] sm:$0x3]
        %v4807 = vadd.f32 %v4742, %v4743
        %v4808 = vadd.f32 %v4807, %v4744
        %v4809 = vadd.f32 %v4808, %v4745
        %v4810 = vadd.f32 %v4809, %v4746
        %v4811 = vadd.f32 %v4810, %v4747
        %v4812 = vadd.f32 %v4811, %v4748
        %v4813 = vadd.f32 %v4812, %v4749
        %v4814 = vadd.f32 %v4813, %v4750
        %v4815 = vadd.f32 %v4814, %v4751
        %v4816 = vadd.f32 %v4815, %v4752
        %v4817 = vadd.f32 %v4816, %v4753
        %v4818 = vadd.f32 %v4817, %v4754
        %v4819 = vadd.f32 %v4818, %v4755
        %v4820 = vadd.f32 %v4819, %v4756
        %v4821 = vadd.f32 %v4820, %v4757
        %v4822 = vadd.f32 %v4821, %v4758
        %v4823 = vadd.f32 %v4822, %v4759
        %v4824 = vadd.f32 %v4823, %v4760
        %v4825 = vadd.f32 %v4824, %v4761
        %v4826 = vadd.f32 %v4825, %v4762
        %v4827 = vadd.f32 %v4826, %v4763
        %v4828 = vadd.f32 %v4827, %v4764
        %v4829 = vadd.f32 %v4828, %v4765
        %v4830 = vadd.f32 %v4829, %v4766
        %v4831 = vadd.f32 %v4830, %v4767
        %v4832 = vadd.f32 %v4831, %v4768
        %v4833 = vadd.f32 %v4832, %v4769
        %v4834 = vadd.f32 %v4833, %v4770
        %v4835 = vadd.f32 %v4834, %v4771
        %v4836 = vadd.f32 %v4835, %v4772
        %v4837 = vadd.f32 %v4836, %v4773
        %v4838 = vrot.slane %v4837, 4
        %v4839 = vadd.f32 %v4837, %v4838
        %v4840 = vrot.slane %v4839, 2
        %v4841 = vadd.f32 %v4839, %v4840
        %v4842 = vrot.slane %v4841, 1
        %v4843 = vadd.f32 %v4841, %v4842
        %v4844 = vadd.f32 %v4774, %v4775
        %v4845 = vadd.f32 %v4844, %v4776
        %v4846 = vadd.f32 %v4845, %v4777
        %v4847 = vadd.f32 %v4846, %v4778
        %v4848 = vadd.f32 %v4847, %v4779
        %v4849 = vadd.f32 %v4848, %v4780
        %v4850 = vadd.f32 %v4849, %v4781
        %v4851 = vadd.f32 %v4850, %v4782
        %v4852 = vadd.f32 %v4851, %v4783
        %v4853 = vadd.f32 %v4852, %v4784
        %v4854 = vadd.f32 %v4853, %v4785
        %v4855 = vadd.f32 %v4854, %v4786
        %v4856 = vadd.f32 %v4855, %v4787
        %v4857 = vadd.f32 %v4856, %v4788
        %v4858 = vadd.f32 %v4857, %v4789
        %v4859 = vadd.f32 %v4858, %v4790
        %v4860 = vadd.f32 %v4859, %v4791
        %v4861 = vadd.f32 %v4860, %v4792
        %v4862 = vadd.f32 %v4861, %v4793
        %v4863 = vadd.f32 %v4862, %v4794
        %v4864 = vadd.f32 %v4863, %v4795
        %v4865 = vadd.f32 %v4864, %v4796
        %v4866 = vadd.f32 %v4865, %v4797
        %v4867 = vadd.f32 %v4866, %v4798
        %v4868 = vadd.f32 %v4867, %v4799
        %v4869 = vadd.f32 %v4868, %v4800
        %v4870 = vadd.f32 %v4869, %v4801
        %v4871 = vadd.f32 %v4870, %v4802
        %v4872 = vadd.f32 %v4871, %v4803
        %v4873 = vadd.f32 %v4872, %v4804
        %v4874 = vadd.f32 %v4873, %v4805
        %v4875 = vrot.slane %v4874, 4
        %v4876 = vadd.f32 %v4874, %v4875
        %v4877 = vrot.slane %v4876, 2
        %v4878 = vadd.f32 %v4876, %v4877
        %v4879 = vrot.slane %v4878, 1
        %v4880 = vadd.f32 %v4878, %v4879
        %vm4883 = vcmask 1041409
        %v4884 = vsel %vm4883, %v4880, %v4843
        %v4886 = vadd.f32 %v4806, %v4884
        %4887 = vst [vmem:[#allocation8] sm:$0x3] %v4886
      $region60: #{simsiam_forward.2} parent=35 // pred_fallthru
        _
      // Predicated region
      $region61: #{simsiam_forward.2} parent=35 // pred_check
        _
      $region62: #{simsiam_forward.2} parent=35 // pred_check_branch
        %4889 = sbr.rel (%p616) target = $region64
      $region63: #{simsiam_forward.2} parent=35 // pred_region
        %v4890 = vld [vmem:[#allocation8] sm:$0x3]
        %v4891 = vmul.f32 %v4890, 0.00390625
        %4892 = vst [vmem:[%s214] sm:$0x3] %v4891
      $region64: #{simsiam_forward.2} parent=35 // pred_fallthru
        _
      %p4893 = scmp.lt.s32.totalorder %s20, 1
      %s4894 = scalar_select %p4893, %s20, 1
      %s4895 = smul.addr %s4894, 2
      %s4896 = scalar_lea.vmem %s4, %s4895
      // Predicated region
      $region65: #{simsiam_forward.2} parent=35 // pred_check
        %p4897 = pneg %p141
      $region66: #{simsiam_forward.2} parent=35 // pred_check_branch
        %4899 = sbr.rel (%p4897) target = $region68
      $region67: #{simsiam_forward.2} parent=35 // pred_region
        _
      $region68: #{simsiam_forward.2} parent=35 // pred_fallthru
        _
    $region36: #{simsiam_forward.2} parent=5 // pred_fallthru
      _
    %p4900 = scmp.le.s32.totalorder 2, %s10
    // Predicated region
    $region69: #{simsiam_forward.2} parent=5 // pred_check
      %p4901 = pneg %p4900
    $region70: #{simsiam_forward.2} parent=5 // pred_check_branch
      %4903 = sbr.rel (%p4901) target = $region72
    $region71: #{simsiam_forward.2} parent=5 // pred_region
      %s4904 = ssub.s32 %s10, 2
      // Predicated region
      $region73: #{simsiam_forward.2} parent=71 // pred_check
        %p4905 = pneg %p147
      $region74: #{simsiam_forward.2} parent=71 // pred_check_branch
        %4907 = sbr.rel (%p4905) target = $region76
      $region75: #{simsiam_forward.2} parent=71 // pred_region
        %p4908 = scmp.lt.s32.totalorder %s23, 1
        %s4909 = scalar_select %p4908, %s23, 1
        %s4910 = smul.addr %s4909, 2
        %s4911 = scalar_lea.vmem %s4, %s4910
      $region76: #{simsiam_forward.2} parent=71 // pred_fallthru
        _
    $region72: #{simsiam_forward.2} parent=5 // pred_fallthru
      _
  $region6: #{simsiam_forward.2} parent=0 // loop_footer
    %s14 = sadd.s32 1, %s10
  $region7: #{simsiam_forward.2} parent=0 // loop_footer_branch
    %9 = sbr.rel target = $region3
  $region8: #{simsiam_forward.2} parent=0 // loop_exit
    _

</llo_original>
